<compile_context>
chip_gen: v6e
topology: v6e:2x2x1
jax: 0.10.0
libtpu: 0.0.40
codegen_flags: <defaults>
</compile_context>

<pallas_src>
import jax
import jax.numpy as jnp
from jax.experimental import pallas as pl
from jax.experimental.pallas import tpu as pltpu

EPS = 1e-5
_VMEM_LIMIT = 32 * 1024 * 1024  # safe on v5e/v6e (128 MiB) and v7x (64 MiB)


def conv_bridge_block(x_nchw, w_oihw, bias, gamma, beta):
    """Pallas implementation of ConvBridgeBlock.forward. Input/output are NCHW."""
    N, C, H, W = x_nchw.shape
    assert w_oihw.shape[2] == 3 and w_oihw.shape[3] == 3, "k_sz=3 expected"

    Cp = ((C + 127) // 128) * 128          # lane-dense channel count
    Hp, Wp = H + 2, W + 2                  # spatial halo (pad=1)
    R = H * Wp                             # flattened output rows (incl. 2 garbage cols/row)
    Lin = Hp * Wp + 2                      # flattened input rows (+2 so the last taps stay in-bounds)

    # ---- wrapper-side layout prep (small, one-time) -------------------------
    x_nhwc = jnp.transpose(x_nchw, (0, 2, 3, 1))
    x_p = jnp.pad(x_nhwc, ((0, 0), (1, 1), (1, 1), (0, Cp - C))).astype(jnp.bfloat16)
    x_flat = jnp.pad(x_p.reshape(N, Hp * Wp, Cp), ((0, 0), (0, 2), (0, 0)))   # (N, Lin, Cp)

    # OIHW -> HWIO, channel-pad, merge the 3 kw taps along K: (3, 3*Cp, Cp).
    w_hwio = jnp.transpose(w_oihw, (2, 3, 1, 0))
    w_pad = jnp.pad(w_hwio, ((0, 0), (0, 0), (0, Cp - C), (0, Cp - C)))
    w_slab = w_pad.reshape(3, 3 * Cp, Cp).astype(jnp.bfloat16)

    b_p = jnp.pad(bias.astype(jnp.float32), (0, Cp - C)).reshape(1, Cp)
    g_p = jnp.pad(gamma.astype(jnp.float32), (0, Cp - C)).reshape(1, Cp)
    be_p = jnp.pad(beta.astype(jnp.float32), (0, Cp - C)).reshape(1, Cp)

    # Row-validity mask: flat row r = h*Wp + w; cols w in [W, Wp) are halo
    # garbage and must not contribute to the BatchNorm statistics.
    mask = ((jnp.arange(R, dtype=jnp.int32) % Wp) < W).astype(jnp.float32).reshape(R, 1)

    # ---- pass 1: conv(3x3) + bias + ReLU, plus per-batch partial BN stats ---
    def conv_relu_stats_kernel(x_ref, w_ref, b_ref, m_ref, y_ref, s1_ref, s2_ref):
        # x_ref: (Lin, Cp) bf16   w_ref: (3, 3*Cp, Cp) bf16
        # b_ref: (1, Cp) f32      m_ref: (R, 1) f32
        # y_ref: (R, Cp) f32      s1_ref/s2_ref: (1, Cp) f32
        acc = jnp.zeros((R, Cp), jnp.float32)
        for kh in range(3):
            base = kh * Wp
            # Merge the 3 kw taps: (R, 3*Cp) slab from 3 contiguous row-windows.
            xc = jnp.concatenate(
                [x_ref[base + kw: base + kw + R, :] for kw in range(3)], axis=-1)
            acc = acc + jnp.dot(xc, w_ref[kh], preferred_element_type=jnp.float32)

        y = jnp.maximum(acc + b_ref[...], 0.0)
        y_ref[...] = y

        ym = y * m_ref[...]                                   # zero out garbage cols
        s1_ref[...] = jnp.sum(ym, axis=0, keepdims=True)      # sum  per channel
        s2_ref[...] = jnp.sum(ym * y, axis=0, keepdims=True)  # sum of squares per channel

    y_flat, psum, psq = pl.pallas_call(
        conv_relu_stats_kernel,
        grid=(N,),
        in_specs=[
            pl.BlockSpec((None, Lin, Cp), lambda n: (n, 0, 0)),   # x (per-batch block)
            pl.BlockSpec((3, 3 * Cp, Cp), lambda n: (0, 0, 0)),   # weights (resident)
            pl.BlockSpec((1, Cp), lambda n: (0, 0)),              # bias
            pl.BlockSpec((R, 1), lambda n: (0, 0)),               # validity mask
        ],
        out_specs=(
            pl.BlockSpec((None, R, Cp), lambda n: (n, 0, 0)),     # y
            pl.BlockSpec((None, 1, Cp), lambda n: (n, 0, 0)),     # partial sum
            pl.BlockSpec((None, 1, Cp), lambda n: (n, 0, 0)),     # partial sumsq
        ),
        out_shape=(
            jax.ShapeDtypeStruct((N, R, Cp), jnp.float32),
            jax.ShapeDtypeStruct((N, 1, Cp), jnp.float32),
            jax.ShapeDtypeStruct((N, 1, Cp), jnp.float32),
        ),
        compiler_params=pltpu.CompilerParams(
            dimension_semantics=("parallel",),
            vmem_limit_bytes=_VMEM_LIMIT),
    )(x_flat, w_slab, b_p, mask)

    # ---- global BN stats + folded affine (tiny (1, Cp) math in the wrapper) --
    cnt = jnp.float32(N * H * W)
    mean = jnp.sum(psum, axis=0) / cnt                         # (1, Cp)
    var = jnp.maximum(jnp.sum(psq, axis=0) / cnt - mean * mean, 0.0)
    scale = g_p * jax.lax.rsqrt(var + EPS)                     # gamma / sqrt(var+eps)
    shift = be_p - mean * scale                                # beta - mean*scale

    # ---- pass 2: z = y * scale + shift (one FMA per element, lane-dense) ----
    def bn_apply_kernel(y_ref, sc_ref, sh_ref, o_ref):
        o_ref[...] = y_ref[...] * sc_ref[...] + sh_ref[...]

    z_flat = pl.pallas_call(
        bn_apply_kernel,
        grid=(N,),
        in_specs=[
            pl.BlockSpec((None, R, Cp), lambda n: (n, 0, 0)),
            pl.BlockSpec((1, Cp), lambda n: (0, 0)),
            pl.BlockSpec((1, Cp), lambda n: (0, 0)),
        ],
        out_specs=pl.BlockSpec((None, R, Cp), lambda n: (n, 0, 0)),
        out_shape=jax.ShapeDtypeStruct((N, R, Cp), jnp.float32),
        compiler_params=pltpu.CompilerParams(
            dimension_semantics=("parallel",),
            vmem_limit_bytes=_VMEM_LIMIT),
    )(y_flat, scale, shift)

    # Drop garbage columns / padded channels, back to NCHW.
    z = z_flat.reshape(N, H, Wp, Cp)[:, :, :W, :C]
    return jnp.transpose(z, (0, 3, 1, 2))


def reference_forward(x_nchw, w_oihw, bias, gamma, beta):
    """Pure-JAX reference matching PyTorch semantics (training-mode BN)."""
    y = jax.lax.conv_general_dilated(
        x_nchw.astype(jnp.float32), w_oihw.astype(jnp.float32),
        window_strides=(1, 1), padding="SAME",
        dimension_numbers=("NCHW", "OIHW", "NCHW"))
    y = y + bias[None, :, None, None]
    y = jnp.maximum(y, 0.0)
    mean = y.mean(axis=(0, 2, 3), keepdims=True)
    var = ((y - mean) ** 2).mean(axis=(0, 2, 3), keepdims=True)
    return (gamma[None, :, None, None] * (y - mean) * jax.lax.rsqrt(var + EPS)
            + beta[None, :, None, None])


if __name__ == "__main__":
    N, C, H, W = 2, 4, 16, 16
    k_sz = 3

    key = jax.random.PRNGKey(0)
    kx, kw, kb = jax.random.split(key, 3)

    x = jax.random.normal(kx, (N, C, H, W), dtype=jnp.float32)
    # PyTorch Conv2d weight layout OIHW; BatchNorm2d default affine params.
    w_oihw = jax.random.normal(kw, (C, C, k_sz, k_sz), dtype=jnp.float32) * 0.1
    bias = jax.random.normal(kb, (C,), dtype=jnp.float32) * 0.1
    gamma = jnp.ones((C,), dtype=jnp.float32)
    beta = jnp.zeros((C,), dtype=jnp.float32)

    out = conv_bridge_block(x, w_oihw, bias, gamma, beta)
    out = jax.block_until_ready(out)
    assert out.shape == (N, C, H, W)

    # The kernel feeds the MXU bf16 operands with f32 accumulation (bf16*bf16
    # products are exact in f32), so compare against the f32 reference run on
    # the same bf16-rounded conv inputs.
    x_r = x.astype(jnp.bfloat16).astype(jnp.float32)
    w_r = w_oihw.astype(jnp.bfloat16).astype(jnp.float32)
    ref = reference_forward(x_r, w_r, bias, gamma, beta)
    assert jnp.allclose(out, ref, atol=1e-3, rtol=1e-3), "mismatch vs reference"

    print("KERNEL_OK")
</pallas_src>

<mosaic_0001>
module attributes {stable_mosaic.version = 11 : i64} {
  func.func @conv_relu_stats_kernel(%arg0: i32, %arg1: memref<1x326x128xbf16, #tpu.memory_space<vmem>>, %arg2: memref<3x384x128xbf16, #tpu.memory_space<vmem>>, %arg3: memref<1x128xf32, #tpu.memory_space<vmem>>, %arg4: memref<288x1xf32, #tpu.memory_space<vmem>>, %arg5: memref<1x288x128xf32, #tpu.memory_space<vmem>>, %arg6: memref<1x1x128xf32, #tpu.memory_space<vmem>>, %arg7: memref<1x1x128xf32, #tpu.memory_space<vmem>>) attributes {dimension_semantics = [#tpu.dimension_semantics<parallel>], iteration_bounds = array<i64: 2>, scalar_prefetch = 0 : i64, scratch_operands = 0 : i64, tpu.core_type = #tpu.core_type<tc>, window_params = [{transform_indices = @transform_0, window_bounds = array<i64: 1, 326, 128>}, {pipeline_mode = #tpu.pipeline_mode<synchronous>, transform_indices = @transform_1, window_bounds = array<i64: 3, 384, 128>}, {pipeline_mode = #tpu.pipeline_mode<synchronous>, transform_indices = @transform_2, window_bounds = array<i64: 1, 128>}, {pipeline_mode = #tpu.pipeline_mode<synchronous>, transform_indices = @transform_3, window_bounds = array<i64: 288, 1>}, {transform_indices = @transform_4, window_bounds = array<i64: 1, 288, 128>}, {transform_indices = @transform_5, window_bounds = array<i64: 1, 1, 128>}, {transform_indices = @transform_6, window_bounds = array<i64: 1, 1, 128>}]} {
    %cst = arith.constant 0.000000e+00 : f32
    %0 = vector.broadcast %cst : f32 to vector<288x128xf32>
    %c0 = arith.constant 0 : index
    %c0_0 = arith.constant 0 : index
    %c0_1 = arith.constant 0 : index
    %1 = vector.load %arg1[%c0, %c0_0, %c0_1] : memref<1x326x128xbf16, #tpu.memory_space<vmem>>, vector<1x288x128xbf16>
    %2 = vector.shape_cast %1 : vector<1x288x128xbf16> to vector<288x128xbf16>
    %c0_2 = arith.constant 0 : index
    %c1 = arith.constant 1 : index
    %c0_3 = arith.constant 0 : index
    %3 = vector.load %arg1[%c0_2, %c1, %c0_3] : memref<1x326x128xbf16, #tpu.memory_space<vmem>>, vector<1x288x128xbf16>
    %4 = vector.shape_cast %3 : vector<1x288x128xbf16> to vector<288x128xbf16>
    %c0_4 = arith.constant 0 : index
    %c2 = arith.constant 2 : index
    %c0_5 = arith.constant 0 : index
    %5 = vector.load %arg1[%c0_4, %c2, %c0_5] : memref<1x326x128xbf16, #tpu.memory_space<vmem>>, vector<1x288x128xbf16>
    %6 = vector.shape_cast %5 : vector<1x288x128xbf16> to vector<288x128xbf16>
    %7 = tpu.concatenate %2, %4, %6 in 1 : vector<288x128xbf16>, vector<288x128xbf16>, vector<288x128xbf16> -> vector<288x384xbf16>
    %c0_6 = arith.constant 0 : index
    %c0_7 = arith.constant 0 : index
    %c0_8 = arith.constant 0 : index
    %8 = vector.load %arg2[%c0_6, %c0_7, %c0_8] : memref<3x384x128xbf16, #tpu.memory_space<vmem>>, vector<1x384x128xbf16>
    %9 = vector.shape_cast %8 : vector<1x384x128xbf16> to vector<384x128xbf16>
    %cst_9 = arith.constant dense<0.000000e+00> : vector<288x128xf32>
    %10 = tpu.matmul %7, %9, %cst_9 {dimension_numbers = #tpu.dot_dimension_numbers<[1], [0], [0], [1], [0, 0, 1, 1], [], []>} : vector<288x384xbf16>, vector<384x128xbf16>, vector<288x128xf32> -> vector<288x128xf32>
    %11 = arith.addf %0, %10 : vector<288x128xf32>
    %c0_10 = arith.constant 0 : index
    %c18 = arith.constant 18 : index
    %c0_11 = arith.constant 0 : index
    %12 = vector.load %arg1[%c0_10, %c18, %c0_11] : memref<1x326x128xbf16, #tpu.memory_space<vmem>>, vector<1x288x128xbf16>
    %13 = vector.shape_cast %12 : vector<1x288x128xbf16> to vector<288x128xbf16>
    %c0_12 = arith.constant 0 : index
    %c19 = arith.constant 19 : index
    %c0_13 = arith.constant 0 : index
    %14 = vector.load %arg1[%c0_12, %c19, %c0_13] : memref<1x326x128xbf16, #tpu.memory_space<vmem>>, vector<1x288x128xbf16>
    %15 = vector.shape_cast %14 : vector<1x288x128xbf16> to vector<288x128xbf16>
    %c0_14 = arith.constant 0 : index
    %c20 = arith.constant 20 : index
    %c0_15 = arith.constant 0 : index
    %16 = vector.load %arg1[%c0_14, %c20, %c0_15] : memref<1x326x128xbf16, #tpu.memory_space<vmem>>, vector<1x288x128xbf16>
    %17 = vector.shape_cast %16 : vector<1x288x128xbf16> to vector<288x128xbf16>
    %18 = tpu.concatenate %13, %15, %17 in 1 : vector<288x128xbf16>, vector<288x128xbf16>, vector<288x128xbf16> -> vector<288x384xbf16>
    %c1_16 = arith.constant 1 : index
    %c0_17 = arith.constant 0 : index
    %c0_18 = arith.constant 0 : index
    %19 = vector.load %arg2[%c1_16, %c0_17, %c0_18] : memref<3x384x128xbf16, #tpu.memory_space<vmem>>, vector<1x384x128xbf16>
    %20 = vector.shape_cast %19 : vector<1x384x128xbf16> to vector<384x128xbf16>
    %cst_19 = arith.constant dense<0.000000e+00> : vector<288x128xf32>
    %21 = tpu.matmul %18, %20, %cst_19 {dimension_numbers = #tpu.dot_dimension_numbers<[1], [0], [0], [1], [0, 0, 1, 1], [], []>} : vector<288x384xbf16>, vector<384x128xbf16>, vector<288x128xf32> -> vector<288x128xf32>
    %22 = arith.addf %11, %21 : vector<288x128xf32>
    %c0_20 = arith.constant 0 : index
    %c36 = arith.constant 36 : index
    %c0_21 = arith.constant 0 : index
    %23 = vector.load %arg1[%c0_20, %c36, %c0_21] : memref<1x326x128xbf16, #tpu.memory_space<vmem>>, vector<1x288x128xbf16>
    %24 = vector.shape_cast %23 : vector<1x288x128xbf16> to vector<288x128xbf16>
    %c0_22 = arith.constant 0 : index
    %c37 = arith.constant 37 : index
    %c0_23 = arith.constant 0 : index
    %25 = vector.load %arg1[%c0_22, %c37, %c0_23] : memref<1x326x128xbf16, #tpu.memory_space<vmem>>, vector<1x288x128xbf16>
    %26 = vector.shape_cast %25 : vector<1x288x128xbf16> to vector<288x128xbf16>
    %c0_24 = arith.constant 0 : index
    %c38 = arith.constant 38 : index
    %c0_25 = arith.constant 0 : index
    %27 = vector.load %arg1[%c0_24, %c38, %c0_25] : memref<1x326x128xbf16, #tpu.memory_space<vmem>>, vector<1x288x128xbf16>
    %28 = vector.shape_cast %27 : vector<1x288x128xbf16> to vector<288x128xbf16>
    %29 = tpu.concatenate %24, %26, %28 in 1 : vector<288x128xbf16>, vector<288x128xbf16>, vector<288x128xbf16> -> vector<288x384xbf16>
    %c2_26 = arith.constant 2 : index
    %c0_27 = arith.constant 0 : index
    %c0_28 = arith.constant 0 : index
    %30 = vector.load %arg2[%c2_26, %c0_27, %c0_28] : memref<3x384x128xbf16, #tpu.memory_space<vmem>>, vector<1x384x128xbf16>
    %31 = vector.shape_cast %30 : vector<1x384x128xbf16> to vector<384x128xbf16>
    %cst_29 = arith.constant dense<0.000000e+00> : vector<288x128xf32>
    %32 = tpu.matmul %29, %31, %cst_29 {dimension_numbers = #tpu.dot_dimension_numbers<[1], [0], [0], [1], [0, 0, 1, 1], [], []>} : vector<288x384xbf16>, vector<384x128xbf16>, vector<288x128xf32> -> vector<288x128xf32>
    %33 = arith.addf %22, %32 : vector<288x128xf32>
    %c0_30 = arith.constant 0 : index
    %c0_31 = arith.constant 0 : index
    %34 = vector.load %arg3[%c0_30, %c0_31] : memref<1x128xf32, #tpu.memory_space<vmem>>, vector<1x128xf32>
    %35 = vector.broadcast %34 : vector<1x128xf32> to vector<288x128xf32>
    %36 = arith.addf %33, %35 : vector<288x128xf32>
    %cst_32 = arith.constant 0.000000e+00 : f32
    %37 = vector.broadcast %cst_32 : f32 to vector<288x128xf32>
    %38 = arith.maximumf %36, %37 : vector<288x128xf32>
    %c0_33 = arith.constant 0 : index
    %c0_34 = arith.constant 0 : index
    %c0_35 = arith.constant 0 : index
    %39 = vector.load %arg5[%c0_33, %c0_34, %c0_35] : memref<1x288x128xf32, #tpu.memory_space<vmem>>, vector<1x288x128xf32>
    %40 = vector.shape_cast %39 : vector<1x288x128xf32> to vector<288x128xf32>
    %41 = vector.shape_cast %38 : vector<288x128xf32> to vector<1x288x128xf32>
    tpu.vector_store %arg5[%c0_33, %c0_34, %c0_35], %41 {strides = array<i32>} : memref<1x288x128xf32, #tpu.memory_space<vmem>>, vector<1x288x128xf32>,
    %c0_36 = arith.constant 0 : index
    %c0_37 = arith.constant 0 : index
    %42 = vector.load %arg4[%c0_36, %c0_37] : memref<288x1xf32, #tpu.memory_space<vmem>>, vector<288x1xf32>
    %43 = vector.broadcast %42 : vector<288x1xf32> to vector<288x128xf32>
    %44 = arith.mulf %38, %43 : vector<288x128xf32>
    %cst_38 = arith.constant dense<0.000000e+00> : vector<128xf32>
    %45 = vector.multi_reduction <add>, %44, %cst_38 [0] : vector<288x128xf32> to vector<128xf32>
    %46 = vector.shape_cast %45 : vector<128xf32> to vector<1x128xf32>
    %c0_39 = arith.constant 0 : index
    %c0_40 = arith.constant 0 : index
    %c0_41 = arith.constant 0 : index
    %47 = vector.load %arg6[%c0_39, %c0_40, %c0_41] : memref<1x1x128xf32, #tpu.memory_space<vmem>>, vector<1x1x128xf32>
    %48 = vector.shape_cast %47 : vector<1x1x128xf32> to vector<1x128xf32>
    %49 = vector.shape_cast %46 : vector<1x128xf32> to vector<1x1x128xf32>
    tpu.vector_store %arg6[%c0_39, %c0_40, %c0_41], %49 {strides = array<i32>} : memref<1x1x128xf32, #tpu.memory_space<vmem>>, vector<1x1x128xf32>,
    %50 = arith.mulf %44, %38 : vector<288x128xf32>
    %cst_42 = arith.constant dense<0.000000e+00> : vector<128xf32>
    %51 = vector.multi_reduction <add>, %50, %cst_42 [0] : vector<288x128xf32> to vector<128xf32>
    %52 = vector.shape_cast %51 : vector<128xf32> to vector<1x128xf32>
    %c0_43 = arith.constant 0 : index
    %c0_44 = arith.constant 0 : index
    %c0_45 = arith.constant 0 : index
    %53 = vector.load %arg7[%c0_43, %c0_44, %c0_45] : memref<1x1x128xf32, #tpu.memory_space<vmem>>, vector<1x1x128xf32>
    %54 = vector.shape_cast %53 : vector<1x1x128xf32> to vector<1x128xf32>
    %55 = vector.shape_cast %52 : vector<1x128xf32> to vector<1x1x128xf32>
    tpu.vector_store %arg7[%c0_43, %c0_44, %c0_45], %55 {strides = array<i32>} : memref<1x1x128xf32, #tpu.memory_space<vmem>>, vector<1x1x128xf32>,
    return
  }
  func.func @transform_0(%arg0: i32) -> (i32, i32, i32) {
    %c0_i32 = arith.constant 0 : i32
    %c0_i32_0 = arith.constant 0 : i32
    %c0_i32_1 = arith.constant 0 : i32
    return %arg0, %c0_i32, %c0_i32_0 : i32, i32, i32
  }
  func.func @transform_1(%arg0: i32) -> (i32, i32, i32) {
    %c0_i32 = arith.constant 0 : i32
    %c0_i32_0 = arith.constant 0 : i32
    %c0_i32_1 = arith.constant 0 : i32
    %c0_i32_2 = arith.constant 0 : i32
    return %c0_i32, %c0_i32_0, %c0_i32_1 : i32, i32, i32
  }
  func.func @transform_2(%arg0: i32) -> (i32, i32) {
    %c0_i32 = arith.constant 0 : i32
    %c0_i32_0 = arith.constant 0 : i32
    %c0_i32_1 = arith.constant 0 : i32
    return %c0_i32, %c0_i32_0 : i32, i32
  }
  func.func @transform_3(%arg0: i32) -> (i32, i32) {
    %c0_i32 = arith.constant 0 : i32
    %c0_i32_0 = arith.constant 0 : i32
    %c0_i32_1 = arith.constant 0 : i32
    return %c0_i32, %c0_i32_0 : i32, i32
  }
  func.func @transform_4(%arg0: i32) -> (i32, i32, i32) {
    %c0_i32 = arith.constant 0 : i32
    %c0_i32_0 = arith.constant 0 : i32
    %c0_i32_1 = arith.constant 0 : i32
    return %arg0, %c0_i32, %c0_i32_0 : i32, i32, i32
  }
  func.func @transform_5(%arg0: i32) -> (i32, i32, i32) {
    %c0_i32 = arith.constant 0 : i32
    %c0_i32_0 = arith.constant 0 : i32
    %c0_i32_1 = arith.constant 0 : i32
    return %arg0, %c0_i32, %c0_i32_0 : i32, i32, i32
  }
  func.func @transform_6(%arg0: i32) -> (i32, i32, i32) {
    %c0_i32 = arith.constant 0 : i32
    %c0_i32_0 = arith.constant 0 : i32
    %c0_i32_1 = arith.constant 0 : i32
    return %arg0, %c0_i32, %c0_i32_0 : i32, i32, i32
  }
}

</mosaic_0001>

<llo_original>
// kernel: tpu_custom_call.1
$region0: #{tpu_custom_call.1}
  #allocation0 [shape = 'u32[]', space=smem, size = 0x4, offset = 0x4, fixed_abs, tag = 'smem constant byte address 0x4 - core index']
  #allocation1 [shape = 'u32[144,128]{1,0:T(1,128)}', space=vmem, size = 0x12000, scoped, tag = 'internal scratch']
  %s0 = inlined_call_operand.vmem [shape: bf16[2,326,128], index: 0, kind: input, shape index: {}]
  %s1 = inlined_call_operand.vmem [shape: bf16[3,384,128], index: 1, kind: input, shape index: {}]
  %s2 = inlined_call_operand.vmem [shape: f32[1,128], index: 2, kind: input, shape index: {}]
  %s3 = inlined_call_operand.vmem [shape: f32[288,1], index: 3, kind: input, shape index: {}]
  %s4 = inlined_call_operand.hbm [shape: f32[2,288,128], index: 4, kind: output, shape index: {0}]
  %s5 = inlined_call_operand.hbm [shape: f32[2,1,128], index: 5, kind: output, shape index: {1}]
  %s6 = inlined_call_operand.hbm [shape: f32[2,1,128], index: 6, kind: output, shape index: {2}]
  %7 = xla_tuple %s4, %s5, %s6
  %s8 = sld [smem:[#allocation0]]
  $region65: #{tpu_custom_call.1} parent=0
    _
  %s10 = ssub.s32 1, %s8
  %s11 = scalar_select 0, %s10, %s8
  $region1: #{tpu_custom_call.1} parent=0
    #allocation2 [shape = 'u8[294912]{0}', space=vmem, size = 0x48000, scoped, tag = 'output window, operand 0']
    #allocation3 [shape = 's32[2]{0}', space=sflag, size = 0x8, scoped, tag = 'scoped memory for tpu_custom_call.1']
    #allocation4 [shape = 'u8[1024]{0}', space=vmem, size = 0x400, scoped, tag = 'output window, operand 1']
    #allocation5 [shape = 's32[2]{0}', space=sflag, size = 0x8, scoped, tag = 'scoped memory for tpu_custom_call.1']
    #allocation6 [shape = 'u8[1024]{0}', space=vmem, size = 0x400, scoped, tag = 'output window, operand 2']
    %12 = vsyncpa [#allocation3], 0
    %s13 = scalar_lea.sflag [#allocation3], 1
    %14 = vsyncpa %s13, 0
    %15 = vsyncpa [#allocation5], 0
    %s16 = scalar_lea.sflag [#allocation5], 1
    %17 = vsyncpa %s16, 0
    loop: start=0, step=1, limit=4
    $region2: #{tpu_custom_call.1} parent=1 // loop_pre_header
      _
    $region3: #{tpu_custom_call.1} parent=1 // loop_header
      %s19 = sphi 0, %s23
      %p20 = scmp.ge.s32.totalorder %s19, 4
      %s29 = sphi 0, %s31
      %s32 = sphi 0, %s29
      %s33 = sphi 0, %s32
      %s49 = sphi 0, %s33
      %s53 = sphi 0, %s53
      %s55 = sphi 0, %s53
      %s56 = sphi 0, %s55
      %s70 = sphi 0, %s56
      %s74 = sphi 0, %s74
      %s76 = sphi 0, %s74
      %s77 = sphi 0, %s76
      %s91 = sphi 0, %s77
      %s95 = sphi 0, %s95
      %s97 = sphi 0, %s95
      %s98 = sphi 0, %s97
      %s112 = sphi 0, %s98
      %s118 = sphi 0, %s120
      %s121 = sphi 0, %s118
      %s122 = sphi 0, %s121
      %s138 = sphi 0, %s122
      %s144 = sphi 0, %s146
      %s147 = sphi 0, %s144
      %s148 = sphi 0, %s147
      %s164 = sphi 0, %s148
      %s170 = sphi 0, %s172
      %s173 = sphi 0, %s170
      %s174 = sphi 0, %s173
      %s190 = sphi 0, %s174
    $region4: #{tpu_custom_call.1} parent=1 // loop_header_branch
      %22 = sbr.rel (%p20) target = $region8
    $region5: #{tpu_custom_call.1} parent=1 // loop_body
      %s24 = ssub.s32 %s19, 1
      %s25 = ssub.s32 %s19, 2
      %s26 = sadd.s32 %s19, 1
      %s27 = ssub.s32 %s19, %s26
      %p28 = scmp.eq.s32.totalorder %s27, 0
      %s30 = sadd.s32 %s29, 1
      %s31 = scalar_select %p28, %s29, %s30
      %p34 = pneg %p28
      %p35 = scmp.eq.s32.totalorder %s19, 1
      %p36 = por %p34, %p35
      %p37 = scmp.ne.s32.totalorder %s29, %s32
      %p38 = scmp.eq.s32.totalorder %s19, 0
      %p39 = por %p37, %p38
      %p40 = scmp.ne.s32.totalorder %s29, %s32
      %p41 = scmp.eq.s32.totalorder %s24, 1
      %p42 = por %p40, %p41
      %p43 = scmp.ne.s32.totalorder %s32, %s33
      %p44 = scmp.eq.s32.totalorder %s24, 0
      %p45 = por %p43, %p44
      %p46 = scmp.ne.s32.totalorder %s32, %s33
      %p47 = scmp.eq.s32.totalorder %s25, 1
      %p48 = por %p46, %p47
      %p50 = scmp.ne.s32.totalorder %s33, %s49
      %p51 = scmp.eq.s32.totalorder %s25, 0
      %p52 = por %p50, %p51
      %s54 = sadd.s32 %s53, 1
      %p57 = scmp.eq.s32.totalorder %s19, 1
      %p58 = scmp.ne.s32.totalorder %s53, %s55
      %p59 = scmp.eq.s32.totalorder %s19, 0
      %p60 = por %p58, %p59
      %p61 = scmp.ne.s32.totalorder %s53, %s55
      %p62 = scmp.eq.s32.totalorder %s24, 1
      %p63 = por %p61, %p62
      %p64 = scmp.ne.s32.totalorder %s55, %s56
      %p65 = scmp.eq.s32.totalorder %s24, 0
      %p66 = por %p64, %p65
      %p67 = scmp.ne.s32.totalorder %s55, %s56
      %p68 = scmp.eq.s32.totalorder %s25, 1
      %p69 = por %p67, %p68
      %p71 = scmp.ne.s32.totalorder %s56, %s70
      %p72 = scmp.eq.s32.totalorder %s25, 0
      %p73 = por %p71, %p72
      %s75 = sadd.s32 %s74, 1
      %p78 = scmp.eq.s32.totalorder %s19, 1
      %p79 = scmp.ne.s32.totalorder %s74, %s76
      %p80 = scmp.eq.s32.totalorder %s19, 0
      %p81 = por %p79, %p80
      %p82 = scmp.ne.s32.totalorder %s74, %s76
      %p83 = scmp.eq.s32.totalorder %s24, 1
      %p84 = por %p82, %p83
      %p85 = scmp.ne.s32.totalorder %s76, %s77
      %p86 = scmp.eq.s32.totalorder %s24, 0
      %p87 = por %p85, %p86
      %p88 = scmp.ne.s32.totalorder %s76, %s77
      %p89 = scmp.eq.s32.totalorder %s25, 1
      %p90 = por %p88, %p89
      %p92 = scmp.ne.s32.totalorder %s77, %s91
      %p93 = scmp.eq.s32.totalorder %s25, 0
      %p94 = por %p92, %p93
      %s96 = sadd.s32 %s95, 1
      %p99 = scmp.eq.s32.totalorder %s19, 1
      %p100 = scmp.ne.s32.totalorder %s95, %s97
      %p101 = scmp.eq.s32.totalorder %s19, 0
      %p102 = por %p100, %p101
      %p103 = scmp.ne.s32.totalorder %s95, %s97
      %p104 = scmp.eq.s32.totalorder %s24, 1
      %p105 = por %p103, %p104
      %p106 = scmp.ne.s32.totalorder %s97, %s98
      %p107 = scmp.eq.s32.totalorder %s24, 0
      %p108 = por %p106, %p107
      %p109 = scmp.ne.s32.totalorder %s97, %s98
      %p110 = scmp.eq.s32.totalorder %s25, 1
      %p111 = por %p109, %p110
      %p113 = scmp.ne.s32.totalorder %s98, %s112
      %p114 = scmp.eq.s32.totalorder %s25, 0
      %p115 = por %p113, %p114
      %s116 = ssub.s32 %s19, %s26
      %p117 = scmp.eq.s32.totalorder %s116, 0
      %s119 = sadd.s32 %s118, 1
      %s120 = scalar_select %p117, %s118, %s119
      %p123 = pneg %p117
      %p124 = scmp.eq.s32.totalorder %s19, 1
      %p125 = por %p123, %p124
      %p126 = scmp.ne.s32.totalorder %s118, %s121
      %p127 = scmp.eq.s32.totalorder %s19, 0
      %p128 = por %p126, %p127
      %p129 = scmp.ne.s32.totalorder %s118, %s121
      %p130 = scmp.eq.s32.totalorder %s24, 1
      %p131 = por %p129, %p130
      %p132 = scmp.ne.s32.totalorder %s121, %s122
      %p133 = scmp.eq.s32.totalorder %s24, 0
      %p134 = por %p132, %p133
      %p135 = scmp.ne.s32.totalorder %s121, %s122
      %p136 = scmp.eq.s32.totalorder %s25, 1
      %p137 = por %p135, %p136
      %p139 = scmp.ne.s32.totalorder %s122, %s138
      %p140 = scmp.eq.s32.totalorder %s25, 0
      %p141 = por %p139, %p140
      %s142 = ssub.s32 %s19, %s26
      %p143 = scmp.eq.s32.totalorder %s142, 0
      %s145 = sadd.s32 %s144, 1
      %s146 = scalar_select %p143, %s144, %s145
      %p149 = pneg %p143
      %p150 = scmp.eq.s32.totalorder %s19, 1
      %p151 = por %p149, %p150
      %p152 = scmp.ne.s32.totalorder %s144, %s147
      %p153 = scmp.eq.s32.totalorder %s19, 0
      %p154 = por %p152, %p153
      %p155 = scmp.ne.s32.totalorder %s144, %s147
      %p156 = scmp.eq.s32.totalorder %s24, 1
      %p157 = por %p155, %p156
      %p158 = scmp.ne.s32.totalorder %s147, %s148
      %p159 = scmp.eq.s32.totalorder %s24, 0
      %p160 = por %p158, %p159
      %p161 = scmp.ne.s32.totalorder %s147, %s148
      %p162 = scmp.eq.s32.totalorder %s25, 1
      %p163 = por %p161, %p162
      %p165 = scmp.ne.s32.totalorder %s148, %s164
      %p166 = scmp.eq.s32.totalorder %s25, 0
      %p167 = por %p165, %p166
      %s168 = ssub.s32 %s19, %s26
      %p169 = scmp.eq.s32.totalorder %s168, 0
      %s171 = sadd.s32 %s170, 1
      %s172 = scalar_select %p169, %s170, %s171
      %p175 = pneg %p169
      %p176 = scmp.eq.s32.totalorder %s19, 1
      %p177 = por %p175, %p176
      %p178 = scmp.ne.s32.totalorder %s170, %s173
      %p179 = scmp.eq.s32.totalorder %s19, 0
      %p180 = por %p178, %p179
      %p181 = scmp.ne.s32.totalorder %s170, %s173
      %p182 = scmp.eq.s32.totalorder %s24, 1
      %p183 = por %p181, %p182
      %p184 = scmp.ne.s32.totalorder %s173, %s174
      %p185 = scmp.eq.s32.totalorder %s24, 0
      %p186 = por %p184, %p185
      %p187 = scmp.ne.s32.totalorder %s173, %s174
      %p188 = scmp.eq.s32.totalorder %s25, 1
      %p189 = por %p187, %p188
      %p191 = scmp.ne.s32.totalorder %s174, %s190
      %p192 = scmp.eq.s32.totalorder %s25, 0
      %p193 = por %p191, %p192
      %p194 = scmp.le.s32.totalorder 1, %s19
      %p195 = scmp.lt.s32.totalorder %s19, 3
      %p196 = pnand %p194, %p195
      %p197 = pneg %p196
      // Predicated region
      $region9: #{tpu_custom_call.1} parent=5 // pred_check
        _
      $region10: #{tpu_custom_call.1} parent=5 // pred_check_branch
        %199 = sbr.rel (%p196) target = $region12
      $region11: #{tpu_custom_call.1} parent=5 // pred_region
        %s200 = ssub.s32 %s19, 1
        // Predicated region
        $region13: #{tpu_custom_call.1} parent=11 // pred_check
          %p201 = pneg %p66
        $region14: #{tpu_custom_call.1} parent=11 // pred_check_branch
          %203 = sbr.rel (%p201) target = $region16
        $region15: #{tpu_custom_call.1} parent=11 // pred_region
          _
        $region16: #{tpu_custom_call.1} parent=11 // pred_fallthru
          _
        // Predicated region
        $region17: #{tpu_custom_call.1} parent=11 // pred_check
          %p204 = pneg %p87
        $region18: #{tpu_custom_call.1} parent=11 // pred_check_branch
          %206 = sbr.rel (%p204) target = $region20
        $region19: #{tpu_custom_call.1} parent=11 // pred_region
          _
        $region20: #{tpu_custom_call.1} parent=11 // pred_fallthru
          _
        // Predicated region
        $region21: #{tpu_custom_call.1} parent=11 // pred_check
          %p207 = pneg %p108
        $region22: #{tpu_custom_call.1} parent=11 // pred_check_branch
          %209 = sbr.rel (%p207) target = $region24
        $region23: #{tpu_custom_call.1} parent=11 // pred_region
          _
        $region24: #{tpu_custom_call.1} parent=11 // pred_fallthru
          _
      $region12: #{tpu_custom_call.1} parent=5 // pred_fallthru
        _
      %p210 = scmp.lt.s32.totalorder %s19, 2
      // Predicated region
      $region25: #{tpu_custom_call.1} parent=5 // pred_check
        %p211 = pneg %p210
      $region26: #{tpu_custom_call.1} parent=5 // pred_check_branch
        %213 = sbr.rel (%p211) target = $region28
      $region27: #{tpu_custom_call.1} parent=5 // pred_region
        // Predicated region
        $region29: #{tpu_custom_call.1} parent=27 // pred_check
          %p214 = pneg %p39
        $region30: #{tpu_custom_call.1} parent=27 // pred_check_branch
          %216 = sbr.rel (%p214) target = $region32
        $region31: #{tpu_custom_call.1} parent=27 // pred_region
          %p217 = scmp.lt.s32.totalorder %s19, 1
          %s218 = scalar_select %p217, %s19, 1
          %s219 = smul.addr %s218, 41
          %s220 = smul.addr %s219, 4
          %s221 = scalar_lea.vmem %s0, %s220
        $region32: #{tpu_custom_call.1} parent=27 // pred_fallthru
          _
      $region28: #{tpu_custom_call.1} parent=5 // pred_fallthru
        _
      %p222 = scmp.le.s32.totalorder 1, %s19
      %p223 = scmp.lt.s32.totalorder %s19, 3
      %p224 = pnand %p222, %p223
      %p225 = pneg %p224
      // Predicated region
      $region33: #{tpu_custom_call.1} parent=5 // pred_check
        _
      $region34: #{tpu_custom_call.1} parent=5 // pred_check_branch
        %227 = sbr.rel (%p224) target = $region36
      $region35: #{tpu_custom_call.1} parent=5 // pred_region
        %s228 = ssub.s32 %s19, 1
        %p229 = scmp.lt.s32.totalorder %s24, 1
        %s230 = scalar_select %p229, %s24, 1
        %s231 = smul.addr %s230, 41
        %s232 = smul.addr %s231, 4
        %s233 = scalar_lea.vmem %s0, %s232
        %p234 = pneg %p45
        %p235 = pneg %p42
        %p236 = pneg %p66
        %p237 = pneg %p63
        %p238 = pneg %p87
        %p239 = pneg %p84
        %p240 = pneg %p108
        %p241 = pneg %p105
        %p242 = pneg %p134
        %p243 = pneg %p131
        %s244 = sand.u32 %s121, 1
        %s245 = scalar_lea.sflag [#allocation3], %s244
        %s246 = sand.u32 %s121, 1
        %s247 = smul.addr %s246, 288
        %s248 = scalar_lea.vmem [#allocation2], %s247
        %p249 = pneg %p160
        %p250 = pneg %p157
        %s251 = sand.u32 %s24, 1
        %s252 = scalar_lea.sflag [#allocation5], %s251
        %s253 = sand.u32 %s147, 1
        %s254 = scalar_lea.vmem [#allocation4], %s253
        %p255 = pneg %p186
        %p256 = pneg %p183
        %s257 = sand.u32 %s24, 1
        %s258 = scalar_lea.sflag [#allocation5], %s257
        %s259 = sand.u32 %s173, 1
        %s260 = scalar_lea.vmem [#allocation6], %s259
        %p261 = scmp.lt.s32.totalorder %s24, 1
        %s262 = scalar_select %p261, %s24, 1
        %s263 = smul.addr %s262, 41
        %s264 = smul.addr %s263, 4
        %s265 = scalar_lea.vmem %s0, %s264
        %v267 = vld [vmem:[%s265] sm:$0xf]
        %v268 = vld [vmem:[%s265 + $0x4] sm:$0xf]
        %v269 = vld [vmem:[%s265 + $0x8] sm:$0xf]
        %v270 = vld [vmem:[%s265 + $0xc] sm:$0xf]
        %v271 = vld [vmem:[%s265 + $0x10] sm:$0xf]
        %v272 = vld [vmem:[%s265 + $0x14] sm:$0xf]
        %v273 = vld [vmem:[%s265 + $0x18] sm:$0xf]
        %v274 = vld [vmem:[%s265 + $0x1c] sm:$0xf]
        %v275 = vld [vmem:[%s265 + $0x20] sm:$0xf]
        %v276 = vld [vmem:[%s265 + $0x24] sm:$0xf]
        %v277 = vld [vmem:[%s265 + $0x28] sm:$0xf]
        %v278 = vld [vmem:[%s265 + $0x2c] sm:$0xf]
        %v279 = vld [vmem:[%s265 + $0x30] sm:$0xf]
        %v280 = vld [vmem:[%s265 + $0x34] sm:$0xf]
        %v281 = vld [vmem:[%s265 + $0x38] sm:$0xf]
        %v282 = vld [vmem:[%s265 + $0x3c] sm:$0xf]
        %v283 = vld [vmem:[%s265 + $0x40] sm:$0xf]
        %v284 = vld [vmem:[%s265 + $0x44] sm:$0xf]
        %v285 = vld [vmem:[%s265 + $0x48] sm:$0xf]
        %v286 = vld [vmem:[%s265 + $0x4c] sm:$0xf]
        %v287 = vld [vmem:[%s265 + $0x50] sm:$0xf]
        %v288 = vld [vmem:[%s265 + $0x54] sm:$0xf]
        %v289 = vld [vmem:[%s265 + $0x58] sm:$0xf]
        %v290 = vld [vmem:[%s265 + $0x5c] sm:$0xf]
        %v291 = vld [vmem:[%s265 + $0x60] sm:$0xf]
        %v292 = vld [vmem:[%s265 + $0x64] sm:$0xf]
        %v293 = vld [vmem:[%s265 + $0x68] sm:$0xf]
        %v294 = vld [vmem:[%s265 + $0x6c] sm:$0xf]
        %v295 = vld [vmem:[%s265 + $0x70] sm:$0xf]
        %v296 = vld [vmem:[%s265 + $0x74] sm:$0xf]
        %v297 = vld [vmem:[%s265 + $0x78] sm:$0xf]
        %v298 = vld [vmem:[%s265 + $0x7c] sm:$0xf]
        %v299 = vld [vmem:[%s265 + $0x80] sm:$0xf]
        %v300 = vld [vmem:[%s265 + $0x84] sm:$0xf]
        %v301 = vld [vmem:[%s265 + $0x88] sm:$0xf]
        %v302 = vld [vmem:[%s265 + $0x8c] sm:$0xf]
        %v303 = vld [vmem:[%s265 + $0x90] sm:$0x1]
        %v304 = vld [vmem:[%s265] sm:$0xe]
        %v341 = vunpack.c.l.b16 %v267
        %v342 = vunpack.c.l.b16 %v268
        %v343 = vunpack.c.l.b16 %v269
        %v344 = vunpack.c.l.b16 %v270
        %v345 = vunpack.c.l.b16 %v271
        %v346 = vunpack.c.l.b16 %v272
        %v347 = vunpack.c.l.b16 %v273
        %v348 = vunpack.c.l.b16 %v274
        %v349 = vunpack.c.l.b16 %v275
        %v350 = vunpack.c.l.b16 %v276
        %v351 = vunpack.c.l.b16 %v277
        %v352 = vunpack.c.l.b16 %v278
        %v353 = vunpack.c.l.b16 %v279
        %v354 = vunpack.c.l.b16 %v280
        %v355 = vunpack.c.l.b16 %v281
        %v356 = vunpack.c.l.b16 %v282
        %v357 = vunpack.c.l.b16 %v283
        %v358 = vunpack.c.l.b16 %v284
        %v359 = vunpack.c.l.b16 %v285
        %v360 = vunpack.c.l.b16 %v286
        %v361 = vunpack.c.l.b16 %v287
        %v362 = vunpack.c.l.b16 %v288
        %v363 = vunpack.c.l.b16 %v289
        %v364 = vunpack.c.l.b16 %v290
        %v365 = vunpack.c.l.b16 %v291
        %v366 = vunpack.c.l.b16 %v292
        %v367 = vunpack.c.l.b16 %v293
        %v368 = vunpack.c.l.b16 %v294
        %v369 = vunpack.c.l.b16 %v295
        %v370 = vunpack.c.l.b16 %v296
        %v371 = vunpack.c.l.b16 %v297
        %v372 = vunpack.c.l.b16 %v298
        %v373 = vunpack.c.l.b16 %v299
        %v374 = vunpack.c.l.b16 %v300
        %v375 = vunpack.c.l.b16 %v301
        %v376 = vunpack.c.l.b16 %v302
        %v377 = vpack.c.b16 %v342, %v341
        %v378 = vpack.c.b16 %v344, %v343
        %v379 = vpack.c.b16 %v346, %v345
        %v380 = vpack.c.b16 %v348, %v347
        %v381 = vpack.c.b16 %v350, %v349
        %v382 = vpack.c.b16 %v352, %v351
        %v383 = vpack.c.b16 %v354, %v353
        %v384 = vpack.c.b16 %v356, %v355
        %v385 = vpack.c.b16 %v358, %v357
        %v386 = vpack.c.b16 %v360, %v359
        %v387 = vpack.c.b16 %v362, %v361
        %v388 = vpack.c.b16 %v364, %v363
        %v389 = vpack.c.b16 %v366, %v365
        %v390 = vpack.c.b16 %v368, %v367
        %v391 = vpack.c.b16 %v370, %v369
        %v392 = vpack.c.b16 %v372, %v371
        %v393 = vpack.c.b16 %v374, %v373
        %v394 = vpack.c.b16 %v376, %v375
        %v414 = vunpack.c.l.b16 %v303
        %v415 = vpack.c.b16 %v414, %v414
        %vm416 = vsmask.f32 7424
        %v418 = vshrl.u32 %v377, 16
        %v420 = vshll.u32 %v377, 16
        %v422 = vrot.slane %v420, 1
        %v423 = vor.u32 %v418, %v422
        %v425 = vshll.u32 %v378, 16
        %v427 = vrot.slane %v425, 1
        %v428 = vsel %vm416, %v423, %v427
        %v429 = vshrl.u32 %v378, 16
        %v431 = vor.u32 %v429, %v427
        %v433 = vshll.u32 %v379, 16
        %v435 = vrot.slane %v433, 1
        %v436 = vsel %vm416, %v431, %v435
        %v437 = vshrl.u32 %v379, 16
        %v439 = vor.u32 %v437, %v435
        %v441 = vshll.u32 %v380, 16
        %v443 = vrot.slane %v441, 1
        %v444 = vsel %vm416, %v439, %v443
        %v445 = vshrl.u32 %v380, 16
        %v447 = vor.u32 %v445, %v443
        %v449 = vshll.u32 %v381, 16
        %v451 = vrot.slane %v449, 1
        %v452 = vsel %vm416, %v447, %v451
        %v453 = vshrl.u32 %v381, 16
        %v455 = vor.u32 %v453, %v451
        %v457 = vshll.u32 %v382, 16
        %v459 = vrot.slane %v457, 1
        %v460 = vsel %vm416, %v455, %v459
        %v461 = vshrl.u32 %v382, 16
        %v463 = vor.u32 %v461, %v459
        %v465 = vshll.u32 %v383, 16
        %v467 = vrot.slane %v465, 1
        %v468 = vsel %vm416, %v463, %v467
        %v469 = vshrl.u32 %v383, 16
        %v471 = vor.u32 %v469, %v467
        %v473 = vshll.u32 %v384, 16
        %v475 = vrot.slane %v473, 1
        %v476 = vsel %vm416, %v471, %v475
        %v477 = vshrl.u32 %v384, 16
        %v479 = vor.u32 %v477, %v475
        %v481 = vshll.u32 %v385, 16
        %v483 = vrot.slane %v481, 1
        %v484 = vsel %vm416, %v479, %v483
        %v485 = vshrl.u32 %v385, 16
        %v487 = vor.u32 %v485, %v483
        %v489 = vshll.u32 %v386, 16
        %v491 = vrot.slane %v489, 1
        %v492 = vsel %vm416, %v487, %v491
        %v493 = vshrl.u32 %v386, 16
        %v495 = vor.u32 %v493, %v491
        %v497 = vshll.u32 %v387, 16
        %v499 = vrot.slane %v497, 1
        %v500 = vsel %vm416, %v495, %v499
        %v501 = vshrl.u32 %v387, 16
        %v503 = vor.u32 %v501, %v499
        %v505 = vshll.u32 %v388, 16
        %v507 = vrot.slane %v505, 1
        %v508 = vsel %vm416, %v503, %v507
        %v509 = vshrl.u32 %v388, 16
        %v511 = vor.u32 %v509, %v507
        %v513 = vshll.u32 %v389, 16
        %v515 = vrot.slane %v513, 1
        %v516 = vsel %vm416, %v511, %v515
        %v517 = vshrl.u32 %v389, 16
        %v519 = vor.u32 %v517, %v515
        %v521 = vshll.u32 %v390, 16
        %v523 = vrot.slane %v521, 1
        %v524 = vsel %vm416, %v519, %v523
        %v525 = vshrl.u32 %v390, 16
        %v527 = vor.u32 %v525, %v523
        %v529 = vshll.u32 %v391, 16
        %v531 = vrot.slane %v529, 1
        %v532 = vsel %vm416, %v527, %v531
        %v533 = vshrl.u32 %v391, 16
        %v535 = vor.u32 %v533, %v531
        %v537 = vshll.u32 %v392, 16
        %v539 = vrot.slane %v537, 1
        %v540 = vsel %vm416, %v535, %v539
        %v541 = vshrl.u32 %v392, 16
        %v543 = vor.u32 %v541, %v539
        %v545 = vshll.u32 %v393, 16
        %v547 = vrot.slane %v545, 1
        %v548 = vsel %vm416, %v543, %v547
        %v549 = vshrl.u32 %v393, 16
        %v551 = vor.u32 %v549, %v547
        %v553 = vshll.u32 %v394, 16
        %v555 = vrot.slane %v553, 1
        %v556 = vsel %vm416, %v551, %v555
        %v557 = vshrl.u32 %v394, 16
        %v559 = vor.u32 %v557, %v555
        %v561 = vshll.u32 %v415, 16
        %v563 = vrot.slane %v561, 1
        %v564 = vsel %vm416, %v559, %v563
        %v584 = vunpack.c.l.b16 %v304
        %v585 = vpack.c.b16 %v342, %v584
        %vm586 = vcmask 1046528
        %v587 = vrot.slane %v585, 1
        %v588 = vrot.slane %v378, 1
        %v589 = vsel %vm586, %v587, %v588
        %v590 = vrot.slane %v379, 1
        %v591 = vsel %vm586, %v588, %v590
        %v592 = vrot.slane %v380, 1
        %v593 = vsel %vm586, %v590, %v592
        %v594 = vrot.slane %v381, 1
        %v595 = vsel %vm586, %v592, %v594
        %v596 = vrot.slane %v382, 1
        %v597 = vsel %vm586, %v594, %v596
        %v598 = vrot.slane %v383, 1
        %v599 = vsel %vm586, %v596, %v598
        %v600 = vrot.slane %v384, 1
        %v601 = vsel %vm586, %v598, %v600
        %v602 = vrot.slane %v385, 1
        %v603 = vsel %vm586, %v600, %v602
        %v604 = vrot.slane %v386, 1
        %v605 = vsel %vm586, %v602, %v604
        %v606 = vrot.slane %v387, 1
        %v607 = vsel %vm586, %v604, %v606
        %v608 = vrot.slane %v388, 1
        %v609 = vsel %vm586, %v606, %v608
        %v610 = vrot.slane %v389, 1
        %v611 = vsel %vm586, %v608, %v610
        %v612 = vrot.slane %v390, 1
        %v613 = vsel %vm586, %v610, %v612
        %v614 = vrot.slane %v391, 1
        %v615 = vsel %vm586, %v612, %v614
        %v616 = vrot.slane %v392, 1
        %v617 = vsel %vm586, %v614, %v616
        %v618 = vrot.slane %v393, 1
        %v619 = vsel %vm586, %v616, %v618
        %v620 = vrot.slane %v394, 1
        %v621 = vsel %vm586, %v618, %v620
        %v622 = vrot.slane %v415, 1
        %v623 = vsel %vm586, %v620, %v622
        %v642 = vld [vmem:[%s1] sm:$0xf]
        %v643 = vld [vmem:[%s1 + $0x4] sm:$0xf]
        %v644 = vld [vmem:[%s1 + $0x8] sm:$0xf]
        %v645 = vld [vmem:[%s1 + $0xc] sm:$0xf]
        %v646 = vld [vmem:[%s1 + $0x10] sm:$0xf]
        %v647 = vld [vmem:[%s1 + $0x14] sm:$0xf]
        %v648 = vld [vmem:[%s1 + $0x18] sm:$0xf]
        %v649 = vld [vmem:[%s1 + $0x1c] sm:$0xf]
        %v650 = vld [vmem:[%s1 + $0x20] sm:$0xf]
        %v651 = vld [vmem:[%s1 + $0x24] sm:$0xf]
        %v652 = vld [vmem:[%s1 + $0x28] sm:$0xf]
        %v653 = vld [vmem:[%s1 + $0x2c] sm:$0xf]
        %v654 = vld [vmem:[%s1 + $0x30] sm:$0xf]
        %v655 = vld [vmem:[%s1 + $0x34] sm:$0xf]
        %v656 = vld [vmem:[%s1 + $0x38] sm:$0xf]
        %v657 = vld [vmem:[%s1 + $0x3c] sm:$0xf]
        %v658 = vld [vmem:[%s1 + $0x40] sm:$0xf]
        %v659 = vld [vmem:[%s1 + $0x44] sm:$0xf]
        %v660 = vld [vmem:[%s1 + $0x48] sm:$0xf]
        %v661 = vld [vmem:[%s1 + $0x4c] sm:$0xf]
        %v662 = vld [vmem:[%s1 + $0x50] sm:$0xf]
        %v663 = vld [vmem:[%s1 + $0x54] sm:$0xf]
        %v664 = vld [vmem:[%s1 + $0x58] sm:$0xf]
        %v665 = vld [vmem:[%s1 + $0x5c] sm:$0xf]
        %v666 = vld [vmem:[%s1 + $0x60] sm:$0xf]
        %v667 = vld [vmem:[%s1 + $0x64] sm:$0xf]
        %v668 = vld [vmem:[%s1 + $0x68] sm:$0xf]
        %v669 = vld [vmem:[%s1 + $0x6c] sm:$0xf]
        %v670 = vld [vmem:[%s1 + $0x70] sm:$0xf]
        %v671 = vld [vmem:[%s1 + $0x74] sm:$0xf]
        %v672 = vld [vmem:[%s1 + $0x78] sm:$0xf]
        %v673 = vld [vmem:[%s1 + $0x7c] sm:$0xf]
        %v674 = vld [vmem:[%s1 + $0x80] sm:$0xf]
        %v675 = vld [vmem:[%s1 + $0x84] sm:$0xf]
        %v676 = vld [vmem:[%s1 + $0x88] sm:$0xf]
        %v677 = vld [vmem:[%s1 + $0x8c] sm:$0xf]
        %v678 = vld [vmem:[%s1 + $0x90] sm:$0xf]
        %v679 = vld [vmem:[%s1 + $0x94] sm:$0xf]
        %v680 = vld [vmem:[%s1 + $0x98] sm:$0xf]
        %v681 = vld [vmem:[%s1 + $0x9c] sm:$0xf]
        %v682 = vld [vmem:[%s1 + $0xa0] sm:$0xf]
        %v683 = vld [vmem:[%s1 + $0xa4] sm:$0xf]
        %v684 = vld [vmem:[%s1 + $0xa8] sm:$0xf]
        %v685 = vld [vmem:[%s1 + $0xac] sm:$0xf]
        %v686 = vld [vmem:[%s1 + $0xb0] sm:$0xf]
        %v687 = vld [vmem:[%s1 + $0xb4] sm:$0xf]
        %v688 = vld [vmem:[%s1 + $0xb8] sm:$0xf]
        %v689 = vld [vmem:[%s1 + $0xbc] sm:$0xf]
        %v690 = vld [vmem:[%s265 + $0x8] sm:$0xe]
        %v691 = vld [vmem:[%s265 + $0x90] sm:$0xf]
        %v692 = vld [vmem:[%s265 + $0x94] sm:$0xf]
        %v693 = vld [vmem:[%s265 + $0x98] sm:$0x1]
        %v694 = vld [vmem:[%s265 + $0x98] sm:$0x3]
        %v695 = vld [vmem:[%s265 + $0x8] sm:$0xc]
        %v700 = vunpack.c.l.b16 %v690
        %v701 = vunpack.c.l.b16 %v691
        %v702 = vunpack.c.l.b16 %v692
        %v703 = vunpack.c.l.b16 %v693
        %v704 = vpack.c.b16 %v344, %v700
        %v705 = vpack.c.b16 %v702, %v701
        %v706 = vpack.c.b16 %v703, %v703
        %v708 = vunpack.c.l.b16 %v694
        %v709 = vpack.c.b16 %v708, %v708
        %v711 = vshrl.u32 %v704, 16
        %v713 = vshll.u32 %v704, 16
        %v715 = vrot.slane %v713, 1
        %v716 = vor.u32 %v711, %v715
        %v717 = vsel %vm416, %v716, %v435
        %v719 = vshll.u32 %v705, 16
        %v721 = vrot.slane %v719, 1
        %v722 = vsel %vm416, %v559, %v721
        %v723 = vshrl.u32 %v705, 16
        %v725 = vor.u32 %v723, %v721
        %v727 = vshll.u32 %v709, 16
        %v729 = vrot.slane %v727, 1
        %v730 = vsel %vm416, %v725, %v729
        %v731 = vshrl.u32 %v709, 16
        %v733 = vor.u32 %v731, %v729
        %v735 = vunpack.c.l.b16 %v695
        %v736 = vpack.c.b16 %v344, %v735
        %v737 = vrot.slane %v736, 1
        %v738 = vsel %vm586, %v737, %v590
        %v739 = vrot.slane %v705, 1
        %v740 = vsel %vm586, %v620, %v739
        %v741 = vrot.slane %v709, 1
        %v742 = vsel %vm586, %v739, %v741
        %s743 = scalar_lea.vmem %s1, 192
        %v744 = vld [vmem:[%s743] sm:$0xf]
        %v745 = vld [vmem:[%s743 + $0x4] sm:$0xf]
        %v746 = vld [vmem:[%s743 + $0x8] sm:$0xf]
        %v747 = vld [vmem:[%s743 + $0xc] sm:$0xf]
        %v748 = vld [vmem:[%s743 + $0x10] sm:$0xf]
        %v749 = vld [vmem:[%s743 + $0x14] sm:$0xf]
        %v750 = vld [vmem:[%s743 + $0x18] sm:$0xf]
        %v751 = vld [vmem:[%s743 + $0x1c] sm:$0xf]
        %v752 = vld [vmem:[%s743 + $0x20] sm:$0xf]
        %v753 = vld [vmem:[%s743 + $0x24] sm:$0xf]
        %v754 = vld [vmem:[%s743 + $0x28] sm:$0xf]
        %v755 = vld [vmem:[%s743 + $0x2c] sm:$0xf]
        %v756 = vld [vmem:[%s743 + $0x30] sm:$0xf]
        %v757 = vld [vmem:[%s743 + $0x34] sm:$0xf]
        %v758 = vld [vmem:[%s743 + $0x38] sm:$0xf]
        %v759 = vld [vmem:[%s743 + $0x3c] sm:$0xf]
        %v760 = vld [vmem:[%s743 + $0x40] sm:$0xf]
        %v761 = vld [vmem:[%s743 + $0x44] sm:$0xf]
        %v762 = vld [vmem:[%s743 + $0x48] sm:$0xf]
        %v763 = vld [vmem:[%s743 + $0x4c] sm:$0xf]
        %v764 = vld [vmem:[%s743 + $0x50] sm:$0xf]
        %v765 = vld [vmem:[%s743 + $0x54] sm:$0xf]
        %v766 = vld [vmem:[%s743 + $0x58] sm:$0xf]
        %v767 = vld [vmem:[%s743 + $0x5c] sm:$0xf]
        %v768 = vld [vmem:[%s743 + $0x60] sm:$0xf]
        %v769 = vld [vmem:[%s743 + $0x64] sm:$0xf]
        %v770 = vld [vmem:[%s743 + $0x68] sm:$0xf]
        %v771 = vld [vmem:[%s743 + $0x6c] sm:$0xf]
        %v772 = vld [vmem:[%s743 + $0x70] sm:$0xf]
        %v773 = vld [vmem:[%s743 + $0x74] sm:$0xf]
        %v774 = vld [vmem:[%s743 + $0x78] sm:$0xf]
        %v775 = vld [vmem:[%s743 + $0x7c] sm:$0xf]
        %v776 = vld [vmem:[%s743 + $0x80] sm:$0xf]
        %v777 = vld [vmem:[%s743 + $0x84] sm:$0xf]
        %v778 = vld [vmem:[%s743 + $0x88] sm:$0xf]
        %v779 = vld [vmem:[%s743 + $0x8c] sm:$0xf]
        %v780 = vld [vmem:[%s743 + $0x90] sm:$0xf]
        %v781 = vld [vmem:[%s743 + $0x94] sm:$0xf]
        %v782 = vld [vmem:[%s743 + $0x98] sm:$0xf]
        %v783 = vld [vmem:[%s743 + $0x9c] sm:$0xf]
        %v784 = vld [vmem:[%s743 + $0xa0] sm:$0xf]
        %v785 = vld [vmem:[%s743 + $0xa4] sm:$0xf]
        %v786 = vld [vmem:[%s743 + $0xa8] sm:$0xf]
        %v787 = vld [vmem:[%s743 + $0xac] sm:$0xf]
        %v788 = vld [vmem:[%s743 + $0xb0] sm:$0xf]
        %v789 = vld [vmem:[%s743 + $0xb4] sm:$0xf]
        %v790 = vld [vmem:[%s743 + $0xb8] sm:$0xf]
        %v791 = vld [vmem:[%s743 + $0xbc] sm:$0xf]
        %v792 = vrot.slane %v704, 1
        %v793 = vsel %vm586, %v792, %v590
        %v794 = vrot.slane %v717, 1
        %v795 = vrot.slane %v444, 1
        %v796 = vsel %vm586, %v794, %v795
        %v797 = vrot.slane %v738, 1
        %v798 = vrot.slane %v593, 1
        %v799 = vsel %vm586, %v797, %v798
        %v800 = vrot.slane %v452, 1
        %v801 = vsel %vm586, %v795, %v800
        %v802 = vrot.slane %v595, 1
        %v803 = vsel %vm586, %v798, %v802
        %v804 = vrot.slane %v460, 1
        %v805 = vsel %vm586, %v800, %v804
        %v806 = vrot.slane %v597, 1
        %v807 = vsel %vm586, %v802, %v806
        %v808 = vrot.slane %v468, 1
        %v809 = vsel %vm586, %v804, %v808
        %v810 = vrot.slane %v599, 1
        %v811 = vsel %vm586, %v806, %v810
        %v812 = vrot.slane %v476, 1
        %v813 = vsel %vm586, %v808, %v812
        %v814 = vrot.slane %v601, 1
        %v815 = vsel %vm586, %v810, %v814
        %v816 = vrot.slane %v484, 1
        %v817 = vsel %vm586, %v812, %v816
        %v818 = vrot.slane %v603, 1
        %v819 = vsel %vm586, %v814, %v818
        %v820 = vrot.slane %v492, 1
        %v821 = vsel %vm586, %v816, %v820
        %v822 = vrot.slane %v605, 1
        %v823 = vsel %vm586, %v818, %v822
        %v824 = vrot.slane %v500, 1
        %v825 = vsel %vm586, %v820, %v824
        %v826 = vrot.slane %v607, 1
        %v827 = vsel %vm586, %v822, %v826
        %v828 = vrot.slane %v508, 1
        %v829 = vsel %vm586, %v824, %v828
        %v830 = vrot.slane %v609, 1
        %v831 = vsel %vm586, %v826, %v830
        %v832 = vrot.slane %v516, 1
        %v833 = vsel %vm586, %v828, %v832
        %v834 = vrot.slane %v611, 1
        %v835 = vsel %vm586, %v830, %v834
        %v836 = vrot.slane %v524, 1
        %v837 = vsel %vm586, %v832, %v836
        %v838 = vrot.slane %v613, 1
        %v839 = vsel %vm586, %v834, %v838
        %v840 = vrot.slane %v532, 1
        %v841 = vsel %vm586, %v836, %v840
        %v842 = vrot.slane %v615, 1
        %v843 = vsel %vm586, %v838, %v842
        %v844 = vrot.slane %v540, 1
        %v845 = vsel %vm586, %v840, %v844
        %v846 = vrot.slane %v617, 1
        %v847 = vsel %vm586, %v842, %v846
        %v848 = vrot.slane %v548, 1
        %v849 = vsel %vm586, %v844, %v848
        %v850 = vrot.slane %v619, 1
        %v851 = vsel %vm586, %v846, %v850
        %v852 = vrot.slane %v556, 1
        %v853 = vsel %vm586, %v848, %v852
        %v854 = vrot.slane %v621, 1
        %v855 = vsel %vm586, %v850, %v854
        %v856 = vrot.slane %v722, 1
        %v857 = vsel %vm586, %v852, %v856
        %v858 = vrot.slane %v740, 1
        %v859 = vsel %vm586, %v854, %v858
        %v860 = vrot.slane %v730, 1
        %v861 = vsel %vm586, %v856, %v860
        %v862 = vrot.slane %v742, 1
        %v863 = vsel %vm586, %v858, %v862
        %v864 = vrot.slane %v706, 1
        %v865 = vsel %vm586, %v739, %v864
        %v866 = vrot.slane %v733, 1
        %v867 = vsel %vm586, %v860, %v866
        %v868 = vrot.slane %v741, 1
        %v869 = vsel %vm586, %v862, %v868
        %v957 = vunpack.c.l.b16 %v744
        %v958 = vunpack.c.l.b16 %v745
        %v959 = vunpack.c.l.b16 %v746
        %v960 = vunpack.c.l.b16 %v747
        %v961 = vunpack.c.l.b16 %v748
        %v962 = vunpack.c.l.b16 %v749
        %v963 = vunpack.c.l.b16 %v750
        %v964 = vunpack.c.l.b16 %v751
        %v965 = vunpack.c.l.b16 %v752
        %v966 = vunpack.c.l.b16 %v753
        %v967 = vunpack.c.l.b16 %v754
        %v968 = vunpack.c.l.b16 %v755
        %v969 = vunpack.c.l.b16 %v756
        %v970 = vunpack.c.l.b16 %v757
        %v971 = vunpack.c.l.b16 %v758
        %v972 = vunpack.c.l.b16 %v759
        %v973 = vunpack.c.l.b16 %v760
        %v974 = vunpack.c.l.b16 %v761
        %v975 = vunpack.c.l.b16 %v762
        %v976 = vunpack.c.l.b16 %v763
        %v977 = vunpack.c.l.b16 %v764
        %v978 = vunpack.c.l.b16 %v765
        %v979 = vunpack.c.l.b16 %v766
        %v980 = vunpack.c.l.b16 %v767
        %v981 = vunpack.c.l.b16 %v768
        %v982 = vunpack.c.l.b16 %v769
        %v983 = vunpack.c.l.b16 %v770
        %v984 = vunpack.c.l.b16 %v771
        %v985 = vunpack.c.l.b16 %v772
        %v986 = vunpack.c.l.b16 %v773
        %v987 = vunpack.c.l.b16 %v774
        %v988 = vunpack.c.l.b16 %v775
        %v989 = vunpack.c.l.b16 %v776
        %v990 = vunpack.c.l.b16 %v777
        %v991 = vunpack.c.l.b16 %v778
        %v992 = vunpack.c.l.b16 %v779
        %v993 = vunpack.c.l.b16 %v780
        %v994 = vunpack.c.l.b16 %v781
        %v995 = vunpack.c.l.b16 %v782
        %v996 = vunpack.c.l.b16 %v783
        %v997 = vunpack.c.l.b16 %v784
        %v998 = vunpack.c.l.b16 %v785
        %v999 = vunpack.c.l.b16 %v786
        %v1000 = vunpack.c.l.b16 %v787
        %v1001 = vunpack.c.l.b16 %v788
        %v1002 = vunpack.c.l.b16 %v789
        %v1003 = vunpack.c.l.b16 %v790
        %v1004 = vunpack.c.l.b16 %v791
        %v1005 = vpack.c.b16 %v958, %v957
        %v1006 = vpack.c.b16 %v960, %v959
        %v1007 = vpack.c.b16 %v962, %v961
        %v1008 = vpack.c.b16 %v964, %v963
        %v1009 = vpack.c.b16 %v966, %v965
        %v1010 = vpack.c.b16 %v968, %v967
        %v1011 = vpack.c.b16 %v970, %v969
        %v1012 = vpack.c.b16 %v972, %v971
        %v1013 = vpack.c.b16 %v974, %v973
        %v1014 = vpack.c.b16 %v976, %v975
        %v1015 = vpack.c.b16 %v978, %v977
        %v1016 = vpack.c.b16 %v980, %v979
        %v1017 = vpack.c.b16 %v982, %v981
        %v1018 = vpack.c.b16 %v984, %v983
        %v1019 = vpack.c.b16 %v986, %v985
        %v1020 = vpack.c.b16 %v988, %v987
        %v1021 = vpack.c.b16 %v990, %v989
        %v1022 = vpack.c.b16 %v992, %v991
        %v1023 = vpack.c.b16 %v994, %v993
        %v1024 = vpack.c.b16 %v996, %v995
        %v1025 = vpack.c.b16 %v998, %v997
        %v1026 = vpack.c.b16 %v1000, %v999
        %v1027 = vpack.c.b16 %v1002, %v1001
        %v1028 = vpack.c.b16 %v1004, %v1003
        %1053 = vmatprep.subr.bf16.mxu0 0
        %1054 = vmatpush1.bf16.msra.mxu0 %v1012
        %1055 = vmatprep.subr.bf16.mxu0 0
        %1056 = vmatpush1.bf16.msra.mxu0 %v1011
        %1057 = vmatprep.subr.bf16.mxu0 0
        %1058 = vmatpush1.bf16.msra.mxu0 %v1010
        %1059 = vmatprep.subr.bf16.mxu0 0
        %1060 = vmatpush1.bf16.msra.mxu0 %v1009
        %1061 = vmatprep.subr.bf16.mxu0 0
        %1062 = vmatpush1.bf16.msra.mxu0 %v1008
        %1063 = vmatprep.subr.bf16.mxu0 0
        %1064 = vmatpush1.bf16.msra.mxu0 %v1007
        %1065 = vmatprep.subr.bf16.mxu0 0
        %1066 = vmatpush1.bf16.msra.mxu0 %v1006
        %1067 = vmatprep.subr.bf16.mxu0 0
        %1068 = vmatpush1.bf16.msra.mxu0 %v1005
        %1069 = vmatprep.subr.bf16.mxu0 0
        %1070 = vmatpush2.bf16.msra.mxu0 %v1020
        %1071 = vmatprep.subr.bf16.mxu0 0
        %1072 = vmatpush2.bf16.msra.mxu0 %v1019
        %1073 = vmatprep.subr.bf16.mxu0 0
        %1074 = vmatpush2.bf16.msra.mxu0 %v1018
        %1075 = vmatprep.subr.bf16.mxu0 0
        %1076 = vmatpush2.bf16.msra.mxu0 %v1017
        %1077 = vmatprep.subr.bf16.mxu0 0
        %1078 = vmatpush2.bf16.msra.mxu0 %v1016
        %1079 = vmatprep.subr.bf16.mxu0 0
        %1080 = vmatpush2.bf16.msra.mxu0 %v1015
        %1081 = vmatprep.subr.bf16.mxu0 0
        %1082 = vmatpush2.bf16.msra.mxu0 %v1014
        %1083 = vmatprep.subr.bf16.mxu0 0
        %1084 = vmatpush2.bf16.msra.mxu0 %v1013
        %1085 = vmatprep.mubr.bf16.mxu0 %v796
        %1086 = vmatmul.mubr.bf16.gmra.mxu0 %v793
        %v1087 = vpop.f32.mrf.mxu0
        %v1088 = vadd.f32 0.0, %v1087
        %v1089 = vpop.f32.mrf.mxu0
        %v1090 = vpop.f32.mrf.mxu0
        %v1091 = vadd.f32 0.0, %v1090
        %v1092 = vpop.f32.mrf.mxu0
        %1093 = vmatprep.mubr.bf16.mxu0 %v801
        %1094 = vmatmul.mubr.bf16.gmra.mxu0 %v593
        %v1095 = vpop.f32.mrf.mxu0
        %v1096 = vadd.f32 0.0, %v1095
        %v1097 = vpop.f32.mrf.mxu0
        %v1098 = vpop.f32.mrf.mxu0
        %v1099 = vadd.f32 0.0, %v1098
        %v1100 = vpop.f32.mrf.mxu0
        %1101 = vmatprep.mubr.bf16.mxu0 %v805
        %1102 = vmatmul.mubr.bf16.gmra.mxu0 %v595
        %v1103 = vpop.f32.mrf.mxu0
        %v1104 = vadd.f32 0.0, %v1103
        %v1105 = vpop.f32.mrf.mxu0
        %v1106 = vpop.f32.mrf.mxu0
        %v1107 = vadd.f32 0.0, %v1106
        %v1108 = vpop.f32.mrf.mxu0
        %1109 = vmatprep.mubr.bf16.mxu0 %v809
        %1110 = vmatmul.mubr.bf16.gmra.mxu0 %v597
        %v1111 = vpop.f32.mrf.mxu0
        %v1112 = vadd.f32 0.0, %v1111
        %v1113 = vpop.f32.mrf.mxu0
        %v1114 = vpop.f32.mrf.mxu0
        %v1115 = vadd.f32 0.0, %v1114
        %v1116 = vpop.f32.mrf.mxu0
        %1117 = vmatprep.mubr.bf16.mxu0 %v813
        %1118 = vmatmul.mubr.bf16.gmra.mxu0 %v599
        %v1119 = vpop.f32.mrf.mxu0
        %v1120 = vadd.f32 0.0, %v1119
        %v1121 = vpop.f32.mrf.mxu0
        %v1122 = vpop.f32.mrf.mxu0
        %v1123 = vadd.f32 0.0, %v1122
        %v1124 = vpop.f32.mrf.mxu0
        %1125 = vmatprep.mubr.bf16.mxu0 %v817
        %1126 = vmatmul.mubr.bf16.gmra.mxu0 %v601
        %v1127 = vpop.f32.mrf.mxu0
        %v1128 = vadd.f32 0.0, %v1127
        %v1129 = vpop.f32.mrf.mxu0
        %v1130 = vpop.f32.mrf.mxu0
        %v1131 = vadd.f32 0.0, %v1130
        %v1132 = vpop.f32.mrf.mxu0
        %1133 = vmatprep.mubr.bf16.mxu0 %v821
        %1134 = vmatmul.mubr.bf16.gmra.mxu0 %v603
        %v1135 = vpop.f32.mrf.mxu0
        %v1136 = vadd.f32 0.0, %v1135
        %v1137 = vpop.f32.mrf.mxu0
        %v1138 = vpop.f32.mrf.mxu0
        %v1139 = vadd.f32 0.0, %v1138
        %v1140 = vpop.f32.mrf.mxu0
        %1141 = vmatprep.mubr.bf16.mxu0 %v825
        %1142 = vmatmul.mubr.bf16.gmra.mxu0 %v605
        %v1143 = vpop.f32.mrf.mxu0
        %v1144 = vadd.f32 0.0, %v1143
        %v1145 = vpop.f32.mrf.mxu0
        %v1146 = vpop.f32.mrf.mxu0
        %v1147 = vadd.f32 0.0, %v1146
        %v1148 = vpop.f32.mrf.mxu0
        %1149 = vmatprep.mubr.bf16.mxu0 %v829
        %1150 = vmatmul.mubr.bf16.gmra.mxu0 %v607
        %v1151 = vpop.f32.mrf.mxu0
        %v1152 = vadd.f32 0.0, %v1151
        %v1153 = vpop.f32.mrf.mxu0
        %v1154 = vpop.f32.mrf.mxu0
        %v1155 = vadd.f32 0.0, %v1154
        %v1156 = vpop.f32.mrf.mxu0
        %1157 = vmatprep.mubr.bf16.mxu0 %v833
        %1158 = vmatmul.mubr.bf16.gmra.mxu0 %v609
        %v1159 = vpop.f32.mrf.mxu0
        %v1160 = vadd.f32 0.0, %v1159
        %v1161 = vpop.f32.mrf.mxu0
        %v1162 = vpop.f32.mrf.mxu0
        %v1163 = vadd.f32 0.0, %v1162
        %v1164 = vpop.f32.mrf.mxu0
        %1165 = vmatprep.mubr.bf16.mxu0 %v837
        %1166 = vmatmul.mubr.bf16.gmra.mxu0 %v611
        %v1167 = vpop.f32.mrf.mxu0
        %v1168 = vadd.f32 0.0, %v1167
        %v1169 = vpop.f32.mrf.mxu0
        %v1170 = vpop.f32.mrf.mxu0
        %v1171 = vadd.f32 0.0, %v1170
        %v1172 = vpop.f32.mrf.mxu0
        %1173 = vmatprep.mubr.bf16.mxu0 %v841
        %1174 = vmatmul.mubr.bf16.gmra.mxu0 %v613
        %v1175 = vpop.f32.mrf.mxu0
        %v1176 = vadd.f32 0.0, %v1175
        %v1177 = vpop.f32.mrf.mxu0
        %v1178 = vpop.f32.mrf.mxu0
        %v1179 = vadd.f32 0.0, %v1178
        %v1180 = vpop.f32.mrf.mxu0
        %1181 = vmatprep.mubr.bf16.mxu0 %v845
        %1182 = vmatmul.mubr.bf16.gmra.mxu0 %v615
        %v1183 = vpop.f32.mrf.mxu0
        %v1184 = vadd.f32 0.0, %v1183
        %v1185 = vpop.f32.mrf.mxu0
        %v1186 = vpop.f32.mrf.mxu0
        %v1187 = vadd.f32 0.0, %v1186
        %v1188 = vpop.f32.mrf.mxu0
        %1189 = vmatprep.mubr.bf16.mxu0 %v849
        %1190 = vmatmul.mubr.bf16.gmra.mxu0 %v617
        %v1191 = vpop.f32.mrf.mxu0
        %v1192 = vadd.f32 0.0, %v1191
        %v1193 = vpop.f32.mrf.mxu0
        %v1194 = vpop.f32.mrf.mxu0
        %v1195 = vadd.f32 0.0, %v1194
        %v1196 = vpop.f32.mrf.mxu0
        %1197 = vmatprep.mubr.bf16.mxu0 %v853
        %1198 = vmatmul.mubr.bf16.gmra.mxu0 %v619
        %v1199 = vpop.f32.mrf.mxu0
        %v1200 = vadd.f32 0.0, %v1199
        %v1201 = vpop.f32.mrf.mxu0
        %v1202 = vpop.f32.mrf.mxu0
        %v1203 = vadd.f32 0.0, %v1202
        %v1204 = vpop.f32.mrf.mxu0
        %1205 = vmatprep.mubr.bf16.mxu0 %v857
        %1206 = vmatmul.mubr.bf16.gmra.mxu0 %v621
        %v1207 = vpop.f32.mrf.mxu0
        %v1208 = vadd.f32 0.0, %v1207
        %v1209 = vpop.f32.mrf.mxu0
        %v1210 = vpop.f32.mrf.mxu0
        %v1211 = vadd.f32 0.0, %v1210
        %v1212 = vpop.f32.mrf.mxu0
        %1213 = vmatprep.mubr.bf16.mxu0 %v861
        %1214 = vmatmul.mubr.bf16.gmra.mxu0 %v740
        %v1215 = vpop.f32.mrf.mxu0
        %v1216 = vadd.f32 0.0, %v1215
        %v1217 = vpop.f32.mrf.mxu0
        %v1218 = vpop.f32.mrf.mxu0
        %v1219 = vadd.f32 0.0, %v1218
        %v1220 = vpop.f32.mrf.mxu0
        %1221 = vmatprep.mubr.bf16.mxu0 %v867
        %1222 = vmatmul.mubr.bf16.gmra.mxu0 %v865
        %v1223 = vpop.f32.mrf.mxu0
        %v1224 = vadd.f32 0.0, %v1223
        %v1225 = vpop.f32.mrf.mxu0
        %v1226 = vpop.f32.mrf.mxu0
        %v1227 = vadd.f32 0.0, %v1226
        %v1228 = vpop.f32.mrf.mxu0
        %1229 = vdwg.mxu0
        %1230 = vmatprep.subr.bf16.mxu0 0
        %1231 = vmatpush1.bf16.msra.mxu0 %v1028
        %1232 = vmatprep.subr.bf16.mxu0 0
        %1233 = vmatpush1.bf16.msra.mxu0 %v1027
        %1234 = vmatprep.subr.bf16.mxu0 0
        %1235 = vmatpush1.bf16.msra.mxu0 %v1026
        %1236 = vmatprep.subr.bf16.mxu0 0
        %1237 = vmatpush1.bf16.msra.mxu0 %v1025
        %1238 = vmatprep.subr.bf16.mxu0 0
        %1239 = vmatpush1.bf16.msra.mxu0 %v1024
        %1240 = vmatprep.subr.bf16.mxu0 0
        %1241 = vmatpush1.bf16.msra.mxu0 %v1023
        %1242 = vmatprep.subr.bf16.mxu0 0
        %1243 = vmatpush1.bf16.msra.mxu0 %v1022
        %1244 = vmatprep.subr.bf16.mxu0 0
        %1245 = vmatpush1.bf16.msra.mxu0 %v1021
        %1246 = vmatprep.subr.bf16.mxu0 0
        %1247 = vmatpush2.bf16.msra.mxu0 0
        %1248 = vmatprep.subr.bf16.mxu0 0
        %1249 = vmatpush2.bf16.msra.mxu0 0
        %1250 = vmatprep.subr.bf16.mxu0 0
        %1251 = vmatpush2.bf16.msra.mxu0 0
        %1252 = vmatprep.subr.bf16.mxu0 0
        %1253 = vmatpush2.bf16.msra.mxu0 0
        %1254 = vmatprep.subr.bf16.mxu0 0
        %1255 = vmatpush2.bf16.msra.mxu0 0
        %1256 = vmatprep.subr.bf16.mxu0 0
        %1257 = vmatpush2.bf16.msra.mxu0 0
        %1258 = vmatprep.subr.bf16.mxu0 0
        %1259 = vmatpush2.bf16.msra.mxu0 0
        %1260 = vmatprep.subr.bf16.mxu0 0
        %1261 = vmatpush2.bf16.msra.mxu0 0
        %1262 = vmatprep.mubr.bf16.mxu0 0
        %1263 = vmatmul.mubr.bf16.gmra.mxu0 %v799
        %v1264 = vpop.f32.mrf.mxu0
        %v1265 = vadd.f32 %v1088, %v1264
        %v1266 = vpop.f32.mrf.mxu0
        %v1267 = vpop.f32.mrf.mxu0
        %v1268 = vadd.f32 %v1091, %v1267
        %v1269 = vpop.f32.mrf.mxu0
        %1270 = vmatprep.mubr.bf16.mxu0 0
        %1271 = vmatmul.mubr.bf16.gmra.mxu0 %v803
        %v1272 = vpop.f32.mrf.mxu0
        %v1273 = vadd.f32 %v1096, %v1272
        %v1274 = vpop.f32.mrf.mxu0
        %v1275 = vpop.f32.mrf.mxu0
        %v1276 = vadd.f32 %v1099, %v1275
        %v1277 = vpop.f32.mrf.mxu0
        %1278 = vmatprep.mubr.bf16.mxu0 0
        %1279 = vmatmul.mubr.bf16.gmra.mxu0 %v807
        %v1280 = vpop.f32.mrf.mxu0
        %v1281 = vadd.f32 %v1104, %v1280
        %v1282 = vpop.f32.mrf.mxu0
        %v1283 = vpop.f32.mrf.mxu0
        %v1284 = vadd.f32 %v1107, %v1283
        %v1285 = vpop.f32.mrf.mxu0
        %1286 = vmatprep.mubr.bf16.mxu0 0
        %1287 = vmatmul.mubr.bf16.gmra.mxu0 %v811
        %v1288 = vpop.f32.mrf.mxu0
        %v1289 = vadd.f32 %v1112, %v1288
        %v1290 = vpop.f32.mrf.mxu0
        %v1291 = vpop.f32.mrf.mxu0
        %v1292 = vadd.f32 %v1115, %v1291
        %v1293 = vpop.f32.mrf.mxu0
        %1294 = vmatprep.mubr.bf16.mxu0 0
        %1295 = vmatmul.mubr.bf16.gmra.mxu0 %v815
        %v1296 = vpop.f32.mrf.mxu0
        %v1297 = vadd.f32 %v1120, %v1296
        %v1298 = vpop.f32.mrf.mxu0
        %v1299 = vpop.f32.mrf.mxu0
        %v1300 = vadd.f32 %v1123, %v1299
        %v1301 = vpop.f32.mrf.mxu0
        %1302 = vmatprep.mubr.bf16.mxu0 0
        %1303 = vmatmul.mubr.bf16.gmra.mxu0 %v819
        %v1304 = vpop.f32.mrf.mxu0
        %v1305 = vadd.f32 %v1128, %v1304
        %v1306 = vpop.f32.mrf.mxu0
        %v1307 = vpop.f32.mrf.mxu0
        %v1308 = vadd.f32 %v1131, %v1307
        %v1309 = vpop.f32.mrf.mxu0
        %1310 = vmatprep.mubr.bf16.mxu0 0
        %1311 = vmatmul.mubr.bf16.gmra.mxu0 %v823
        %v1312 = vpop.f32.mrf.mxu0
        %v1313 = vadd.f32 %v1136, %v1312
        %v1314 = vpop.f32.mrf.mxu0
        %v1315 = vpop.f32.mrf.mxu0
        %v1316 = vadd.f32 %v1139, %v1315
        %v1317 = vpop.f32.mrf.mxu0
        %1318 = vmatprep.mubr.bf16.mxu0 0
        %1319 = vmatmul.mubr.bf16.gmra.mxu0 %v827
        %v1320 = vpop.f32.mrf.mxu0
        %v1321 = vadd.f32 %v1144, %v1320
        %v1322 = vpop.f32.mrf.mxu0
        %v1323 = vpop.f32.mrf.mxu0
        %v1324 = vadd.f32 %v1147, %v1323
        %v1325 = vpop.f32.mrf.mxu0
        %1326 = vmatprep.mubr.bf16.mxu0 0
        %1327 = vmatmul.mubr.bf16.gmra.mxu0 %v831
        %v1328 = vpop.f32.mrf.mxu0
        %v1329 = vadd.f32 %v1152, %v1328
        %v1330 = vpop.f32.mrf.mxu0
        %v1331 = vpop.f32.mrf.mxu0
        %v1332 = vadd.f32 %v1155, %v1331
        %v1333 = vpop.f32.mrf.mxu0
        %1334 = vmatprep.mubr.bf16.mxu0 0
        %1335 = vmatmul.mubr.bf16.gmra.mxu0 %v835
        %v1336 = vpop.f32.mrf.mxu0
        %v1337 = vadd.f32 %v1160, %v1336
        %v1338 = vpop.f32.mrf.mxu0
        %v1339 = vpop.f32.mrf.mxu0
        %v1340 = vadd.f32 %v1163, %v1339
        %v1341 = vpop.f32.mrf.mxu0
        %1342 = vmatprep.mubr.bf16.mxu0 0
        %1343 = vmatmul.mubr.bf16.gmra.mxu0 %v839
        %v1344 = vpop.f32.mrf.mxu0
        %v1345 = vadd.f32 %v1168, %v1344
        %v1346 = vpop.f32.mrf.mxu0
        %v1347 = vpop.f32.mrf.mxu0
        %v1348 = vadd.f32 %v1171, %v1347
        %v1349 = vpop.f32.mrf.mxu0
        %1350 = vmatprep.mubr.bf16.mxu0 0
        %1351 = vmatmul.mubr.bf16.gmra.mxu0 %v843
        %v1352 = vpop.f32.mrf.mxu0
        %v1353 = vadd.f32 %v1176, %v1352
        %v1354 = vpop.f32.mrf.mxu0
        %v1355 = vpop.f32.mrf.mxu0
        %v1356 = vadd.f32 %v1179, %v1355
        %v1357 = vpop.f32.mrf.mxu0
        %1358 = vmatprep.mubr.bf16.mxu0 0
        %1359 = vmatmul.mubr.bf16.gmra.mxu0 %v847
        %v1360 = vpop.f32.mrf.mxu0
        %v1361 = vadd.f32 %v1184, %v1360
        %v1362 = vpop.f32.mrf.mxu0
        %v1363 = vpop.f32.mrf.mxu0
        %v1364 = vadd.f32 %v1187, %v1363
        %v1365 = vpop.f32.mrf.mxu0
        %1366 = vmatprep.mubr.bf16.mxu0 0
        %1367 = vmatmul.mubr.bf16.gmra.mxu0 %v851
        %v1368 = vpop.f32.mrf.mxu0
        %v1369 = vadd.f32 %v1192, %v1368
        %v1370 = vpop.f32.mrf.mxu0
        %v1371 = vpop.f32.mrf.mxu0
        %v1372 = vadd.f32 %v1195, %v1371
        %v1373 = vpop.f32.mrf.mxu0
        %1374 = vmatprep.mubr.bf16.mxu0 0
        %1375 = vmatmul.mubr.bf16.gmra.mxu0 %v855
        %v1376 = vpop.f32.mrf.mxu0
        %v1377 = vadd.f32 %v1200, %v1376
        %v1378 = vpop.f32.mrf.mxu0
        %v1379 = vpop.f32.mrf.mxu0
        %v1380 = vadd.f32 %v1203, %v1379
        %v1381 = vpop.f32.mrf.mxu0
        %1382 = vmatprep.mubr.bf16.mxu0 0
        %1383 = vmatmul.mubr.bf16.gmra.mxu0 %v859
        %v1384 = vpop.f32.mrf.mxu0
        %v1385 = vadd.f32 %v1208, %v1384
        %v1386 = vpop.f32.mrf.mxu0
        %v1387 = vpop.f32.mrf.mxu0
        %v1388 = vadd.f32 %v1211, %v1387
        %v1389 = vpop.f32.mrf.mxu0
        %1390 = vmatprep.mubr.bf16.mxu0 0
        %1391 = vmatmul.mubr.bf16.gmra.mxu0 %v863
        %v1392 = vpop.f32.mrf.mxu0
        %v1393 = vadd.f32 %v1216, %v1392
        %v1394 = vpop.f32.mrf.mxu0
        %v1395 = vpop.f32.mrf.mxu0
        %v1396 = vadd.f32 %v1219, %v1395
        %v1397 = vpop.f32.mrf.mxu0
        %1398 = vmatprep.mubr.bf16.mxu0 0
        %1399 = vmatmul.mubr.bf16.gmra.mxu0 %v869
        %v1400 = vpop.f32.mrf.mxu0
        %v1401 = vadd.f32 %v1224, %v1400
        %v1402 = vpop.f32.mrf.mxu0
        %v1403 = vpop.f32.mrf.mxu0
        %v1404 = vadd.f32 %v1227, %v1403
        %v1405 = vpop.f32.mrf.mxu0
        %1406 = vdwg.mxu0
        %v1455 = vunpack.c.l.b16 %v642
        %v1456 = vunpack.c.l.b16 %v643
        %v1457 = vunpack.c.l.b16 %v644
        %v1458 = vunpack.c.l.b16 %v645
        %v1459 = vunpack.c.l.b16 %v646
        %v1460 = vunpack.c.l.b16 %v647
        %v1461 = vunpack.c.l.b16 %v648
        %v1462 = vunpack.c.l.b16 %v649
        %v1463 = vunpack.c.l.b16 %v650
        %v1464 = vunpack.c.l.b16 %v651
        %v1465 = vunpack.c.l.b16 %v652
        %v1466 = vunpack.c.l.b16 %v653
        %v1467 = vunpack.c.l.b16 %v654
        %v1468 = vunpack.c.l.b16 %v655
        %v1469 = vunpack.c.l.b16 %v656
        %v1470 = vunpack.c.l.b16 %v657
        %v1471 = vunpack.c.l.b16 %v658
        %v1472 = vunpack.c.l.b16 %v659
        %v1473 = vunpack.c.l.b16 %v660
        %v1474 = vunpack.c.l.b16 %v661
        %v1475 = vunpack.c.l.b16 %v662
        %v1476 = vunpack.c.l.b16 %v663
        %v1477 = vunpack.c.l.b16 %v664
        %v1478 = vunpack.c.l.b16 %v665
        %v1479 = vunpack.c.l.b16 %v666
        %v1480 = vunpack.c.l.b16 %v667
        %v1481 = vunpack.c.l.b16 %v668
        %v1482 = vunpack.c.l.b16 %v669
        %v1483 = vunpack.c.l.b16 %v670
        %v1484 = vunpack.c.l.b16 %v671
        %v1485 = vunpack.c.l.b16 %v672
        %v1486 = vunpack.c.l.b16 %v673
        %v1487 = vunpack.c.l.b16 %v674
        %v1488 = vunpack.c.l.b16 %v675
        %v1489 = vunpack.c.l.b16 %v676
        %v1490 = vunpack.c.l.b16 %v677
        %v1491 = vunpack.c.l.b16 %v678
        %v1492 = vunpack.c.l.b16 %v679
        %v1493 = vunpack.c.l.b16 %v680
        %v1494 = vunpack.c.l.b16 %v681
        %v1495 = vunpack.c.l.b16 %v682
        %v1496 = vunpack.c.l.b16 %v683
        %v1497 = vunpack.c.l.b16 %v684
        %v1498 = vunpack.c.l.b16 %v685
        %v1499 = vunpack.c.l.b16 %v686
        %v1500 = vunpack.c.l.b16 %v687
        %v1501 = vunpack.c.l.b16 %v688
        %v1502 = vunpack.c.l.b16 %v689
        %v1503 = vpack.c.b16 %v1456, %v1455
        %v1504 = vpack.c.b16 %v1458, %v1457
        %v1505 = vpack.c.b16 %v1460, %v1459
        %v1506 = vpack.c.b16 %v1462, %v1461
        %v1507 = vpack.c.b16 %v1464, %v1463
        %v1508 = vpack.c.b16 %v1466, %v1465
        %v1509 = vpack.c.b16 %v1468, %v1467
        %v1510 = vpack.c.b16 %v1470, %v1469
        %v1511 = vpack.c.b16 %v1472, %v1471
        %v1512 = vpack.c.b16 %v1474, %v1473
        %v1513 = vpack.c.b16 %v1476, %v1475
        %v1514 = vpack.c.b16 %v1478, %v1477
        %v1515 = vpack.c.b16 %v1480, %v1479
        %v1516 = vpack.c.b16 %v1482, %v1481
        %v1517 = vpack.c.b16 %v1484, %v1483
        %v1518 = vpack.c.b16 %v1486, %v1485
        %v1519 = vpack.c.b16 %v1488, %v1487
        %v1520 = vpack.c.b16 %v1490, %v1489
        %v1521 = vpack.c.b16 %v1492, %v1491
        %v1522 = vpack.c.b16 %v1494, %v1493
        %v1523 = vpack.c.b16 %v1496, %v1495
        %v1524 = vpack.c.b16 %v1498, %v1497
        %v1525 = vpack.c.b16 %v1500, %v1499
        %v1526 = vpack.c.b16 %v1502, %v1501
        %1551 = vmatprep.subr.bf16.mxu0 0
        %1552 = vmatpush1.bf16.msra.mxu0 %v1510
        %1553 = vmatprep.subr.bf16.mxu0 0
        %1554 = vmatpush1.bf16.msra.mxu0 %v1509
        %1555 = vmatprep.subr.bf16.mxu0 0
        %1556 = vmatpush1.bf16.msra.mxu0 %v1508
        %1557 = vmatprep.subr.bf16.mxu0 0
        %1558 = vmatpush1.bf16.msra.mxu0 %v1507
        %1559 = vmatprep.subr.bf16.mxu0 0
        %1560 = vmatpush1.bf16.msra.mxu0 %v1506
        %1561 = vmatprep.subr.bf16.mxu0 0
        %1562 = vmatpush1.bf16.msra.mxu0 %v1505
        %1563 = vmatprep.subr.bf16.mxu0 0
        %1564 = vmatpush1.bf16.msra.mxu0 %v1504
        %1565 = vmatprep.subr.bf16.mxu0 0
        %1566 = vmatpush1.bf16.msra.mxu0 %v1503
        %1567 = vmatprep.subr.bf16.mxu0 0
        %1568 = vmatpush2.bf16.msra.mxu0 %v1518
        %1569 = vmatprep.subr.bf16.mxu0 0
        %1570 = vmatpush2.bf16.msra.mxu0 %v1517
        %1571 = vmatprep.subr.bf16.mxu0 0
        %1572 = vmatpush2.bf16.msra.mxu0 %v1516
        %1573 = vmatprep.subr.bf16.mxu0 0
        %1574 = vmatpush2.bf16.msra.mxu0 %v1515
        %1575 = vmatprep.subr.bf16.mxu0 0
        %1576 = vmatpush2.bf16.msra.mxu0 %v1514
        %1577 = vmatprep.subr.bf16.mxu0 0
        %1578 = vmatpush2.bf16.msra.mxu0 %v1513
        %1579 = vmatprep.subr.bf16.mxu0 0
        %1580 = vmatpush2.bf16.msra.mxu0 %v1512
        %1581 = vmatprep.subr.bf16.mxu0 0
        %1582 = vmatpush2.bf16.msra.mxu0 %v1511
        %1583 = vmatprep.mubr.bf16.mxu0 %v428
        %1584 = vmatmul.mubr.bf16.gmra.mxu0 %v377
        %v1585 = vpop.f32.mrf.mxu0
        %v1586 = vadd.f32 %v1265, %v1585
        %v1587 = vpop.f32.mrf.mxu0
        %v1588 = vpop.f32.mrf.mxu0
        %v1589 = vadd.f32 %v1268, %v1588
        %v1590 = vpop.f32.mrf.mxu0
        %1591 = vmatprep.mubr.bf16.mxu0 %v436
        %1592 = vmatmul.mubr.bf16.gmra.mxu0 %v378
        %v1593 = vpop.f32.mrf.mxu0
        %v1594 = vadd.f32 %v1273, %v1593
        %v1595 = vpop.f32.mrf.mxu0
        %v1596 = vpop.f32.mrf.mxu0
        %v1597 = vadd.f32 %v1276, %v1596
        %v1598 = vpop.f32.mrf.mxu0
        %1599 = vmatprep.mubr.bf16.mxu0 %v444
        %1600 = vmatmul.mubr.bf16.gmra.mxu0 %v379
        %v1601 = vpop.f32.mrf.mxu0
        %v1602 = vadd.f32 %v1281, %v1601
        %v1603 = vpop.f32.mrf.mxu0
        %v1604 = vpop.f32.mrf.mxu0
        %v1605 = vadd.f32 %v1284, %v1604
        %v1606 = vpop.f32.mrf.mxu0
        %1607 = vmatprep.mubr.bf16.mxu0 %v452
        %1608 = vmatmul.mubr.bf16.gmra.mxu0 %v380
        %v1609 = vpop.f32.mrf.mxu0
        %v1610 = vadd.f32 %v1289, %v1609
        %v1611 = vpop.f32.mrf.mxu0
        %v1612 = vpop.f32.mrf.mxu0
        %v1613 = vadd.f32 %v1292, %v1612
        %v1614 = vpop.f32.mrf.mxu0
        %1615 = vmatprep.mubr.bf16.mxu0 %v460
        %1616 = vmatmul.mubr.bf16.gmra.mxu0 %v381
        %v1617 = vpop.f32.mrf.mxu0
        %v1618 = vadd.f32 %v1297, %v1617
        %v1619 = vpop.f32.mrf.mxu0
        %v1620 = vpop.f32.mrf.mxu0
        %v1621 = vadd.f32 %v1300, %v1620
        %v1622 = vpop.f32.mrf.mxu0
        %1623 = vmatprep.mubr.bf16.mxu0 %v468
        %1624 = vmatmul.mubr.bf16.gmra.mxu0 %v382
        %v1625 = vpop.f32.mrf.mxu0
        %v1626 = vadd.f32 %v1305, %v1625
        %v1627 = vpop.f32.mrf.mxu0
        %v1628 = vpop.f32.mrf.mxu0
        %v1629 = vadd.f32 %v1308, %v1628
        %v1630 = vpop.f32.mrf.mxu0
        %1631 = vmatprep.mubr.bf16.mxu0 %v476
        %1632 = vmatmul.mubr.bf16.gmra.mxu0 %v383
        %v1633 = vpop.f32.mrf.mxu0
        %v1634 = vadd.f32 %v1313, %v1633
        %v1635 = vpop.f32.mrf.mxu0
        %v1636 = vpop.f32.mrf.mxu0
        %v1637 = vadd.f32 %v1316, %v1636
        %v1638 = vpop.f32.mrf.mxu0
        %1639 = vmatprep.mubr.bf16.mxu0 %v484
        %1640 = vmatmul.mubr.bf16.gmra.mxu0 %v384
        %v1641 = vpop.f32.mrf.mxu0
        %v1642 = vadd.f32 %v1321, %v1641
        %v1643 = vpop.f32.mrf.mxu0
        %v1644 = vpop.f32.mrf.mxu0
        %v1645 = vadd.f32 %v1324, %v1644
        %v1646 = vpop.f32.mrf.mxu0
        %1647 = vmatprep.mubr.bf16.mxu0 %v492
        %1648 = vmatmul.mubr.bf16.gmra.mxu0 %v385
        %v1649 = vpop.f32.mrf.mxu0
        %v1650 = vadd.f32 %v1329, %v1649
        %v1651 = vpop.f32.mrf.mxu0
        %v1652 = vpop.f32.mrf.mxu0
        %v1653 = vadd.f32 %v1332, %v1652
        %v1654 = vpop.f32.mrf.mxu0
        %1655 = vmatprep.mubr.bf16.mxu0 %v500
        %1656 = vmatmul.mubr.bf16.gmra.mxu0 %v386
        %v1657 = vpop.f32.mrf.mxu0
        %v1658 = vadd.f32 %v1337, %v1657
        %v1659 = vpop.f32.mrf.mxu0
        %v1660 = vpop.f32.mrf.mxu0
        %v1661 = vadd.f32 %v1340, %v1660
        %v1662 = vpop.f32.mrf.mxu0
        %1663 = vmatprep.mubr.bf16.mxu0 %v508
        %1664 = vmatmul.mubr.bf16.gmra.mxu0 %v387
        %v1665 = vpop.f32.mrf.mxu0
        %v1666 = vadd.f32 %v1345, %v1665
        %v1667 = vpop.f32.mrf.mxu0
        %v1668 = vpop.f32.mrf.mxu0
        %v1669 = vadd.f32 %v1348, %v1668
        %v1670 = vpop.f32.mrf.mxu0
        %1671 = vmatprep.mubr.bf16.mxu0 %v516
        %1672 = vmatmul.mubr.bf16.gmra.mxu0 %v388
        %v1673 = vpop.f32.mrf.mxu0
        %v1674 = vadd.f32 %v1353, %v1673
        %v1675 = vpop.f32.mrf.mxu0
        %v1676 = vpop.f32.mrf.mxu0
        %v1677 = vadd.f32 %v1356, %v1676
        %v1678 = vpop.f32.mrf.mxu0
        %1679 = vmatprep.mubr.bf16.mxu0 %v524
        %1680 = vmatmul.mubr.bf16.gmra.mxu0 %v389
        %v1681 = vpop.f32.mrf.mxu0
        %v1682 = vadd.f32 %v1361, %v1681
        %v1683 = vpop.f32.mrf.mxu0
        %v1684 = vpop.f32.mrf.mxu0
        %v1685 = vadd.f32 %v1364, %v1684
        %v1686 = vpop.f32.mrf.mxu0
        %1687 = vmatprep.mubr.bf16.mxu0 %v532
        %1688 = vmatmul.mubr.bf16.gmra.mxu0 %v390
        %v1689 = vpop.f32.mrf.mxu0
        %v1690 = vadd.f32 %v1369, %v1689
        %v1691 = vpop.f32.mrf.mxu0
        %v1692 = vpop.f32.mrf.mxu0
        %v1693 = vadd.f32 %v1372, %v1692
        %v1694 = vpop.f32.mrf.mxu0
        %1695 = vmatprep.mubr.bf16.mxu0 %v540
        %1696 = vmatmul.mubr.bf16.gmra.mxu0 %v391
        %v1697 = vpop.f32.mrf.mxu0
        %v1698 = vadd.f32 %v1377, %v1697
        %v1699 = vpop.f32.mrf.mxu0
        %v1700 = vpop.f32.mrf.mxu0
        %v1701 = vadd.f32 %v1380, %v1700
        %v1702 = vpop.f32.mrf.mxu0
        %1703 = vmatprep.mubr.bf16.mxu0 %v548
        %1704 = vmatmul.mubr.bf16.gmra.mxu0 %v392
        %v1705 = vpop.f32.mrf.mxu0
        %v1706 = vadd.f32 %v1385, %v1705
        %v1707 = vpop.f32.mrf.mxu0
        %v1708 = vpop.f32.mrf.mxu0
        %v1709 = vadd.f32 %v1388, %v1708
        %v1710 = vpop.f32.mrf.mxu0
        %1711 = vmatprep.mubr.bf16.mxu0 %v556
        %1712 = vmatmul.mubr.bf16.gmra.mxu0 %v393
        %v1713 = vpop.f32.mrf.mxu0
        %v1714 = vadd.f32 %v1393, %v1713
        %v1715 = vpop.f32.mrf.mxu0
        %v1716 = vpop.f32.mrf.mxu0
        %v1717 = vadd.f32 %v1396, %v1716
        %v1718 = vpop.f32.mrf.mxu0
        %1719 = vmatprep.mubr.bf16.mxu0 %v564
        %1720 = vmatmul.mubr.bf16.gmra.mxu0 %v394
        %v1721 = vpop.f32.mrf.mxu0
        %v1722 = vadd.f32 %v1401, %v1721
        %v1723 = vpop.f32.mrf.mxu0
        %v1724 = vpop.f32.mrf.mxu0
        %v1725 = vadd.f32 %v1404, %v1724
        %v1726 = vpop.f32.mrf.mxu0
        %1727 = vdwg.mxu0
        %1728 = vmatprep.subr.bf16.mxu0 0
        %1729 = vmatpush1.bf16.msra.mxu0 %v1526
        %1730 = vmatprep.subr.bf16.mxu0 0
        %1731 = vmatpush1.bf16.msra.mxu0 %v1525
        %1732 = vmatprep.subr.bf16.mxu0 0
        %1733 = vmatpush1.bf16.msra.mxu0 %v1524
        %1734 = vmatprep.subr.bf16.mxu0 0
        %1735 = vmatpush1.bf16.msra.mxu0 %v1523
        %1736 = vmatprep.subr.bf16.mxu0 0
        %1737 = vmatpush1.bf16.msra.mxu0 %v1522
        %1738 = vmatprep.subr.bf16.mxu0 0
        %1739 = vmatpush1.bf16.msra.mxu0 %v1521
        %1740 = vmatprep.subr.bf16.mxu0 0
        %1741 = vmatpush1.bf16.msra.mxu0 %v1520
        %1742 = vmatprep.subr.bf16.mxu0 0
        %1743 = vmatpush1.bf16.msra.mxu0 %v1519
        %1744 = vmatprep.subr.bf16.mxu0 0
        %1745 = vmatpush2.bf16.msra.mxu0 0
        %1746 = vmatprep.subr.bf16.mxu0 0
        %1747 = vmatpush2.bf16.msra.mxu0 0
        %1748 = vmatprep.subr.bf16.mxu0 0
        %1749 = vmatpush2.bf16.msra.mxu0 0
        %1750 = vmatprep.subr.bf16.mxu0 0
        %1751 = vmatpush2.bf16.msra.mxu0 0
        %1752 = vmatprep.subr.bf16.mxu0 0
        %1753 = vmatpush2.bf16.msra.mxu0 0
        %1754 = vmatprep.subr.bf16.mxu0 0
        %1755 = vmatpush2.bf16.msra.mxu0 0
        %1756 = vmatprep.subr.bf16.mxu0 0
        %1757 = vmatpush2.bf16.msra.mxu0 0
        %1758 = vmatprep.subr.bf16.mxu0 0
        %1759 = vmatpush2.bf16.msra.mxu0 0
        %1760 = vmatprep.mubr.bf16.mxu0 0
        %1761 = vmatmul.mubr.bf16.gmra.mxu0 %v589
        %v1762 = vpop.f32.mrf.mxu0
        %v1763 = vadd.f32 %v1586, %v1762
        %v1764 = vpop.f32.mrf.mxu0
        %v1765 = vpop.f32.mrf.mxu0
        %v1766 = vadd.f32 %v1589, %v1765
        %v1767 = vpop.f32.mrf.mxu0
        %1768 = vmatprep.mubr.bf16.mxu0 0
        %1769 = vmatmul.mubr.bf16.gmra.mxu0 %v591
        %v1770 = vpop.f32.mrf.mxu0
        %v1771 = vadd.f32 %v1594, %v1770
        %v1772 = vpop.f32.mrf.mxu0
        %v1773 = vpop.f32.mrf.mxu0
        %v1774 = vadd.f32 %v1597, %v1773
        %v1775 = vpop.f32.mrf.mxu0
        %1776 = vmatprep.mubr.bf16.mxu0 0
        %1777 = vmatmul.mubr.bf16.gmra.mxu0 %v593
        %v1778 = vpop.f32.mrf.mxu0
        %v1779 = vadd.f32 %v1602, %v1778
        %v1780 = vpop.f32.mrf.mxu0
        %v1781 = vpop.f32.mrf.mxu0
        %v1782 = vadd.f32 %v1605, %v1781
        %v1783 = vpop.f32.mrf.mxu0
        %1784 = vmatprep.mubr.bf16.mxu0 0
        %1785 = vmatmul.mubr.bf16.gmra.mxu0 %v595
        %v1786 = vpop.f32.mrf.mxu0
        %v1787 = vadd.f32 %v1610, %v1786
        %v1788 = vpop.f32.mrf.mxu0
        %v1789 = vpop.f32.mrf.mxu0
        %v1790 = vadd.f32 %v1613, %v1789
        %v1791 = vpop.f32.mrf.mxu0
        %1792 = vmatprep.mubr.bf16.mxu0 0
        %1793 = vmatmul.mubr.bf16.gmra.mxu0 %v597
        %v1794 = vpop.f32.mrf.mxu0
        %v1795 = vadd.f32 %v1618, %v1794
        %v1796 = vpop.f32.mrf.mxu0
        %v1797 = vpop.f32.mrf.mxu0
        %v1798 = vadd.f32 %v1621, %v1797
        %v1799 = vpop.f32.mrf.mxu0
        %1800 = vmatprep.mubr.bf16.mxu0 0
        %1801 = vmatmul.mubr.bf16.gmra.mxu0 %v599
        %v1802 = vpop.f32.mrf.mxu0
        %v1803 = vadd.f32 %v1626, %v1802
        %v1804 = vpop.f32.mrf.mxu0
        %v1805 = vpop.f32.mrf.mxu0
        %v1806 = vadd.f32 %v1629, %v1805
        %v1807 = vpop.f32.mrf.mxu0
        %1808 = vmatprep.mubr.bf16.mxu0 0
        %1809 = vmatmul.mubr.bf16.gmra.mxu0 %v601
        %v1810 = vpop.f32.mrf.mxu0
        %v1811 = vadd.f32 %v1634, %v1810
        %v1812 = vpop.f32.mrf.mxu0
        %v1813 = vpop.f32.mrf.mxu0
        %v1814 = vadd.f32 %v1637, %v1813
        %v1815 = vpop.f32.mrf.mxu0
        %1816 = vmatprep.mubr.bf16.mxu0 0
        %1817 = vmatmul.mubr.bf16.gmra.mxu0 %v603
        %v1818 = vpop.f32.mrf.mxu0
        %v1819 = vadd.f32 %v1642, %v1818
        %v1820 = vpop.f32.mrf.mxu0
        %v1821 = vpop.f32.mrf.mxu0
        %v1822 = vadd.f32 %v1645, %v1821
        %v1823 = vpop.f32.mrf.mxu0
        %1824 = vmatprep.mubr.bf16.mxu0 0
        %1825 = vmatmul.mubr.bf16.gmra.mxu0 %v605
        %v1826 = vpop.f32.mrf.mxu0
        %v1827 = vadd.f32 %v1650, %v1826
        %v1828 = vpop.f32.mrf.mxu0
        %v1829 = vpop.f32.mrf.mxu0
        %v1830 = vadd.f32 %v1653, %v1829
        %v1831 = vpop.f32.mrf.mxu0
        %1832 = vmatprep.mubr.bf16.mxu0 0
        %1833 = vmatmul.mubr.bf16.gmra.mxu0 %v607
        %v1834 = vpop.f32.mrf.mxu0
        %v1835 = vadd.f32 %v1658, %v1834
        %v1836 = vpop.f32.mrf.mxu0
        %v1837 = vpop.f32.mrf.mxu0
        %v1838 = vadd.f32 %v1661, %v1837
        %v1839 = vpop.f32.mrf.mxu0
        %1840 = vmatprep.mubr.bf16.mxu0 0
        %1841 = vmatmul.mubr.bf16.gmra.mxu0 %v609
        %v1842 = vpop.f32.mrf.mxu0
        %v1843 = vadd.f32 %v1666, %v1842
        %v1844 = vpop.f32.mrf.mxu0
        %v1845 = vpop.f32.mrf.mxu0
        %v1846 = vadd.f32 %v1669, %v1845
        %v1847 = vpop.f32.mrf.mxu0
        %1848 = vmatprep.mubr.bf16.mxu0 0
        %1849 = vmatmul.mubr.bf16.gmra.mxu0 %v611
        %v1850 = vpop.f32.mrf.mxu0
        %v1851 = vadd.f32 %v1674, %v1850
        %v1852 = vpop.f32.mrf.mxu0
        %v1853 = vpop.f32.mrf.mxu0
        %v1854 = vadd.f32 %v1677, %v1853
        %v1855 = vpop.f32.mrf.mxu0
        %1856 = vmatprep.mubr.bf16.mxu0 0
        %1857 = vmatmul.mubr.bf16.gmra.mxu0 %v613
        %v1858 = vpop.f32.mrf.mxu0
        %v1859 = vadd.f32 %v1682, %v1858
        %v1860 = vpop.f32.mrf.mxu0
        %v1861 = vpop.f32.mrf.mxu0
        %v1862 = vadd.f32 %v1685, %v1861
        %v1863 = vpop.f32.mrf.mxu0
        %1864 = vmatprep.mubr.bf16.mxu0 0
        %1865 = vmatmul.mubr.bf16.gmra.mxu0 %v615
        %v1866 = vpop.f32.mrf.mxu0
        %v1867 = vadd.f32 %v1690, %v1866
        %v1868 = vpop.f32.mrf.mxu0
        %v1869 = vpop.f32.mrf.mxu0
        %v1870 = vadd.f32 %v1693, %v1869
        %v1871 = vpop.f32.mrf.mxu0
        %1872 = vmatprep.mubr.bf16.mxu0 0
        %1873 = vmatmul.mubr.bf16.gmra.mxu0 %v617
        %v1874 = vpop.f32.mrf.mxu0
        %v1875 = vadd.f32 %v1698, %v1874
        %v1876 = vpop.f32.mrf.mxu0
        %v1877 = vpop.f32.mrf.mxu0
        %v1878 = vadd.f32 %v1701, %v1877
        %v1879 = vpop.f32.mrf.mxu0
        %1880 = vmatprep.mubr.bf16.mxu0 0
        %1881 = vmatmul.mubr.bf16.gmra.mxu0 %v619
        %v1882 = vpop.f32.mrf.mxu0
        %v1883 = vadd.f32 %v1706, %v1882
        %v1884 = vpop.f32.mrf.mxu0
        %v1885 = vpop.f32.mrf.mxu0
        %v1886 = vadd.f32 %v1709, %v1885
        %v1887 = vpop.f32.mrf.mxu0
        %1888 = vmatprep.mubr.bf16.mxu0 0
        %1889 = vmatmul.mubr.bf16.gmra.mxu0 %v621
        %v1890 = vpop.f32.mrf.mxu0
        %v1891 = vadd.f32 %v1714, %v1890
        %v1892 = vpop.f32.mrf.mxu0
        %v1893 = vpop.f32.mrf.mxu0
        %v1894 = vadd.f32 %v1717, %v1893
        %v1895 = vpop.f32.mrf.mxu0
        %1896 = vmatprep.mubr.bf16.mxu0 0
        %1897 = vmatmul.mubr.bf16.gmra.mxu0 %v623
        %v1898 = vpop.f32.mrf.mxu0
        %v1899 = vadd.f32 %v1722, %v1898
        %v1900 = vpop.f32.mrf.mxu0
        %v1901 = vpop.f32.mrf.mxu0
        %v1902 = vadd.f32 %v1725, %v1901
        %v1903 = vpop.f32.mrf.mxu0
        %1904 = vdwg.mxu0
        %v1905 = vld [vmem:[%s265 + $0x10] sm:$0xc]
        %v1906 = vld [vmem:[%s265 + $0x14] sm:$0xf]
        %v1907 = vld [vmem:[%s265 + $0x18] sm:$0xf]
        %v1908 = vld [vmem:[%s265 + $0x1c] sm:$0xf]
        %v1909 = vld [vmem:[%s265 + $0x20] sm:$0xf]
        %v1910 = vld [vmem:[%s265 + $0x24] sm:$0xf]
        %v1911 = vld [vmem:[%s265 + $0x28] sm:$0xf]
        %v1912 = vld [vmem:[%s265 + $0x2c] sm:$0xf]
        %v1913 = vld [vmem:[%s265 + $0x30] sm:$0xf]
        %v1914 = vld [vmem:[%s265 + $0x34] sm:$0xf]
        %v1915 = vld [vmem:[%s265 + $0x38] sm:$0xf]
        %v1916 = vld [vmem:[%s265 + $0x3c] sm:$0xf]
        %v1917 = vld [vmem:[%s265 + $0x40] sm:$0xf]
        %v1918 = vld [vmem:[%s265 + $0x44] sm:$0xf]
        %v1919 = vld [vmem:[%s265 + $0x48] sm:$0xf]
        %v1920 = vld [vmem:[%s265 + $0x4c] sm:$0xf]
        %v1921 = vld [vmem:[%s265 + $0x50] sm:$0xf]
        %v1922 = vld [vmem:[%s265 + $0x54] sm:$0xf]
        %v1923 = vld [vmem:[%s265 + $0x58] sm:$0xf]
        %v1924 = vld [vmem:[%s265 + $0x5c] sm:$0xf]
        %v1925 = vld [vmem:[%s265 + $0x60] sm:$0xf]
        %v1926 = vld [vmem:[%s265 + $0x64] sm:$0xf]
        %v1927 = vld [vmem:[%s265 + $0x68] sm:$0xf]
        %v1928 = vld [vmem:[%s265 + $0x6c] sm:$0xf]
        %v1929 = vld [vmem:[%s265 + $0x70] sm:$0xf]
        %v1930 = vld [vmem:[%s265 + $0x74] sm:$0xf]
        %v1931 = vld [vmem:[%s265 + $0x78] sm:$0xf]
        %v1932 = vld [vmem:[%s265 + $0x7c] sm:$0xf]
        %v1933 = vld [vmem:[%s265 + $0x80] sm:$0xf]
        %v1934 = vld [vmem:[%s265 + $0x84] sm:$0xf]
        %v1935 = vld [vmem:[%s265 + $0x88] sm:$0xf]
        %v1936 = vld [vmem:[%s265 + $0x8c] sm:$0xf]
        %v1937 = vld [vmem:[%s265 + $0x90] sm:$0xf]
        %v1938 = vld [vmem:[%s265 + $0x94] sm:$0xf]
        %v1939 = vld [vmem:[%s265 + $0x98] sm:$0xf]
        %v1940 = vld [vmem:[%s265 + $0x9c] sm:$0xf]
        %v1941 = vld [vmem:[%s265 + $0xa0] sm:$0x3]
        %v1942 = vld [vmem:[%s265 + $0xa0] sm:$0x7]
        %v1943 = vld [vmem:[%s265 + $0x10] sm:$0x8]
        %v1981 = vunpack.c.l.b16 %v1905
        %v1982 = vunpack.c.l.b16 %v1906
        %v1983 = vunpack.c.l.b16 %v1907
        %v1984 = vunpack.c.l.b16 %v1908
        %v1985 = vunpack.c.l.b16 %v1909
        %v1986 = vunpack.c.l.b16 %v1910
        %v1987 = vunpack.c.l.b16 %v1911
        %v1988 = vunpack.c.l.b16 %v1912
        %v1989 = vunpack.c.l.b16 %v1913
        %v1990 = vunpack.c.l.b16 %v1914
        %v1991 = vunpack.c.l.b16 %v1915
        %v1992 = vunpack.c.l.b16 %v1916
        %v1993 = vunpack.c.l.b16 %v1917
        %v1994 = vunpack.c.l.b16 %v1918
        %v1995 = vunpack.c.l.b16 %v1919
        %v1996 = vunpack.c.l.b16 %v1920
        %v1997 = vunpack.c.l.b16 %v1921
        %v1998 = vunpack.c.l.b16 %v1922
        %v1999 = vunpack.c.l.b16 %v1923
        %v2000 = vunpack.c.l.b16 %v1924
        %v2001 = vunpack.c.l.b16 %v1925
        %v2002 = vunpack.c.l.b16 %v1926
        %v2003 = vunpack.c.l.b16 %v1927
        %v2004 = vunpack.c.l.b16 %v1928
        %v2005 = vunpack.c.l.b16 %v1929
        %v2006 = vunpack.c.l.b16 %v1930
        %v2007 = vunpack.c.l.b16 %v1931
        %v2008 = vunpack.c.l.b16 %v1932
        %v2009 = vunpack.c.l.b16 %v1933
        %v2010 = vunpack.c.l.b16 %v1934
        %v2011 = vunpack.c.l.b16 %v1935
        %v2012 = vunpack.c.l.b16 %v1936
        %v2013 = vunpack.c.l.b16 %v1937
        %v2014 = vunpack.c.l.b16 %v1938
        %v2015 = vunpack.c.l.b16 %v1939
        %v2016 = vunpack.c.l.b16 %v1940
        %v2017 = vunpack.c.l.b16 %v1941
        %v2018 = vpack.c.b16 %v1982, %v1981
        %v2019 = vpack.c.b16 %v1984, %v1983
        %v2020 = vpack.c.b16 %v1986, %v1985
        %v2021 = vpack.c.b16 %v1988, %v1987
        %v2022 = vpack.c.b16 %v1990, %v1989
        %v2023 = vpack.c.b16 %v1992, %v1991
        %v2024 = vpack.c.b16 %v1994, %v1993
        %v2025 = vpack.c.b16 %v1996, %v1995
        %v2026 = vpack.c.b16 %v1998, %v1997
        %v2027 = vpack.c.b16 %v2000, %v1999
        %v2028 = vpack.c.b16 %v2002, %v2001
        %v2029 = vpack.c.b16 %v2004, %v2003
        %v2030 = vpack.c.b16 %v2006, %v2005
        %v2031 = vpack.c.b16 %v2008, %v2007
        %v2032 = vpack.c.b16 %v2010, %v2009
        %v2033 = vpack.c.b16 %v2012, %v2011
        %v2034 = vpack.c.b16 %v2014, %v2013
        %v2035 = vpack.c.b16 %v2016, %v2015
        %v2036 = vpack.c.b16 %v2017, %v2017
        %v2038 = vunpack.c.l.b16 %v1942
        %v2039 = vpack.c.b16 %v2038, %v2038
        %v2041 = vshrl.u32 %v2018, 16
        %v2043 = vshll.u32 %v2018, 16
        %v2045 = vrot.slane %v2043, 1
        %v2046 = vor.u32 %v2041, %v2045
        %v2048 = vshll.u32 %v2019, 16
        %v2050 = vrot.slane %v2048, 1
        %v2051 = vsel %vm416, %v2046, %v2050
        %v2052 = vshrl.u32 %v2019, 16
        %v2054 = vor.u32 %v2052, %v2050
        %v2056 = vshll.u32 %v2020, 16
        %v2058 = vrot.slane %v2056, 1
        %v2059 = vsel %vm416, %v2054, %v2058
        %v2060 = vshrl.u32 %v2020, 16
        %v2062 = vor.u32 %v2060, %v2058
        %v2064 = vshll.u32 %v2021, 16
        %v2066 = vrot.slane %v2064, 1
        %v2067 = vsel %vm416, %v2062, %v2066
        %v2068 = vshrl.u32 %v2021, 16
        %v2070 = vor.u32 %v2068, %v2066
        %v2072 = vshll.u32 %v2022, 16
        %v2074 = vrot.slane %v2072, 1
        %v2075 = vsel %vm416, %v2070, %v2074
        %v2076 = vshrl.u32 %v2022, 16
        %v2078 = vor.u32 %v2076, %v2074
        %v2080 = vshll.u32 %v2023, 16
        %v2082 = vrot.slane %v2080, 1
        %v2083 = vsel %vm416, %v2078, %v2082
        %v2084 = vshrl.u32 %v2023, 16
        %v2086 = vor.u32 %v2084, %v2082
        %v2088 = vshll.u32 %v2024, 16
        %v2090 = vrot.slane %v2088, 1
        %v2091 = vsel %vm416, %v2086, %v2090
        %v2092 = vshrl.u32 %v2024, 16
        %v2094 = vor.u32 %v2092, %v2090
        %v2096 = vshll.u32 %v2025, 16
        %v2098 = vrot.slane %v2096, 1
        %v2099 = vsel %vm416, %v2094, %v2098
        %v2100 = vshrl.u32 %v2025, 16
        %v2102 = vor.u32 %v2100, %v2098
        %v2104 = vshll.u32 %v2026, 16
        %v2106 = vrot.slane %v2104, 1
        %v2107 = vsel %vm416, %v2102, %v2106
        %v2108 = vshrl.u32 %v2026, 16
        %v2110 = vor.u32 %v2108, %v2106
        %v2112 = vshll.u32 %v2027, 16
        %v2114 = vrot.slane %v2112, 1
        %v2115 = vsel %vm416, %v2110, %v2114
        %v2116 = vshrl.u32 %v2027, 16
        %v2118 = vor.u32 %v2116, %v2114
        %v2120 = vshll.u32 %v2028, 16
        %v2122 = vrot.slane %v2120, 1
        %v2123 = vsel %vm416, %v2118, %v2122
        %v2124 = vshrl.u32 %v2028, 16
        %v2126 = vor.u32 %v2124, %v2122
        %v2128 = vshll.u32 %v2029, 16
        %v2130 = vrot.slane %v2128, 1
        %v2131 = vsel %vm416, %v2126, %v2130
        %v2132 = vshrl.u32 %v2029, 16
        %v2134 = vor.u32 %v2132, %v2130
        %v2136 = vshll.u32 %v2030, 16
        %v2138 = vrot.slane %v2136, 1
        %v2139 = vsel %vm416, %v2134, %v2138
        %v2140 = vshrl.u32 %v2030, 16
        %v2142 = vor.u32 %v2140, %v2138
        %v2144 = vshll.u32 %v2031, 16
        %v2146 = vrot.slane %v2144, 1
        %v2147 = vsel %vm416, %v2142, %v2146
        %v2148 = vshrl.u32 %v2031, 16
        %v2150 = vor.u32 %v2148, %v2146
        %v2152 = vshll.u32 %v2032, 16
        %v2154 = vrot.slane %v2152, 1
        %v2155 = vsel %vm416, %v2150, %v2154
        %v2156 = vshrl.u32 %v2032, 16
        %v2158 = vor.u32 %v2156, %v2154
        %v2160 = vshll.u32 %v2033, 16
        %v2162 = vrot.slane %v2160, 1
        %v2163 = vsel %vm416, %v2158, %v2162
        %v2164 = vshrl.u32 %v2033, 16
        %v2166 = vor.u32 %v2164, %v2162
        %v2168 = vshll.u32 %v2034, 16
        %v2170 = vrot.slane %v2168, 1
        %v2171 = vsel %vm416, %v2166, %v2170
        %v2172 = vshrl.u32 %v2034, 16
        %v2174 = vor.u32 %v2172, %v2170
        %v2176 = vshll.u32 %v2035, 16
        %v2178 = vrot.slane %v2176, 1
        %v2179 = vsel %vm416, %v2174, %v2178
        %v2180 = vshrl.u32 %v2035, 16
        %v2182 = vor.u32 %v2180, %v2178
        %v2184 = vshll.u32 %v2039, 16
        %v2186 = vrot.slane %v2184, 1
        %v2187 = vsel %vm416, %v2182, %v2186
        %v2188 = vshrl.u32 %v2039, 16
        %v2190 = vor.u32 %v2188, %v2186
        %v2192 = vunpack.c.l.b16 %v1943
        %v2193 = vpack.c.b16 %v1982, %v2192
        %v2194 = vrot.slane %v2193, 1
        %v2195 = vrot.slane %v2019, 1
        %v2196 = vsel %vm586, %v2194, %v2195
        %v2197 = vrot.slane %v2020, 1
        %v2198 = vsel %vm586, %v2195, %v2197
        %v2199 = vrot.slane %v2021, 1
        %v2200 = vsel %vm586, %v2197, %v2199
        %v2201 = vrot.slane %v2022, 1
        %v2202 = vsel %vm586, %v2199, %v2201
        %v2203 = vrot.slane %v2023, 1
        %v2204 = vsel %vm586, %v2201, %v2203
        %v2205 = vrot.slane %v2024, 1
        %v2206 = vsel %vm586, %v2203, %v2205
        %v2207 = vrot.slane %v2025, 1
        %v2208 = vsel %vm586, %v2205, %v2207
        %v2209 = vrot.slane %v2026, 1
        %v2210 = vsel %vm586, %v2207, %v2209
        %v2211 = vrot.slane %v2027, 1
        %v2212 = vsel %vm586, %v2209, %v2211
        %v2213 = vrot.slane %v2028, 1
        %v2214 = vsel %vm586, %v2211, %v2213
        %v2215 = vrot.slane %v2029, 1
        %v2216 = vsel %vm586, %v2213, %v2215
        %v2217 = vrot.slane %v2030, 1
        %v2218 = vsel %vm586, %v2215, %v2217
        %v2219 = vrot.slane %v2031, 1
        %v2220 = vsel %vm586, %v2217, %v2219
        %v2221 = vrot.slane %v2032, 1
        %v2222 = vsel %vm586, %v2219, %v2221
        %v2223 = vrot.slane %v2033, 1
        %v2224 = vsel %vm586, %v2221, %v2223
        %v2225 = vrot.slane %v2034, 1
        %v2226 = vsel %vm586, %v2223, %v2225
        %v2227 = vrot.slane %v2035, 1
        %v2228 = vsel %vm586, %v2225, %v2227
        %v2229 = vrot.slane %v2039, 1
        %v2230 = vsel %vm586, %v2227, %v2229
        %s2231 = scalar_lea.vmem %s1, 384
        %v2232 = vld [vmem:[%s2231] sm:$0xf]
        %v2233 = vld [vmem:[%s2231 + $0x4] sm:$0xf]
        %v2234 = vld [vmem:[%s2231 + $0x8] sm:$0xf]
        %v2235 = vld [vmem:[%s2231 + $0xc] sm:$0xf]
        %v2236 = vld [vmem:[%s2231 + $0x10] sm:$0xf]
        %v2237 = vld [vmem:[%s2231 + $0x14] sm:$0xf]
        %v2238 = vld [vmem:[%s2231 + $0x18] sm:$0xf]
        %v2239 = vld [vmem:[%s2231 + $0x1c] sm:$0xf]
        %v2240 = vld [vmem:[%s2231 + $0x20] sm:$0xf]
        %v2241 = vld [vmem:[%s2231 + $0x24] sm:$0xf]
        %v2242 = vld [vmem:[%s2231 + $0x28] sm:$0xf]
        %v2243 = vld [vmem:[%s2231 + $0x2c] sm:$0xf]
        %v2244 = vld [vmem:[%s2231 + $0x30] sm:$0xf]
        %v2245 = vld [vmem:[%s2231 + $0x34] sm:$0xf]
        %v2246 = vld [vmem:[%s2231 + $0x38] sm:$0xf]
        %v2247 = vld [vmem:[%s2231 + $0x3c] sm:$0xf]
        %v2248 = vld [vmem:[%s2231 + $0x40] sm:$0xf]
        %v2249 = vld [vmem:[%s2231 + $0x44] sm:$0xf]
        %v2250 = vld [vmem:[%s2231 + $0x48] sm:$0xf]
        %v2251 = vld [vmem:[%s2231 + $0x4c] sm:$0xf]
        %v2252 = vld [vmem:[%s2231 + $0x50] sm:$0xf]
        %v2253 = vld [vmem:[%s2231 + $0x54] sm:$0xf]
        %v2254 = vld [vmem:[%s2231 + $0x58] sm:$0xf]
        %v2255 = vld [vmem:[%s2231 + $0x5c] sm:$0xf]
        %v2256 = vld [vmem:[%s2231 + $0x60] sm:$0xf]
        %v2257 = vld [vmem:[%s2231 + $0x64] sm:$0xf]
        %v2258 = vld [vmem:[%s2231 + $0x68] sm:$0xf]
        %v2259 = vld [vmem:[%s2231 + $0x6c] sm:$0xf]
        %v2260 = vld [vmem:[%s2231 + $0x70] sm:$0xf]
        %v2261 = vld [vmem:[%s2231 + $0x74] sm:$0xf]
        %v2262 = vld [vmem:[%s2231 + $0x78] sm:$0xf]
        %v2263 = vld [vmem:[%s2231 + $0x7c] sm:$0xf]
        %v2264 = vld [vmem:[%s2231 + $0x80] sm:$0xf]
        %v2265 = vld [vmem:[%s2231 + $0x84] sm:$0xf]
        %v2266 = vld [vmem:[%s2231 + $0x88] sm:$0xf]
        %v2267 = vld [vmem:[%s2231 + $0x8c] sm:$0xf]
        %v2268 = vld [vmem:[%s2231 + $0x90] sm:$0xf]
        %v2269 = vld [vmem:[%s2231 + $0x94] sm:$0xf]
        %v2270 = vld [vmem:[%s2231 + $0x98] sm:$0xf]
        %v2271 = vld [vmem:[%s2231 + $0x9c] sm:$0xf]
        %v2272 = vld [vmem:[%s2231 + $0xa0] sm:$0xf]
        %v2273 = vld [vmem:[%s2231 + $0xa4] sm:$0xf]
        %v2274 = vld [vmem:[%s2231 + $0xa8] sm:$0xf]
        %v2275 = vld [vmem:[%s2231 + $0xac] sm:$0xf]
        %v2276 = vld [vmem:[%s2231 + $0xb0] sm:$0xf]
        %v2277 = vld [vmem:[%s2231 + $0xb4] sm:$0xf]
        %v2278 = vld [vmem:[%s2231 + $0xb8] sm:$0xf]
        %v2279 = vld [vmem:[%s2231 + $0xbc] sm:$0xf]
        %vm2280 = vcmask 1045504
        %v2281 = vrot.slane %v2018, 2
        %v2282 = vrot.slane %v2019, 2
        %v2283 = vsel %vm2280, %v2281, %v2282
        %v2284 = vrot.slane %v2051, 2
        %v2285 = vrot.slane %v2059, 2
        %v2286 = vsel %vm2280, %v2284, %v2285
        %v2287 = vrot.slane %v2196, 2
        %v2288 = vrot.slane %v2198, 2
        %v2289 = vsel %vm2280, %v2287, %v2288
        %v2290 = vrot.slane %v2020, 2
        %v2291 = vsel %vm2280, %v2282, %v2290
        %v2292 = vrot.slane %v2067, 2
        %v2293 = vsel %vm2280, %v2285, %v2292
        %v2294 = vrot.slane %v2200, 2
        %v2295 = vsel %vm2280, %v2288, %v2294
        %v2296 = vrot.slane %v2021, 2
        %v2297 = vsel %vm2280, %v2290, %v2296
        %v2298 = vrot.slane %v2075, 2
        %v2299 = vsel %vm2280, %v2292, %v2298
        %v2300 = vrot.slane %v2202, 2
        %v2301 = vsel %vm2280, %v2294, %v2300
        %v2302 = vrot.slane %v2022, 2
        %v2303 = vsel %vm2280, %v2296, %v2302
        %v2304 = vrot.slane %v2083, 2
        %v2305 = vsel %vm2280, %v2298, %v2304
        %v2306 = vrot.slane %v2204, 2
        %v2307 = vsel %vm2280, %v2300, %v2306
        %v2308 = vrot.slane %v2023, 2
        %v2309 = vsel %vm2280, %v2302, %v2308
        %v2310 = vrot.slane %v2091, 2
        %v2311 = vsel %vm2280, %v2304, %v2310
        %v2312 = vrot.slane %v2206, 2
        %v2313 = vsel %vm2280, %v2306, %v2312
        %v2314 = vrot.slane %v2024, 2
        %v2315 = vsel %vm2280, %v2308, %v2314
        %v2316 = vrot.slane %v2099, 2
        %v2317 = vsel %vm2280, %v2310, %v2316
        %v2318 = vrot.slane %v2208, 2
        %v2319 = vsel %vm2280, %v2312, %v2318
        %v2320 = vrot.slane %v2025, 2
        %v2321 = vsel %vm2280, %v2314, %v2320
        %v2322 = vrot.slane %v2107, 2
        %v2323 = vsel %vm2280, %v2316, %v2322
        %v2324 = vrot.slane %v2210, 2
        %v2325 = vsel %vm2280, %v2318, %v2324
        %v2326 = vrot.slane %v2026, 2
        %v2327 = vsel %vm2280, %v2320, %v2326
        %v2328 = vrot.slane %v2115, 2
        %v2329 = vsel %vm2280, %v2322, %v2328
        %v2330 = vrot.slane %v2212, 2
        %v2331 = vsel %vm2280, %v2324, %v2330
        %v2332 = vrot.slane %v2027, 2
        %v2333 = vsel %vm2280, %v2326, %v2332
        %v2334 = vrot.slane %v2123, 2
        %v2335 = vsel %vm2280, %v2328, %v2334
        %v2336 = vrot.slane %v2214, 2
        %v2337 = vsel %vm2280, %v2330, %v2336
        %v2338 = vrot.slane %v2028, 2
        %v2339 = vsel %vm2280, %v2332, %v2338
        %v2340 = vrot.slane %v2131, 2
        %v2341 = vsel %vm2280, %v2334, %v2340
        %v2342 = vrot.slane %v2216, 2
        %v2343 = vsel %vm2280, %v2336, %v2342
        %v2344 = vrot.slane %v2029, 2
        %v2345 = vsel %vm2280, %v2338, %v2344
        %v2346 = vrot.slane %v2139, 2
        %v2347 = vsel %vm2280, %v2340, %v2346
        %v2348 = vrot.slane %v2218, 2
        %v2349 = vsel %vm2280, %v2342, %v2348
        %v2350 = vrot.slane %v2030, 2
        %v2351 = vsel %vm2280, %v2344, %v2350
        %v2352 = vrot.slane %v2147, 2
        %v2353 = vsel %vm2280, %v2346, %v2352
        %v2354 = vrot.slane %v2220, 2
        %v2355 = vsel %vm2280, %v2348, %v2354
        %v2356 = vrot.slane %v2031, 2
        %v2357 = vsel %vm2280, %v2350, %v2356
        %v2358 = vrot.slane %v2155, 2
        %v2359 = vsel %vm2280, %v2352, %v2358
        %v2360 = vrot.slane %v2222, 2
        %v2361 = vsel %vm2280, %v2354, %v2360
        %v2362 = vrot.slane %v2032, 2
        %v2363 = vsel %vm2280, %v2356, %v2362
        %v2364 = vrot.slane %v2163, 2
        %v2365 = vsel %vm2280, %v2358, %v2364
        %v2366 = vrot.slane %v2224, 2
        %v2367 = vsel %vm2280, %v2360, %v2366
        %v2368 = vrot.slane %v2033, 2
        %v2369 = vsel %vm2280, %v2362, %v2368
        %v2370 = vrot.slane %v2171, 2
        %v2371 = vsel %vm2280, %v2364, %v2370
        %v2372 = vrot.slane %v2226, 2
        %v2373 = vsel %vm2280, %v2366, %v2372
        %v2374 = vrot.slane %v2034, 2
        %v2375 = vsel %vm2280, %v2368, %v2374
        %v2376 = vrot.slane %v2179, 2
        %v2377 = vsel %vm2280, %v2370, %v2376
        %v2378 = vrot.slane %v2228, 2
        %v2379 = vsel %vm2280, %v2372, %v2378
        %v2380 = vrot.slane %v2035, 2
        %v2381 = vsel %vm2280, %v2374, %v2380
        %v2382 = vrot.slane %v2187, 2
        %v2383 = vsel %vm2280, %v2376, %v2382
        %v2384 = vrot.slane %v2230, 2
        %v2385 = vsel %vm2280, %v2378, %v2384
        %v2386 = vrot.slane %v2036, 2
        %v2387 = vsel %vm2280, %v2380, %v2386
        %v2388 = vrot.slane %v2190, 2
        %v2389 = vsel %vm2280, %v2382, %v2388
        %v2390 = vrot.slane %v2229, 2
        %v2391 = vsel %vm2280, %v2384, %v2390
        %v2494 = vunpack.c.l.b16 %v2232
        %v2495 = vunpack.c.l.b16 %v2233
        %v2496 = vunpack.c.l.b16 %v2234
        %v2497 = vunpack.c.l.b16 %v2235
        %v2498 = vunpack.c.l.b16 %v2236
        %v2499 = vunpack.c.l.b16 %v2237
        %v2500 = vunpack.c.l.b16 %v2238
        %v2501 = vunpack.c.l.b16 %v2239
        %v2502 = vunpack.c.l.b16 %v2240
        %v2503 = vunpack.c.l.b16 %v2241
        %v2504 = vunpack.c.l.b16 %v2242
        %v2505 = vunpack.c.l.b16 %v2243
        %v2506 = vunpack.c.l.b16 %v2244
        %v2507 = vunpack.c.l.b16 %v2245
        %v2508 = vunpack.c.l.b16 %v2246
        %v2509 = vunpack.c.l.b16 %v2247
        %v2510 = vunpack.c.l.b16 %v2248
        %v2511 = vunpack.c.l.b16 %v2249
        %v2512 = vunpack.c.l.b16 %v2250
        %v2513 = vunpack.c.l.b16 %v2251
        %v2514 = vunpack.c.l.b16 %v2252
        %v2515 = vunpack.c.l.b16 %v2253
        %v2516 = vunpack.c.l.b16 %v2254
        %v2517 = vunpack.c.l.b16 %v2255
        %v2518 = vunpack.c.l.b16 %v2256
        %v2519 = vunpack.c.l.b16 %v2257
        %v2520 = vunpack.c.l.b16 %v2258
        %v2521 = vunpack.c.l.b16 %v2259
        %v2522 = vunpack.c.l.b16 %v2260
        %v2523 = vunpack.c.l.b16 %v2261
        %v2524 = vunpack.c.l.b16 %v2262
        %v2525 = vunpack.c.l.b16 %v2263
        %v2526 = vunpack.c.l.b16 %v2264
        %v2527 = vunpack.c.l.b16 %v2265
        %v2528 = vunpack.c.l.b16 %v2266
        %v2529 = vunpack.c.l.b16 %v2267
        %v2530 = vunpack.c.l.b16 %v2268
        %v2531 = vunpack.c.l.b16 %v2269
        %v2532 = vunpack.c.l.b16 %v2270
        %v2533 = vunpack.c.l.b16 %v2271
        %v2534 = vunpack.c.l.b16 %v2272
        %v2535 = vunpack.c.l.b16 %v2273
        %v2536 = vunpack.c.l.b16 %v2274
        %v2537 = vunpack.c.l.b16 %v2275
        %v2538 = vunpack.c.l.b16 %v2276
        %v2539 = vunpack.c.l.b16 %v2277
        %v2540 = vunpack.c.l.b16 %v2278
        %v2541 = vunpack.c.l.b16 %v2279
        %v2542 = vpack.c.b16 %v2495, %v2494
        %v2543 = vpack.c.b16 %v2497, %v2496
        %v2544 = vpack.c.b16 %v2499, %v2498
        %v2545 = vpack.c.b16 %v2501, %v2500
        %v2546 = vpack.c.b16 %v2503, %v2502
        %v2547 = vpack.c.b16 %v2505, %v2504
        %v2548 = vpack.c.b16 %v2507, %v2506
        %v2549 = vpack.c.b16 %v2509, %v2508
        %v2550 = vpack.c.b16 %v2511, %v2510
        %v2551 = vpack.c.b16 %v2513, %v2512
        %v2552 = vpack.c.b16 %v2515, %v2514
        %v2553 = vpack.c.b16 %v2517, %v2516
        %v2554 = vpack.c.b16 %v2519, %v2518
        %v2555 = vpack.c.b16 %v2521, %v2520
        %v2556 = vpack.c.b16 %v2523, %v2522
        %v2557 = vpack.c.b16 %v2525, %v2524
        %v2558 = vpack.c.b16 %v2527, %v2526
        %v2559 = vpack.c.b16 %v2529, %v2528
        %v2560 = vpack.c.b16 %v2531, %v2530
        %v2561 = vpack.c.b16 %v2533, %v2532
        %v2562 = vpack.c.b16 %v2535, %v2534
        %v2563 = vpack.c.b16 %v2537, %v2536
        %v2564 = vpack.c.b16 %v2539, %v2538
        %v2565 = vpack.c.b16 %v2541, %v2540
        %2590 = vmatprep.subr.bf16.mxu0 0
        %2591 = vmatpush1.bf16.msra.mxu0 %v2549
        %2592 = vmatprep.subr.bf16.mxu0 0
        %2593 = vmatpush1.bf16.msra.mxu0 %v2548
        %2594 = vmatprep.subr.bf16.mxu0 0
        %2595 = vmatpush1.bf16.msra.mxu0 %v2547
        %2596 = vmatprep.subr.bf16.mxu0 0
        %2597 = vmatpush1.bf16.msra.mxu0 %v2546
        %2598 = vmatprep.subr.bf16.mxu0 0
        %2599 = vmatpush1.bf16.msra.mxu0 %v2545
        %2600 = vmatprep.subr.bf16.mxu0 0
        %2601 = vmatpush1.bf16.msra.mxu0 %v2544
        %2602 = vmatprep.subr.bf16.mxu0 0
        %2603 = vmatpush1.bf16.msra.mxu0 %v2543
        %2604 = vmatprep.subr.bf16.mxu0 0
        %2605 = vmatpush1.bf16.msra.mxu0 %v2542
        %2606 = vmatprep.subr.bf16.mxu0 0
        %2607 = vmatpush2.bf16.msra.mxu0 %v2557
        %2608 = vmatprep.subr.bf16.mxu0 0
        %2609 = vmatpush2.bf16.msra.mxu0 %v2556
        %2610 = vmatprep.subr.bf16.mxu0 0
        %2611 = vmatpush2.bf16.msra.mxu0 %v2555
        %2612 = vmatprep.subr.bf16.mxu0 0
        %2613 = vmatpush2.bf16.msra.mxu0 %v2554
        %2614 = vmatprep.subr.bf16.mxu0 0
        %2615 = vmatpush2.bf16.msra.mxu0 %v2553
        %2616 = vmatprep.subr.bf16.mxu0 0
        %2617 = vmatpush2.bf16.msra.mxu0 %v2552
        %2618 = vmatprep.subr.bf16.mxu0 0
        %2619 = vmatpush2.bf16.msra.mxu0 %v2551
        %2620 = vmatprep.subr.bf16.mxu0 0
        %2621 = vmatpush2.bf16.msra.mxu0 %v2550
        %2622 = vmatprep.mubr.bf16.mxu0 %v2286
        %2623 = vmatmul.mubr.bf16.gmra.mxu0 %v2283
        %v2624 = vpop.f32.mrf.mxu0
        %v2625 = vadd.f32 0.0, %v2624
        %v2626 = vpop.f32.mrf.mxu0
        %v2627 = vpop.f32.mrf.mxu0
        %v2628 = vadd.f32 0.0, %v2627
        %v2629 = vpop.f32.mrf.mxu0
        %2630 = vmatprep.mubr.bf16.mxu0 %v2293
        %2631 = vmatmul.mubr.bf16.gmra.mxu0 %v2291
        %v2632 = vpop.f32.mrf.mxu0
        %v2633 = vadd.f32 0.0, %v2632
        %v2634 = vpop.f32.mrf.mxu0
        %v2635 = vpop.f32.mrf.mxu0
        %v2636 = vadd.f32 0.0, %v2635
        %v2637 = vpop.f32.mrf.mxu0
        %2638 = vmatprep.mubr.bf16.mxu0 %v2299
        %2639 = vmatmul.mubr.bf16.gmra.mxu0 %v2297
        %v2640 = vpop.f32.mrf.mxu0
        %v2641 = vadd.f32 0.0, %v2640
        %v2642 = vpop.f32.mrf.mxu0
        %v2643 = vpop.f32.mrf.mxu0
        %v2644 = vadd.f32 0.0, %v2643
        %v2645 = vpop.f32.mrf.mxu0
        %2646 = vmatprep.mubr.bf16.mxu0 %v2305
        %2647 = vmatmul.mubr.bf16.gmra.mxu0 %v2303
        %v2648 = vpop.f32.mrf.mxu0
        %v2649 = vadd.f32 0.0, %v2648
        %v2650 = vpop.f32.mrf.mxu0
        %v2651 = vpop.f32.mrf.mxu0
        %v2652 = vadd.f32 0.0, %v2651
        %v2653 = vpop.f32.mrf.mxu0
        %2654 = vmatprep.mubr.bf16.mxu0 %v2311
        %2655 = vmatmul.mubr.bf16.gmra.mxu0 %v2309
        %v2656 = vpop.f32.mrf.mxu0
        %v2657 = vadd.f32 0.0, %v2656
        %v2658 = vpop.f32.mrf.mxu0
        %v2659 = vpop.f32.mrf.mxu0
        %v2660 = vadd.f32 0.0, %v2659
        %v2661 = vpop.f32.mrf.mxu0
        %2662 = vmatprep.mubr.bf16.mxu0 %v2317
        %2663 = vmatmul.mubr.bf16.gmra.mxu0 %v2315
        %v2664 = vpop.f32.mrf.mxu0
        %v2665 = vadd.f32 0.0, %v2664
        %v2666 = vpop.f32.mrf.mxu0
        %v2667 = vpop.f32.mrf.mxu0
        %v2668 = vadd.f32 0.0, %v2667
        %v2669 = vpop.f32.mrf.mxu0
        %2670 = vmatprep.mubr.bf16.mxu0 %v2323
        %2671 = vmatmul.mubr.bf16.gmra.mxu0 %v2321
        %v2672 = vpop.f32.mrf.mxu0
        %v2673 = vadd.f32 0.0, %v2672
        %v2674 = vpop.f32.mrf.mxu0
        %v2675 = vpop.f32.mrf.mxu0
        %v2676 = vadd.f32 0.0, %v2675
        %v2677 = vpop.f32.mrf.mxu0
        %2678 = vmatprep.mubr.bf16.mxu0 %v2329
        %2679 = vmatmul.mubr.bf16.gmra.mxu0 %v2327
        %v2680 = vpop.f32.mrf.mxu0
        %v2681 = vadd.f32 0.0, %v2680
        %v2682 = vpop.f32.mrf.mxu0
        %v2683 = vpop.f32.mrf.mxu0
        %v2684 = vadd.f32 0.0, %v2683
        %v2685 = vpop.f32.mrf.mxu0
        %2686 = vmatprep.mubr.bf16.mxu0 %v2335
        %2687 = vmatmul.mubr.bf16.gmra.mxu0 %v2333
        %v2688 = vpop.f32.mrf.mxu0
        %v2689 = vadd.f32 0.0, %v2688
        %v2690 = vpop.f32.mrf.mxu0
        %v2691 = vpop.f32.mrf.mxu0
        %v2692 = vadd.f32 0.0, %v2691
        %v2693 = vpop.f32.mrf.mxu0
        %2694 = vmatprep.mubr.bf16.mxu0 %v2341
        %2695 = vmatmul.mubr.bf16.gmra.mxu0 %v2339
        %v2696 = vpop.f32.mrf.mxu0
        %v2697 = vadd.f32 0.0, %v2696
        %v2698 = vpop.f32.mrf.mxu0
        %v2699 = vpop.f32.mrf.mxu0
        %v2700 = vadd.f32 0.0, %v2699
        %v2701 = vpop.f32.mrf.mxu0
        %2702 = vmatprep.mubr.bf16.mxu0 %v2347
        %2703 = vmatmul.mubr.bf16.gmra.mxu0 %v2345
        %v2704 = vpop.f32.mrf.mxu0
        %v2705 = vadd.f32 0.0, %v2704
        %v2706 = vpop.f32.mrf.mxu0
        %v2707 = vpop.f32.mrf.mxu0
        %v2708 = vadd.f32 0.0, %v2707
        %v2709 = vpop.f32.mrf.mxu0
        %2710 = vmatprep.mubr.bf16.mxu0 %v2353
        %2711 = vmatmul.mubr.bf16.gmra.mxu0 %v2351
        %v2712 = vpop.f32.mrf.mxu0
        %v2713 = vadd.f32 0.0, %v2712
        %v2714 = vpop.f32.mrf.mxu0
        %v2715 = vpop.f32.mrf.mxu0
        %v2716 = vadd.f32 0.0, %v2715
        %v2717 = vpop.f32.mrf.mxu0
        %2718 = vmatprep.mubr.bf16.mxu0 %v2359
        %2719 = vmatmul.mubr.bf16.gmra.mxu0 %v2357
        %v2720 = vpop.f32.mrf.mxu0
        %v2721 = vadd.f32 0.0, %v2720
        %v2722 = vpop.f32.mrf.mxu0
        %v2723 = vpop.f32.mrf.mxu0
        %v2724 = vadd.f32 0.0, %v2723
        %v2725 = vpop.f32.mrf.mxu0
        %2726 = vmatprep.mubr.bf16.mxu0 %v2365
        %2727 = vmatmul.mubr.bf16.gmra.mxu0 %v2363
        %v2728 = vpop.f32.mrf.mxu0
        %v2729 = vadd.f32 0.0, %v2728
        %v2730 = vpop.f32.mrf.mxu0
        %v2731 = vpop.f32.mrf.mxu0
        %v2732 = vadd.f32 0.0, %v2731
        %v2733 = vpop.f32.mrf.mxu0
        %2734 = vmatprep.mubr.bf16.mxu0 %v2371
        %2735 = vmatmul.mubr.bf16.gmra.mxu0 %v2369
        %v2736 = vpop.f32.mrf.mxu0
        %v2737 = vadd.f32 0.0, %v2736
        %v2738 = vpop.f32.mrf.mxu0
        %v2739 = vpop.f32.mrf.mxu0
        %v2740 = vadd.f32 0.0, %v2739
        %v2741 = vpop.f32.mrf.mxu0
        %2742 = vmatprep.mubr.bf16.mxu0 %v2377
        %2743 = vmatmul.mubr.bf16.gmra.mxu0 %v2375
        %v2744 = vpop.f32.mrf.mxu0
        %v2745 = vadd.f32 0.0, %v2744
        %v2746 = vpop.f32.mrf.mxu0
        %v2747 = vpop.f32.mrf.mxu0
        %v2748 = vadd.f32 0.0, %v2747
        %v2749 = vpop.f32.mrf.mxu0
        %2750 = vmatprep.mubr.bf16.mxu0 %v2383
        %2751 = vmatmul.mubr.bf16.gmra.mxu0 %v2381
        %v2752 = vpop.f32.mrf.mxu0
        %v2753 = vadd.f32 0.0, %v2752
        %v2754 = vpop.f32.mrf.mxu0
        %v2755 = vpop.f32.mrf.mxu0
        %v2756 = vadd.f32 0.0, %v2755
        %v2757 = vpop.f32.mrf.mxu0
        %2758 = vmatprep.mubr.bf16.mxu0 %v2389
        %2759 = vmatmul.mubr.bf16.gmra.mxu0 %v2387
        %v2760 = vpop.f32.mrf.mxu0
        %v2761 = vadd.f32 0.0, %v2760
        %v2762 = vpop.f32.mrf.mxu0
        %v2763 = vpop.f32.mrf.mxu0
        %v2764 = vadd.f32 0.0, %v2763
        %v2765 = vpop.f32.mrf.mxu0
        %2766 = vdwg.mxu0
        %2767 = vmatprep.subr.bf16.mxu0 0
        %2768 = vmatpush1.bf16.msra.mxu0 %v2565
        %2769 = vmatprep.subr.bf16.mxu0 0
        %2770 = vmatpush1.bf16.msra.mxu0 %v2564
        %2771 = vmatprep.subr.bf16.mxu0 0
        %2772 = vmatpush1.bf16.msra.mxu0 %v2563
        %2773 = vmatprep.subr.bf16.mxu0 0
        %2774 = vmatpush1.bf16.msra.mxu0 %v2562
        %2775 = vmatprep.subr.bf16.mxu0 0
        %2776 = vmatpush1.bf16.msra.mxu0 %v2561
        %2777 = vmatprep.subr.bf16.mxu0 0
        %2778 = vmatpush1.bf16.msra.mxu0 %v2560
        %2779 = vmatprep.subr.bf16.mxu0 0
        %2780 = vmatpush1.bf16.msra.mxu0 %v2559
        %2781 = vmatprep.subr.bf16.mxu0 0
        %2782 = vmatpush1.bf16.msra.mxu0 %v2558
        %2783 = vmatprep.subr.bf16.mxu0 0
        %2784 = vmatpush2.bf16.msra.mxu0 0
        %2785 = vmatprep.subr.bf16.mxu0 0
        %2786 = vmatpush2.bf16.msra.mxu0 0
        %2787 = vmatprep.subr.bf16.mxu0 0
        %2788 = vmatpush2.bf16.msra.mxu0 0
        %2789 = vmatprep.subr.bf16.mxu0 0
        %2790 = vmatpush2.bf16.msra.mxu0 0
        %2791 = vmatprep.subr.bf16.mxu0 0
        %2792 = vmatpush2.bf16.msra.mxu0 0
        %2793 = vmatprep.subr.bf16.mxu0 0
        %2794 = vmatpush2.bf16.msra.mxu0 0
        %2795 = vmatprep.subr.bf16.mxu0 0
        %2796 = vmatpush2.bf16.msra.mxu0 0
        %2797 = vmatprep.subr.bf16.mxu0 0
        %2798 = vmatpush2.bf16.msra.mxu0 0
        %2799 = vmatprep.mubr.bf16.mxu0 0
        %2800 = vmatmul.mubr.bf16.gmra.mxu0 %v2289
        %v2801 = vpop.f32.mrf.mxu0
        %v2802 = vadd.f32 %v2625, %v2801
        %v2803 = vpop.f32.mrf.mxu0
        %v2804 = vpop.f32.mrf.mxu0
        %v2805 = vadd.f32 %v2628, %v2804
        %v2806 = vpop.f32.mrf.mxu0
        %2807 = vmatprep.mubr.bf16.mxu0 0
        %2808 = vmatmul.mubr.bf16.gmra.mxu0 %v2295
        %v2809 = vpop.f32.mrf.mxu0
        %v2810 = vadd.f32 %v2633, %v2809
        %v2811 = vpop.f32.mrf.mxu0
        %v2812 = vpop.f32.mrf.mxu0
        %v2813 = vadd.f32 %v2636, %v2812
        %v2814 = vpop.f32.mrf.mxu0
        %2815 = vmatprep.mubr.bf16.mxu0 0
        %2816 = vmatmul.mubr.bf16.gmra.mxu0 %v2301
        %v2817 = vpop.f32.mrf.mxu0
        %v2818 = vadd.f32 %v2641, %v2817
        %v2819 = vpop.f32.mrf.mxu0
        %v2820 = vpop.f32.mrf.mxu0
        %v2821 = vadd.f32 %v2644, %v2820
        %v2822 = vpop.f32.mrf.mxu0
        %2823 = vmatprep.mubr.bf16.mxu0 0
        %2824 = vmatmul.mubr.bf16.gmra.mxu0 %v2307
        %v2825 = vpop.f32.mrf.mxu0
        %v2826 = vadd.f32 %v2649, %v2825
        %v2827 = vpop.f32.mrf.mxu0
        %v2828 = vpop.f32.mrf.mxu0
        %v2829 = vadd.f32 %v2652, %v2828
        %v2830 = vpop.f32.mrf.mxu0
        %2831 = vmatprep.mubr.bf16.mxu0 0
        %2832 = vmatmul.mubr.bf16.gmra.mxu0 %v2313
        %v2833 = vpop.f32.mrf.mxu0
        %v2834 = vadd.f32 %v2657, %v2833
        %v2835 = vpop.f32.mrf.mxu0
        %v2836 = vpop.f32.mrf.mxu0
        %v2837 = vadd.f32 %v2660, %v2836
        %v2838 = vpop.f32.mrf.mxu0
        %2839 = vmatprep.mubr.bf16.mxu0 0
        %2840 = vmatmul.mubr.bf16.gmra.mxu0 %v2319
        %v2841 = vpop.f32.mrf.mxu0
        %v2842 = vadd.f32 %v2665, %v2841
        %v2843 = vpop.f32.mrf.mxu0
        %v2844 = vpop.f32.mrf.mxu0
        %v2845 = vadd.f32 %v2668, %v2844
        %v2846 = vpop.f32.mrf.mxu0
        %2847 = vmatprep.mubr.bf16.mxu0 0
        %2848 = vmatmul.mubr.bf16.gmra.mxu0 %v2325
        %v2849 = vpop.f32.mrf.mxu0
        %v2850 = vadd.f32 %v2673, %v2849
        %v2851 = vpop.f32.mrf.mxu0
        %v2852 = vpop.f32.mrf.mxu0
        %v2853 = vadd.f32 %v2676, %v2852
        %v2854 = vpop.f32.mrf.mxu0
        %2855 = vmatprep.mubr.bf16.mxu0 0
        %2856 = vmatmul.mubr.bf16.gmra.mxu0 %v2331
        %v2857 = vpop.f32.mrf.mxu0
        %v2858 = vadd.f32 %v2681, %v2857
        %v2859 = vpop.f32.mrf.mxu0
        %v2860 = vpop.f32.mrf.mxu0
        %v2861 = vadd.f32 %v2684, %v2860
        %v2862 = vpop.f32.mrf.mxu0
        %2863 = vmatprep.mubr.bf16.mxu0 0
        %2864 = vmatmul.mubr.bf16.gmra.mxu0 %v2337
        %v2865 = vpop.f32.mrf.mxu0
        %v2866 = vadd.f32 %v2689, %v2865
        %v2867 = vpop.f32.mrf.mxu0
        %v2868 = vpop.f32.mrf.mxu0
        %v2869 = vadd.f32 %v2692, %v2868
        %v2870 = vpop.f32.mrf.mxu0
        %2871 = vmatprep.mubr.bf16.mxu0 0
        %2872 = vmatmul.mubr.bf16.gmra.mxu0 %v2343
        %v2873 = vpop.f32.mrf.mxu0
        %v2874 = vadd.f32 %v2697, %v2873
        %v2875 = vpop.f32.mrf.mxu0
        %v2876 = vpop.f32.mrf.mxu0
        %v2877 = vadd.f32 %v2700, %v2876
        %v2878 = vpop.f32.mrf.mxu0
        %2879 = vmatprep.mubr.bf16.mxu0 0
        %2880 = vmatmul.mubr.bf16.gmra.mxu0 %v2349
        %v2881 = vpop.f32.mrf.mxu0
        %v2882 = vadd.f32 %v2705, %v2881
        %v2883 = vpop.f32.mrf.mxu0
        %v2884 = vpop.f32.mrf.mxu0
        %v2885 = vadd.f32 %v2708, %v2884
        %v2886 = vpop.f32.mrf.mxu0
        %2887 = vmatprep.mubr.bf16.mxu0 0
        %2888 = vmatmul.mubr.bf16.gmra.mxu0 %v2355
        %v2889 = vpop.f32.mrf.mxu0
        %v2890 = vadd.f32 %v2713, %v2889
        %v2891 = vpop.f32.mrf.mxu0
        %v2892 = vpop.f32.mrf.mxu0
        %v2893 = vadd.f32 %v2716, %v2892
        %v2894 = vpop.f32.mrf.mxu0
        %2895 = vmatprep.mubr.bf16.mxu0 0
        %2896 = vmatmul.mubr.bf16.gmra.mxu0 %v2361
        %v2897 = vpop.f32.mrf.mxu0
        %v2898 = vadd.f32 %v2721, %v2897
        %v2899 = vpop.f32.mrf.mxu0
        %v2900 = vpop.f32.mrf.mxu0
        %v2901 = vadd.f32 %v2724, %v2900
        %v2902 = vpop.f32.mrf.mxu0
        %2903 = vmatprep.mubr.bf16.mxu0 0
        %2904 = vmatmul.mubr.bf16.gmra.mxu0 %v2367
        %v2905 = vpop.f32.mrf.mxu0
        %v2906 = vadd.f32 %v2729, %v2905
        %v2907 = vpop.f32.mrf.mxu0
        %v2908 = vpop.f32.mrf.mxu0
        %v2909 = vadd.f32 %v2732, %v2908
        %v2910 = vpop.f32.mrf.mxu0
        %2911 = vmatprep.mubr.bf16.mxu0 0
        %2912 = vmatmul.mubr.bf16.gmra.mxu0 %v2373
        %v2913 = vpop.f32.mrf.mxu0
        %v2914 = vadd.f32 %v2737, %v2913
        %v2915 = vpop.f32.mrf.mxu0
        %v2916 = vpop.f32.mrf.mxu0
        %v2917 = vadd.f32 %v2740, %v2916
        %v2918 = vpop.f32.mrf.mxu0
        %2919 = vmatprep.mubr.bf16.mxu0 0
        %2920 = vmatmul.mubr.bf16.gmra.mxu0 %v2379
        %v2921 = vpop.f32.mrf.mxu0
        %v2922 = vadd.f32 %v2745, %v2921
        %v2923 = vpop.f32.mrf.mxu0
        %v2924 = vpop.f32.mrf.mxu0
        %v2925 = vadd.f32 %v2748, %v2924
        %v2926 = vpop.f32.mrf.mxu0
        %2927 = vmatprep.mubr.bf16.mxu0 0
        %2928 = vmatmul.mubr.bf16.gmra.mxu0 %v2385
        %v2929 = vpop.f32.mrf.mxu0
        %v2930 = vadd.f32 %v2753, %v2929
        %v2931 = vpop.f32.mrf.mxu0
        %v2932 = vpop.f32.mrf.mxu0
        %v2933 = vadd.f32 %v2756, %v2932
        %v2934 = vpop.f32.mrf.mxu0
        %2935 = vmatprep.mubr.bf16.mxu0 0
        %2936 = vmatmul.mubr.bf16.gmra.mxu0 %v2391
        %v2937 = vpop.f32.mrf.mxu0
        %v2938 = vadd.f32 %v2761, %v2937
        %v2939 = vpop.f32.mrf.mxu0
        %v2940 = vpop.f32.mrf.mxu0
        %v2941 = vadd.f32 %v2764, %v2940
        %v2942 = vpop.f32.mrf.mxu0
        %2943 = vdwg.mxu0
        %v2944 = vadd.f32 %v1763, %v2802
        %v2945 = vadd.f32 %v1766, %v2805
        %v2946 = vadd.f32 %v1771, %v2810
        %v2947 = vadd.f32 %v1774, %v2813
        %v2948 = vadd.f32 %v1779, %v2818
        %v2949 = vadd.f32 %v1782, %v2821
        %v2950 = vadd.f32 %v1787, %v2826
        %v2951 = vadd.f32 %v1790, %v2829
        %v2952 = vadd.f32 %v1795, %v2834
        %v2953 = vadd.f32 %v1798, %v2837
        %v2954 = vadd.f32 %v1803, %v2842
        %v2955 = vadd.f32 %v1806, %v2845
        %v2956 = vadd.f32 %v1811, %v2850
        %v2957 = vadd.f32 %v1814, %v2853
        %v2958 = vadd.f32 %v1819, %v2858
        %v2959 = vadd.f32 %v1822, %v2861
        %v2960 = vadd.f32 %v1827, %v2866
        %v2961 = vadd.f32 %v1830, %v2869
        %v2962 = vadd.f32 %v1835, %v2874
        %v2963 = vadd.f32 %v1838, %v2877
        %v2964 = vadd.f32 %v1843, %v2882
        %v2965 = vadd.f32 %v1846, %v2885
        %v2966 = vadd.f32 %v1851, %v2890
        %v2967 = vadd.f32 %v1854, %v2893
        %v2968 = vadd.f32 %v1859, %v2898
        %v2969 = vadd.f32 %v1862, %v2901
        %v2970 = vadd.f32 %v1867, %v2906
        %v2971 = vadd.f32 %v1870, %v2909
        %v2972 = vadd.f32 %v1875, %v2914
        %v2973 = vadd.f32 %v1878, %v2917
        %v2974 = vadd.f32 %v1883, %v2922
        %v2975 = vadd.f32 %v1886, %v2925
        %v2976 = vadd.f32 %v1891, %v2930
        %v2977 = vadd.f32 %v1894, %v2933
        %v2978 = vadd.f32 %v1899, %v2938
        %v2979 = vadd.f32 %v1902, %v2941
        %v2980 = vld [vmem:[%s2] sm:$0x1]
        %v2982 = vlaneseq
        %v2983 = vshrl.u32 %v2982, 7
        %v2984 = vsub.s32 0, %v2983
        %v2985 = vrot.slane %v2980, %v2984
        %v2987 = vadd.f32 %v2944, %v2985
        %v2988 = vadd.f32 %v2945, %v2985
        %v2989 = vadd.f32 %v2946, %v2985
        %v2990 = vadd.f32 %v2947, %v2985
        %v2991 = vadd.f32 %v2948, %v2985
        %v2992 = vadd.f32 %v2949, %v2985
        %v2993 = vadd.f32 %v2950, %v2985
        %v2994 = vadd.f32 %v2951, %v2985
        %v2995 = vadd.f32 %v2952, %v2985
        %v2996 = vadd.f32 %v2953, %v2985
        %v2997 = vadd.f32 %v2954, %v2985
        %v2998 = vadd.f32 %v2955, %v2985
        %v2999 = vadd.f32 %v2956, %v2985
        %v3000 = vadd.f32 %v2957, %v2985
        %v3001 = vadd.f32 %v2958, %v2985
        %v3002 = vadd.f32 %v2959, %v2985
        %v3003 = vadd.f32 %v2960, %v2985
        %v3004 = vadd.f32 %v2961, %v2985
        %v3005 = vadd.f32 %v2962, %v2985
        %v3006 = vadd.f32 %v2963, %v2985
        %v3007 = vadd.f32 %v2964, %v2985
        %v3008 = vadd.f32 %v2965, %v2985
        %v3009 = vadd.f32 %v2966, %v2985
        %v3010 = vadd.f32 %v2967, %v2985
        %v3011 = vadd.f32 %v2968, %v2985
        %v3012 = vadd.f32 %v2969, %v2985
        %v3013 = vadd.f32 %v2970, %v2985
        %v3014 = vadd.f32 %v2971, %v2985
        %v3015 = vadd.f32 %v2972, %v2985
        %v3016 = vadd.f32 %v2973, %v2985
        %v3017 = vadd.f32 %v2974, %v2985
        %v3018 = vadd.f32 %v2975, %v2985
        %v3019 = vadd.f32 %v2976, %v2985
        %v3020 = vadd.f32 %v2977, %v2985
        %v3021 = vadd.f32 %v2978, %v2985
        %v3022 = vadd.f32 %v2979, %v2985
        %v3023 = vmax.f32 %v2987, 0.0
        %v3024 = vmax.f32 %v2988, 0.0
        %v3025 = vmax.f32 %v2989, 0.0
        %v3026 = vmax.f32 %v2990, 0.0
        %v3027 = vmax.f32 %v2991, 0.0
        %v3028 = vmax.f32 %v2992, 0.0
        %v3029 = vmax.f32 %v2993, 0.0
        %v3030 = vmax.f32 %v2994, 0.0
        %v3031 = vmax.f32 %v2995, 0.0
        %v3032 = vmax.f32 %v2996, 0.0
        %v3033 = vmax.f32 %v2997, 0.0
        %v3034 = vmax.f32 %v2998, 0.0
        %v3035 = vmax.f32 %v2999, 0.0
        %v3036 = vmax.f32 %v3000, 0.0
        %v3037 = vmax.f32 %v3001, 0.0
        %v3038 = vmax.f32 %v3002, 0.0
        %v3039 = vmax.f32 %v3003, 0.0
        %v3040 = vmax.f32 %v3004, 0.0
        %v3041 = vmax.f32 %v3005, 0.0
        %v3042 = vmax.f32 %v3006, 0.0
        %v3043 = vmax.f32 %v3007, 0.0
        %v3044 = vmax.f32 %v3008, 0.0
        %v3045 = vmax.f32 %v3009, 0.0
        %v3046 = vmax.f32 %v3010, 0.0
        %v3047 = vmax.f32 %v3011, 0.0
        %v3048 = vmax.f32 %v3012, 0.0
        %v3049 = vmax.f32 %v3013, 0.0
        %v3050 = vmax.f32 %v3014, 0.0
        %v3051 = vmax.f32 %v3015, 0.0
        %v3052 = vmax.f32 %v3016, 0.0
        %v3053 = vmax.f32 %v3017, 0.0
        %v3054 = vmax.f32 %v3018, 0.0
        %v3055 = vmax.f32 %v3019, 0.0
        %v3056 = vmax.f32 %v3020, 0.0
        %v3057 = vmax.f32 %v3021, 0.0
        %v3058 = vmax.f32 %v3022, 0.0
        %3059 = vst [vmem:[%s248] sm:$0xff] %v3023
        %3060 = vst [vmem:[%s248 + $0x8] sm:$0xff] %v3024
        %3061 = vst [vmem:[%s248 + $0x10] sm:$0xff] %v3025
        %3062 = vst [vmem:[%s248 + $0x18] sm:$0xff] %v3026
        %3063 = vst [vmem:[%s248 + $0x20] sm:$0xff] %v3027
        %3064 = vst [vmem:[%s248 + $0x28] sm:$0xff] %v3028
        %3065 = vst [vmem:[%s248 + $0x30] sm:$0xff] %v3029
        %3066 = vst [vmem:[%s248 + $0x38] sm:$0xff] %v3030
        %3067 = vst [vmem:[%s248 + $0x40] sm:$0xff] %v3031
        %3068 = vst [vmem:[%s248 + $0x48] sm:$0xff] %v3032
        %3069 = vst [vmem:[%s248 + $0x50] sm:$0xff] %v3033
        %3070 = vst [vmem:[%s248 + $0x58] sm:$0xff] %v3034
        %3071 = vst [vmem:[%s248 + $0x60] sm:$0xff] %v3035
        %3072 = vst [vmem:[%s248 + $0x68] sm:$0xff] %v3036
        %3073 = vst [vmem:[%s248 + $0x70] sm:$0xff] %v3037
        %3074 = vst [vmem:[%s248 + $0x78] sm:$0xff] %v3038
        %3075 = vst [vmem:[%s248 + $0x80] sm:$0xff] %v3039
        %3076 = vst [vmem:[%s248 + $0x88] sm:$0xff] %v3040
        %3077 = vst [vmem:[%s248 + $0x90] sm:$0xff] %v3041
        %3078 = vst [vmem:[%s248 + $0x98] sm:$0xff] %v3042
        %3079 = vst [vmem:[%s248 + $0xa0] sm:$0xff] %v3043
        %3080 = vst [vmem:[%s248 + $0xa8] sm:$0xff] %v3044
        %3081 = vst [vmem:[%s248 + $0xb0] sm:$0xff] %v3045
        %3082 = vst [vmem:[%s248 + $0xb8] sm:$0xff] %v3046
        %3083 = vst [vmem:[%s248 + $0xc0] sm:$0xff] %v3047
        %3084 = vst [vmem:[%s248 + $0xc8] sm:$0xff] %v3048
        %3085 = vst [vmem:[%s248 + $0xd0] sm:$0xff] %v3049
        %3086 = vst [vmem:[%s248 + $0xd8] sm:$0xff] %v3050
        %3087 = vst [vmem:[%s248 + $0xe0] sm:$0xff] %v3051
        %3088 = vst [vmem:[%s248 + $0xe8] sm:$0xff] %v3052
        %3089 = vst [vmem:[%s248 + $0xf0] sm:$0xff] %v3053
        %3090 = vst [vmem:[%s248 + $0xf8] sm:$0xff] %v3054
        %3091 = vst [vmem:[%s248 + $0x100] sm:$0xff] %v3055
        %3092 = vst [vmem:[%s248 + $0x108] sm:$0xff] %v3056
        %3093 = vst [vmem:[%s248 + $0x110] sm:$0xff] %v3057
        %3094 = vst [vmem:[%s248 + $0x118] sm:$0xff] %v3058
        %v3095 = vld [vmem:[%s3] sm:$0xff]
        %v3096 = vld [vmem:[%s3 + $0x8] sm:$0xff]
        %v3097 = vld [vmem:[%s3 + $0x10] sm:$0xff]
        %v3098 = vld [vmem:[%s3 + $0x18] sm:$0xff]
        %v3099 = vld [vmem:[%s3 + $0x20] sm:$0xff]
        %v3100 = vld [vmem:[%s3 + $0x28] sm:$0xff]
        %v3101 = vld [vmem:[%s3 + $0x30] sm:$0xff]
        %v3102 = vld [vmem:[%s3 + $0x38] sm:$0xff]
        %v3103 = vld [vmem:[%s3 + $0x40] sm:$0xff]
        %v3104 = vld [vmem:[%s3 + $0x48] sm:$0xff]
        %v3105 = vld [vmem:[%s3 + $0x50] sm:$0xff]
        %v3106 = vld [vmem:[%s3 + $0x58] sm:$0xff]
        %v3107 = vld [vmem:[%s3 + $0x60] sm:$0xff]
        %v3108 = vld [vmem:[%s3 + $0x68] sm:$0xff]
        %v3109 = vld [vmem:[%s3 + $0x70] sm:$0xff]
        %v3110 = vld [vmem:[%s3 + $0x78] sm:$0xff]
        %v3111 = vld [vmem:[%s3 + $0x80] sm:$0xff]
        %v3112 = vld [vmem:[%s3 + $0x88] sm:$0xff]
        %v3113 = vld [vmem:[%s3 + $0x90] sm:$0xff]
        %v3114 = vld [vmem:[%s3 + $0x98] sm:$0xff]
        %v3115 = vld [vmem:[%s3 + $0xa0] sm:$0xff]
        %v3116 = vld [vmem:[%s3 + $0xa8] sm:$0xff]
        %v3117 = vld [vmem:[%s3 + $0xb0] sm:$0xff]
        %v3118 = vld [vmem:[%s3 + $0xb8] sm:$0xff]
        %v3119 = vld [vmem:[%s3 + $0xc0] sm:$0xff]
        %v3120 = vld [vmem:[%s3 + $0xc8] sm:$0xff]
        %v3121 = vld [vmem:[%s3 + $0xd0] sm:$0xff]
        %v3122 = vld [vmem:[%s3 + $0xd8] sm:$0xff]
        %v3123 = vld [vmem:[%s3 + $0xe0] sm:$0xff]
        %v3124 = vld [vmem:[%s3 + $0xe8] sm:$0xff]
        %v3125 = vld [vmem:[%s3 + $0xf0] sm:$0xff]
        %v3126 = vld [vmem:[%s3 + $0xf8] sm:$0xff]
        %v3127 = vld [vmem:[%s3 + $0x100] sm:$0xff]
        %v3128 = vld [vmem:[%s3 + $0x108] sm:$0xff]
        %v3129 = vld [vmem:[%s3 + $0x110] sm:$0xff]
        %v3130 = vld [vmem:[%s3 + $0x118] sm:$0xff]
        %3132 = vset.pattern.permute.xlu0 0
        %3133 = vperm.xlu0 %3132, %v3095
        %v3134 = vpop.permute.xlu0 %3133
        %3137 = vset.pattern.permute.xlu0 0
        %3138 = vperm.xlu0 %3137, %v3096
        %v3139 = vpop.permute.xlu0 %3138
        %3142 = vset.pattern.permute.xlu0 0
        %3143 = vperm.xlu0 %3142, %v3097
        %v3144 = vpop.permute.xlu0 %3143
        %3147 = vset.pattern.permute.xlu0 0
        %3148 = vperm.xlu0 %3147, %v3098
        %v3149 = vpop.permute.xlu0 %3148
        %3152 = vset.pattern.permute.xlu0 0
        %3153 = vperm.xlu0 %3152, %v3099
        %v3154 = vpop.permute.xlu0 %3153
        %3157 = vset.pattern.permute.xlu0 0
        %3158 = vperm.xlu0 %3157, %v3100
        %v3159 = vpop.permute.xlu0 %3158
        %3162 = vset.pattern.permute.xlu0 0
        %3163 = vperm.xlu0 %3162, %v3101
        %v3164 = vpop.permute.xlu0 %3163
        %3167 = vset.pattern.permute.xlu0 0
        %3168 = vperm.xlu0 %3167, %v3102
        %v3169 = vpop.permute.xlu0 %3168
        %3172 = vset.pattern.permute.xlu0 0
        %3173 = vperm.xlu0 %3172, %v3103
        %v3174 = vpop.permute.xlu0 %3173
        %3177 = vset.pattern.permute.xlu0 0
        %3178 = vperm.xlu0 %3177, %v3104
        %v3179 = vpop.permute.xlu0 %3178
        %3182 = vset.pattern.permute.xlu0 0
        %3183 = vperm.xlu0 %3182, %v3105
        %v3184 = vpop.permute.xlu0 %3183
        %3187 = vset.pattern.permute.xlu0 0
        %3188 = vperm.xlu0 %3187, %v3106
        %v3189 = vpop.permute.xlu0 %3188
        %3192 = vset.pattern.permute.xlu0 0
        %3193 = vperm.xlu0 %3192, %v3107
        %v3194 = vpop.permute.xlu0 %3193
        %3197 = vset.pattern.permute.xlu0 0
        %3198 = vperm.xlu0 %3197, %v3108
        %v3199 = vpop.permute.xlu0 %3198
        %3202 = vset.pattern.permute.xlu0 0
        %3203 = vperm.xlu0 %3202, %v3109
        %v3204 = vpop.permute.xlu0 %3203
        %3207 = vset.pattern.permute.xlu0 0
        %3208 = vperm.xlu0 %3207, %v3110
        %v3209 = vpop.permute.xlu0 %3208
        %3212 = vset.pattern.permute.xlu0 0
        %3213 = vperm.xlu0 %3212, %v3111
        %v3214 = vpop.permute.xlu0 %3213
        %3217 = vset.pattern.permute.xlu0 0
        %3218 = vperm.xlu0 %3217, %v3112
        %v3219 = vpop.permute.xlu0 %3218
        %3222 = vset.pattern.permute.xlu0 0
        %3223 = vperm.xlu0 %3222, %v3113
        %v3224 = vpop.permute.xlu0 %3223
        %3227 = vset.pattern.permute.xlu0 0
        %3228 = vperm.xlu0 %3227, %v3114
        %v3229 = vpop.permute.xlu0 %3228
        %3232 = vset.pattern.permute.xlu0 0
        %3233 = vperm.xlu0 %3232, %v3115
        %v3234 = vpop.permute.xlu0 %3233
        %3237 = vset.pattern.permute.xlu0 0
        %3238 = vperm.xlu0 %3237, %v3116
        %v3239 = vpop.permute.xlu0 %3238
        %3242 = vset.pattern.permute.xlu0 0
        %3243 = vperm.xlu0 %3242, %v3117
        %v3244 = vpop.permute.xlu0 %3243
        %3247 = vset.pattern.permute.xlu0 0
        %3248 = vperm.xlu0 %3247, %v3118
        %v3249 = vpop.permute.xlu0 %3248
        %3252 = vset.pattern.permute.xlu0 0
        %3253 = vperm.xlu0 %3252, %v3119
        %v3254 = vpop.permute.xlu0 %3253
        %3257 = vset.pattern.permute.xlu0 0
        %3258 = vperm.xlu0 %3257, %v3120
        %v3259 = vpop.permute.xlu0 %3258
        %3262 = vset.pattern.permute.xlu0 0
        %3263 = vperm.xlu0 %3262, %v3121
        %v3264 = vpop.permute.xlu0 %3263
        %3267 = vset.pattern.permute.xlu0 0
        %3268 = vperm.xlu0 %3267, %v3122
        %v3269 = vpop.permute.xlu0 %3268
        %3272 = vset.pattern.permute.xlu0 0
        %3273 = vperm.xlu0 %3272, %v3123
        %v3274 = vpop.permute.xlu0 %3273
        %3277 = vset.pattern.permute.xlu0 0
        %3278 = vperm.xlu0 %3277, %v3124
        %v3279 = vpop.permute.xlu0 %3278
        %3282 = vset.pattern.permute.xlu0 0
        %3283 = vperm.xlu0 %3282, %v3125
        %v3284 = vpop.permute.xlu0 %3283
        %3287 = vset.pattern.permute.xlu0 0
        %3288 = vperm.xlu0 %3287, %v3126
        %v3289 = vpop.permute.xlu0 %3288
        %3292 = vset.pattern.permute.xlu0 0
        %3293 = vperm.xlu0 %3292, %v3127
        %v3294 = vpop.permute.xlu0 %3293
        %3297 = vset.pattern.permute.xlu0 0
        %3298 = vperm.xlu0 %3297, %v3128
        %v3299 = vpop.permute.xlu0 %3298
        %3302 = vset.pattern.permute.xlu0 0
        %3303 = vperm.xlu0 %3302, %v3129
        %v3304 = vpop.permute.xlu0 %3303
        %3307 = vset.pattern.permute.xlu0 0
        %3308 = vperm.xlu0 %3307, %v3130
        %v3309 = vpop.permute.xlu0 %3308
        %v3311 = vmul.f32 %v3023, %v3134
        %v3312 = vmul.f32 %v3024, %v3139
        %v3313 = vmul.f32 %v3025, %v3144
        %v3314 = vmul.f32 %v3026, %v3149
        %v3315 = vmul.f32 %v3027, %v3154
        %v3316 = vmul.f32 %v3028, %v3159
        %v3317 = vmul.f32 %v3029, %v3164
        %v3318 = vmul.f32 %v3030, %v3169
        %v3319 = vmul.f32 %v3031, %v3174
        %v3320 = vmul.f32 %v3032, %v3179
        %v3321 = vmul.f32 %v3033, %v3184
        %v3322 = vmul.f32 %v3034, %v3189
        %v3323 = vmul.f32 %v3035, %v3194
        %v3324 = vmul.f32 %v3036, %v3199
        %v3325 = vmul.f32 %v3037, %v3204
        %v3326 = vmul.f32 %v3038, %v3209
        %v3327 = vmul.f32 %v3039, %v3214
        %v3328 = vmul.f32 %v3040, %v3219
        %v3329 = vmul.f32 %v3041, %v3224
        %v3330 = vmul.f32 %v3042, %v3229
        %v3331 = vmul.f32 %v3043, %v3234
        %v3332 = vmul.f32 %v3044, %v3239
        %v3333 = vmul.f32 %v3045, %v3244
        %v3334 = vmul.f32 %v3046, %v3249
        %v3335 = vmul.f32 %v3047, %v3254
        %v3336 = vmul.f32 %v3048, %v3259
        %v3337 = vmul.f32 %v3049, %v3264
        %v3338 = vmul.f32 %v3050, %v3269
        %v3339 = vmul.f32 %v3051, %v3274
        %v3340 = vmul.f32 %v3052, %v3279
        %v3341 = vmul.f32 %v3053, %v3284
        %v3342 = vmul.f32 %v3054, %v3289
        %v3343 = vmul.f32 %v3055, %v3294
        %v3344 = vmul.f32 %v3056, %v3299
        %v3345 = vmul.f32 %v3057, %v3304
        %v3346 = vmul.f32 %v3058, %v3309
        %v3347 = vadd.f32 %v3311, %v3312
        %v3348 = vadd.f32 %v3347, %v3313
        %v3349 = vadd.f32 %v3348, %v3314
        %v3350 = vadd.f32 %v3349, %v3315
        %v3351 = vadd.f32 %v3350, %v3316
        %v3352 = vadd.f32 %v3351, %v3317
        %v3353 = vadd.f32 %v3352, %v3318
        %v3354 = vadd.f32 %v3353, %v3319
        %v3355 = vadd.f32 %v3354, %v3320
        %v3356 = vadd.f32 %v3355, %v3321
        %v3357 = vadd.f32 %v3356, %v3322
        %v3358 = vadd.f32 %v3357, %v3323
        %v3359 = vadd.f32 %v3358, %v3324
        %v3360 = vadd.f32 %v3359, %v3325
        %v3361 = vadd.f32 %v3360, %v3326
        %v3362 = vadd.f32 %v3361, %v3327
        %v3363 = vadd.f32 %v3362, %v3328
        %v3364 = vadd.f32 %v3363, %v3329
        %v3365 = vadd.f32 %v3364, %v3330
        %v3366 = vadd.f32 %v3365, %v3331
        %v3367 = vadd.f32 %v3366, %v3332
        %v3368 = vadd.f32 %v3367, %v3333
        %v3369 = vadd.f32 %v3368, %v3334
        %v3370 = vadd.f32 %v3369, %v3335
        %v3371 = vadd.f32 %v3370, %v3336
        %v3372 = vadd.f32 %v3371, %v3337
        %v3373 = vadd.f32 %v3372, %v3338
        %v3374 = vadd.f32 %v3373, %v3339
        %v3375 = vadd.f32 %v3374, %v3340
        %v3376 = vadd.f32 %v3375, %v3341
        %v3377 = vadd.f32 %v3376, %v3342
        %v3378 = vadd.f32 %v3377, %v3343
        %v3379 = vadd.f32 %v3378, %v3344
        %v3380 = vadd.f32 %v3379, %v3345
        %v3381 = vadd.f32 %v3380, %v3346
        %v3382 = vrot.slane %v3381, 4
        %v3383 = vadd.f32 %v3381, %v3382
        %v3384 = vrot.slane %v3383, 2
        %v3385 = vadd.f32 %v3383, %v3384
        %v3386 = vrot.slane %v3385, 1
        %v3387 = vadd.f32 %v3385, %v3386
        %3388 = vst [vmem:[%s254] sm:$0x1] %v3387
        %v3389 = vmul.f32 %v3311, %v3023
        %v3390 = vmul.f32 %v3312, %v3024
        %v3391 = vmul.f32 %v3313, %v3025
        %v3392 = vmul.f32 %v3314, %v3026
        %v3393 = vmul.f32 %v3315, %v3027
        %v3394 = vmul.f32 %v3316, %v3028
        %v3395 = vmul.f32 %v3317, %v3029
        %v3396 = vmul.f32 %v3318, %v3030
        %v3397 = vmul.f32 %v3319, %v3031
        %v3398 = vmul.f32 %v3320, %v3032
        %v3399 = vmul.f32 %v3321, %v3033
        %v3400 = vmul.f32 %v3322, %v3034
        %v3401 = vmul.f32 %v3323, %v3035
        %v3402 = vmul.f32 %v3324, %v3036
        %v3403 = vmul.f32 %v3325, %v3037
        %v3404 = vmul.f32 %v3326, %v3038
        %v3405 = vmul.f32 %v3327, %v3039
        %v3406 = vmul.f32 %v3328, %v3040
        %v3407 = vmul.f32 %v3329, %v3041
        %v3408 = vmul.f32 %v3330, %v3042
        %v3409 = vmul.f32 %v3331, %v3043
        %v3410 = vmul.f32 %v3332, %v3044
        %v3411 = vmul.f32 %v3333, %v3045
        %v3412 = vmul.f32 %v3334, %v3046
        %v3413 = vmul.f32 %v3335, %v3047
        %v3414 = vmul.f32 %v3336, %v3048
        %v3415 = vmul.f32 %v3337, %v3049
        %v3416 = vmul.f32 %v3338, %v3050
        %v3417 = vmul.f32 %v3339, %v3051
        %v3418 = vmul.f32 %v3340, %v3052
        %v3419 = vmul.f32 %v3341, %v3053
        %v3420 = vmul.f32 %v3342, %v3054
        %v3421 = vmul.f32 %v3343, %v3055
        %v3422 = vmul.f32 %v3344, %v3056
        %v3423 = vmul.f32 %v3345, %v3057
        %v3424 = vmul.f32 %v3346, %v3058
        %v3425 = vadd.f32 %v3389, %v3390
        %v3426 = vadd.f32 %v3425, %v3391
        %v3427 = vadd.f32 %v3426, %v3392
        %v3428 = vadd.f32 %v3427, %v3393
        %v3429 = vadd.f32 %v3428, %v3394
        %v3430 = vadd.f32 %v3429, %v3395
        %v3431 = vadd.f32 %v3430, %v3396
        %v3432 = vadd.f32 %v3431, %v3397
        %v3433 = vadd.f32 %v3432, %v3398
        %v3434 = vadd.f32 %v3433, %v3399
        %v3435 = vadd.f32 %v3434, %v3400
        %v3436 = vadd.f32 %v3435, %v3401
        %v3437 = vadd.f32 %v3436, %v3402
        %v3438 = vadd.f32 %v3437, %v3403
        %v3439 = vadd.f32 %v3438, %v3404
        %v3440 = vadd.f32 %v3439, %v3405
        %v3441 = vadd.f32 %v3440, %v3406
        %v3442 = vadd.f32 %v3441, %v3407
        %v3443 = vadd.f32 %v3442, %v3408
        %v3444 = vadd.f32 %v3443, %v3409
        %v3445 = vadd.f32 %v3444, %v3410
        %v3446 = vadd.f32 %v3445, %v3411
        %v3447 = vadd.f32 %v3446, %v3412
        %v3448 = vadd.f32 %v3447, %v3413
        %v3449 = vadd.f32 %v3448, %v3414
        %v3450 = vadd.f32 %v3449, %v3415
        %v3451 = vadd.f32 %v3450, %v3416
        %v3452 = vadd.f32 %v3451, %v3417
        %v3453 = vadd.f32 %v3452, %v3418
        %v3454 = vadd.f32 %v3453, %v3419
        %v3455 = vadd.f32 %v3454, %v3420
        %v3456 = vadd.f32 %v3455, %v3421
        %v3457 = vadd.f32 %v3456, %v3422
        %v3458 = vadd.f32 %v3457, %v3423
        %v3459 = vadd.f32 %v3458, %v3424
        %v3460 = vrot.slane %v3459, 4
        %v3461 = vadd.f32 %v3459, %v3460
        %v3462 = vrot.slane %v3461, 2
        %v3463 = vadd.f32 %v3461, %v3462
        %v3464 = vrot.slane %v3463, 1
        %v3465 = vadd.f32 %v3463, %v3464
        %3466 = vst [vmem:[%s260] sm:$0x1] %v3465
        %s3467 = sand.u32 %s121, 1
        %s3468 = scalar_lea.sflag [#allocation3], %s3467
        %s3469 = sand.u32 %s121, 1
        %s3470 = smul.addr %s3469, 288
        %s3471 = scalar_lea.vmem [#allocation2], %s3470
        %s3472 = sand.u32 %s24, 1
        %s3473 = scalar_lea.sflag [#allocation5], %s3472
        %s3474 = sand.u32 %s147, 1
        %s3475 = scalar_lea.vmem [#allocation4], %s3474
        %s3476 = sand.u32 %s24, 1
        %s3477 = scalar_lea.sflag [#allocation5], %s3476
        %s3478 = sand.u32 %s173, 1
        %s3479 = scalar_lea.vmem [#allocation6], %s3478
        // Predicated region
        $region37: #{tpu_custom_call.1} parent=35 // pred_check
          %p3480 = pneg %p131
        $region38: #{tpu_custom_call.1} parent=35 // pred_check_branch
          %3482 = sbr.rel (%p3480) target = $region40
        $region39: #{tpu_custom_call.1} parent=35 // pred_region
          %s3484 = ssub.s32 4608, 4608
          %3485 = vsyncadd %s3468, %s3484
          %s3486 = smul.addr %s24, 36
          %s3487 = smul.addr %s3486, 128
          %s3488 = scalar_lea.hbm %s4, %s3487
          %s3489 = sshll.u32 %s3471, 4
          %s3490 = int_to_ptr.vmem [resolvable:$true] %s3489
          %3495 = dma.vmem_to_hbm [thread:$0]  %s3490, 4608, %s3488, %s3468, 128, 128, 8
        $region40: #{tpu_custom_call.1} parent=35 // pred_fallthru
          _
        // Predicated region
        $region41: #{tpu_custom_call.1} parent=35 // pred_check
          %p3496 = pneg %p157
        $region42: #{tpu_custom_call.1} parent=35 // pred_check_branch
          %3498 = sbr.rel (%p3496) target = $region44
        $region43: #{tpu_custom_call.1} parent=35 // pred_region
          %s3500 = ssub.s32 16, 16
          %3501 = vsyncadd %s3473, %s3500
          %s3502 = smul.addr %s24, 16
          %s3503 = scalar_lea.hbm %s5, %s3502
          %s3505 = sshll.u32 %s3475, 4
          %s3506 = int_to_ptr.vmem [resolvable:$true] %s3505
          %3508 = dma.vmem_to_hbm [thread:$0]  %s3506, 16, %s3503, %s3473
        $region44: #{tpu_custom_call.1} parent=35 // pred_fallthru
          _
        // Predicated region
        $region45: #{tpu_custom_call.1} parent=35 // pred_check
          %p3509 = pneg %p183
        $region46: #{tpu_custom_call.1} parent=35 // pred_check_branch
          %3511 = sbr.rel (%p3509) target = $region48
        $region47: #{tpu_custom_call.1} parent=35 // pred_region
          %s3513 = ssub.s32 16, 16
          %3514 = vsyncadd %s3477, %s3513
          %s3515 = smul.addr %s24, 16
          %s3516 = scalar_lea.hbm %s6, %s3515
          %s3518 = sshll.u32 %s3479, 4
          %s3519 = int_to_ptr.vmem [resolvable:$true] %s3518
          %3521 = dma.vmem_to_hbm [thread:$0]  %s3519, 16, %s3516, %s3477
        $region48: #{tpu_custom_call.1} parent=35 // pred_fallthru
          _
      $region36: #{tpu_custom_call.1} parent=5 // pred_fallthru
        _
      %p3522 = scmp.le.s32.totalorder 2, %s19
      // Predicated region
      $region49: #{tpu_custom_call.1} parent=5 // pred_check
        %p3523 = pneg %p3522
      $region50: #{tpu_custom_call.1} parent=5 // pred_check_branch
        %3525 = sbr.rel (%p3523) target = $region52
      $region51: #{tpu_custom_call.1} parent=5 // pred_region
        %s3526 = ssub.s32 %s19, 2
        // Predicated region
        $region53: #{tpu_custom_call.1} parent=51 // pred_check
          %p3527 = pneg %p137
        $region54: #{tpu_custom_call.1} parent=51 // pred_check_branch
          %3529 = sbr.rel (%p3527) target = $region56
        $region55: #{tpu_custom_call.1} parent=51 // pred_region
          %s3530 = sand.u32 %s122, 1
          %s3531 = scalar_lea.sflag [#allocation3], %s3530
          %s3532 = sand.u32 %s122, 1
          %s3533 = smul.addr %s3532, 288
          %s3534 = scalar_lea.vmem [#allocation2], %s3533
          %3535 = dma.done %s3531, 4608
        $region56: #{tpu_custom_call.1} parent=51 // pred_fallthru
          _
        // Predicated region
        $region57: #{tpu_custom_call.1} parent=51 // pred_check
          %p3536 = pneg %p163
        $region58: #{tpu_custom_call.1} parent=51 // pred_check_branch
          %3538 = sbr.rel (%p3536) target = $region60
        $region59: #{tpu_custom_call.1} parent=51 // pred_region
          %s3539 = sand.u32 %s25, 1
          %s3540 = scalar_lea.sflag [#allocation5], %s3539
          %s3541 = sand.u32 %s148, 1
          %s3542 = scalar_lea.vmem [#allocation4], %s3541
          %3543 = dma.done %s3540, 16
        $region60: #{tpu_custom_call.1} parent=51 // pred_fallthru
          _
        // Predicated region
        $region61: #{tpu_custom_call.1} parent=51 // pred_check
          %p3544 = pneg %p189
        $region62: #{tpu_custom_call.1} parent=51 // pred_check_branch
          %3546 = sbr.rel (%p3544) target = $region64
        $region63: #{tpu_custom_call.1} parent=51 // pred_region
          %s3547 = sand.u32 %s25, 1
          %s3548 = scalar_lea.sflag [#allocation5], %s3547
          %s3549 = sand.u32 %s174, 1
          %s3550 = scalar_lea.vmem [#allocation6], %s3549
          %3551 = dma.done %s3548, 16
        $region64: #{tpu_custom_call.1} parent=51 // pred_fallthru
          _
      $region52: #{tpu_custom_call.1} parent=5 // pred_fallthru
        _
    $region6: #{tpu_custom_call.1} parent=1 // loop_footer
      %s23 = sadd.s32 1, %s19
    $region7: #{tpu_custom_call.1} parent=1 // loop_footer_branch
      %18 = sbr.rel target = $region3
    $region8: #{tpu_custom_call.1} parent=1 // loop_exit
      _
    %3552 = vsyncpa [#allocation3], 1
    %s3553 = scalar_lea.sflag [#allocation3], 1
    %3554 = vsyncpa %s3553, 1
    %3555 = vsyncpa [#allocation5], 1
    %s3556 = scalar_lea.sflag [#allocation5], 1
    %3557 = vsyncpa %s3556, 1

</llo_original>
